<compile_context>
chip_gen: v7x
topology: tpu7x:2x2x1
jax: 0.10.0
libtpu: 0.0.40
codegen_flags: <defaults>
</compile_context>

<pallas_src>
import jax
import jax.numpy as jnp
from jax import lax
from jax.experimental import pallas as pl
from jax.experimental.pallas import tpu as pltpu


def gru_kernel(x_ref, h0_ref,
               wih_r_ref, wih_z_ref, wih_n_ref,
               whh_r_ref, whh_z_ref, whh_n_ref,
               b_r_ref, b_z_ref, b_in_ref, b_hn_ref,
               out_ref, hT_ref,
               gi_r_scr, gi_z_scr, gi_n_scr):
    """Single-layer GRU forward (PyTorch gate order r, z, n).

    x_ref    : (T, B, F)   time-major input (B already sublane-padded)
    h0_ref   : (B, H)      initial hidden state
    wih_*_ref: (F, H)      per-gate input weights, transposed
    whh_*_ref: (H, H)      per-gate hidden weights, transposed
    b_r/b_z  : (1, H)      folded biases (b_ih + b_hh) for r / z gates
    b_in     : (1, H)      b_ih for n gate
    b_hn     : (1, H)      b_hh for n gate (stays inside the r * (...) term)
    out_ref  : (T, B, H)   per-step hidden states
    hT_ref   : (B, H)      final hidden state
    gi_*_scr : (T, B, H)   f32 VMEM scratch holding the hoisted input projection
    """
    T, B, F = x_ref.shape
    H = hT_ref.shape[-1]

    # ---- Hoisted input projection: one big MXU call per gate, done once. ----
    x2d = x_ref[...].reshape(T * B, F)
    gi_r_scr[...] = (jnp.dot(x2d, wih_r_ref[...], preferred_element_type=jnp.float32)
                     + b_r_ref[...].astype(jnp.float32)).reshape(T, B, H)
    gi_z_scr[...] = (jnp.dot(x2d, wih_z_ref[...], preferred_element_type=jnp.float32)
                     + b_z_ref[...].astype(jnp.float32)).reshape(T, B, H)
    gi_n_scr[...] = (jnp.dot(x2d, wih_n_ref[...], preferred_element_type=jnp.float32)
                     + b_in_ref[...].astype(jnp.float32)).reshape(T, B, H)

    whh_r = whh_r_ref[...]
    whh_z = whh_z_ref[...]
    whh_n = whh_n_ref[...]
    b_hn = b_hn_ref[...].astype(jnp.float32)
    w_dtype = whh_r.dtype

    # ---- Serial recurrence: only the (B,H)@(H,H) matmuls remain per step. ----
    def step(t, h_prev):
        hp = h_prev.astype(w_dtype)                    # keep MXU operands native
        gh_r = jnp.dot(hp, whh_r, preferred_element_type=jnp.float32)
        gh_z = jnp.dot(hp, whh_z, preferred_element_type=jnp.float32)
        gh_n = jnp.dot(hp, whh_n, preferred_element_type=jnp.float32) + b_hn

        r = jax.nn.sigmoid(gi_r_scr[t] + gh_r)
        z = jax.nn.sigmoid(gi_z_scr[t] + gh_z)
        n = jnp.tanh(gi_n_scr[t] + r * gh_n)
        h_new = (1.0 - z) * n + z * h_prev

        out_ref[t] = h_new.astype(out_ref.dtype)
        return h_new

    h_last = lax.fori_loop(0, T, step, h0_ref[...].astype(jnp.float32),
                           unroll=True)
    hT_ref[...] = h_last.astype(hT_ref.dtype)


def encoder_forward(x, hidden, w_ih, w_hh, b_ih, b_hh):
    """Mirrors Encoder.forward: returns (output, hidden.squeeze(0)).

    x      : (B, T, F)  batch_first input
    hidden : (1, B, H)  initial hidden state (num_layers=1)
    w_ih   : (3H, F), w_hh : (3H, H), b_ih/b_hh : (3H,)   -- PyTorch layout
    """
    B, T, F = x.shape
    H = w_hh.shape[1]
    B_pad = ((B + 7) // 8) * 8                 # fill the f32 sublane count

    x_tm = jnp.transpose(x, (1, 0, 2))         # (T, B, F)
    h0 = hidden[0]                             # (B, H)
    if B_pad != B:
        x_tm = jnp.pad(x_tm, ((0, 0), (0, B_pad - B), (0, 0)))
        h0 = jnp.pad(h0, ((0, B_pad - B), (0, 0)))

    # Per-gate weights (PyTorch order [r, z, n]), transposed for x @ W.T.
    wih_r, wih_z, wih_n = w_ih[:H].T, w_ih[H:2 * H].T, w_ih[2 * H:].T   # (F, H)
    whh_r, whh_z, whh_n = w_hh[:H].T, w_hh[H:2 * H].T, w_hh[2 * H:].T   # (H, H)

    # Fold biases: r/z sum both biases; n keeps b_hh_n separate (inside r*(...)).
    b_r = (b_ih[:H] + b_hh[:H]).reshape(1, H)
    b_z = (b_ih[H:2 * H] + b_hh[H:2 * H]).reshape(1, H)
    b_in = b_ih[2 * H:].reshape(1, H)
    b_hn = b_hh[2 * H:].reshape(1, H)

    vmem = pl.BlockSpec(memory_space=pltpu.MemorySpace.VMEM)

    itemsize = jnp.dtype(x.dtype).itemsize
    w_itemsize = jnp.dtype(w_ih.dtype).itemsize
    flops = (3 * 2 * T * B_pad * F * H          # hoisted input projection
             + T * 3 * 2 * B_pad * H * H        # recurrent matmuls
             + 10 * T * B_pad * H)              # gate elementwise
    transcendentals = 3 * T * B_pad * H
    bytes_accessed = ((T * B_pad * F + T * B_pad * H + 2 * B_pad * H) * itemsize
                      + (3 * (F + H) * H + 4 * H) * w_itemsize)
    cost = pl.CostEstimate(flops=int(flops),
                           transcendentals=int(transcendentals),
                           bytes_accessed=int(bytes_accessed))

    out_tm, hT = pl.pallas_call(
        gru_kernel,
        out_shape=(jax.ShapeDtypeStruct((T, B_pad, H), x.dtype),
                   jax.ShapeDtypeStruct((B_pad, H), x.dtype)),
        in_specs=[vmem] * 12,
        out_specs=(vmem, vmem),
        scratch_shapes=[pltpu.VMEM((T, B_pad, H), jnp.float32)] * 3,
        cost_estimate=cost,
    )(x_tm, h0, wih_r, wih_z, wih_n, whh_r, whh_z, whh_n, b_r, b_z, b_in, b_hn)

    output = jnp.transpose(out_tm[:, :B, :], (1, 0, 2))     # (B, T, H)
    return output, hT[:B, :]                                 # hidden.squeeze(0)


def gru_reference(x, hidden, w_ih, w_hh, b_ih, b_hh):
    """Pure-JAX reference matching torch.nn.GRU (batch_first, 1 layer)."""
    B, T, F = x.shape
    H = w_hh.shape[1]
    h = hidden[0]
    outs = []
    for t in range(T):
        x_t = x[:, t, :]
        gi = x_t @ w_ih.T + b_ih
        gh = h @ w_hh.T + b_hh
        i_r, i_z, i_n = gi[:, :H], gi[:, H:2 * H], gi[:, 2 * H:]
        h_r, h_z, h_n = gh[:, :H], gh[:, H:2 * H], gh[:, 2 * H:]
        r = jax.nn.sigmoid(i_r + h_r)
        z = jax.nn.sigmoid(i_z + h_z)
        n = jnp.tanh(i_n + r * h_n)
        h = (1.0 - z) * n + z * h
        outs.append(h)
    return jnp.stack(outs, axis=1), h


if __name__ == "__main__":
    # Small shapes consistent with the module: batch=2, seq=8, features=4, hidden=32.
    B, T, F, H = 2, 8, 4, 32

    key = jax.random.PRNGKey(0)
    kx, kwih, kwhh, kbih, kbhh = jax.random.split(key, 5)

    # Deterministic init, PyTorch-style uniform(-1/sqrt(H), 1/sqrt(H)).
    bound = 1.0 / jnp.sqrt(jnp.float32(H))
    x = jax.random.normal(kx, (B, T, F), dtype=jnp.float32)
    hidden = jnp.zeros((1, B, H), dtype=jnp.float32)          # Encoder.init_hidden
    w_ih = jax.random.uniform(kwih, (3 * H, F), jnp.float32, -bound, bound)
    w_hh = jax.random.uniform(kwhh, (3 * H, H), jnp.float32, -bound, bound)
    b_ih = jax.random.uniform(kbih, (3 * H,), jnp.float32, -bound, bound)
    b_hh = jax.random.uniform(kbhh, (3 * H,), jnp.float32, -bound, bound)

    output, h_last = encoder_forward(x, hidden, w_ih, w_hh, b_ih, b_hh)
    jax.block_until_ready((output, h_last))

    ref_out, ref_h = gru_reference(x, hidden, w_ih, w_hh, b_ih, b_hh)
    assert output.shape == (B, T, H)
    assert h_last.shape == (B, H)
    assert jnp.allclose(output, ref_out, atol=1e-5, rtol=1e-5)
    assert jnp.allclose(h_last, ref_h, atol=1e-5, rtol=1e-5)

    print("KERNEL_OK")
</pallas_src>

<mosaic_0001>
module attributes {stable_mosaic.version = 11 : i64} {
  func.func @gru_kernel(%arg0: memref<8x8x4xf32, #tpu.memory_space<vmem>>, %arg1: memref<8x32xf32, #tpu.memory_space<vmem>>, %arg2: memref<4x32xf32, #tpu.memory_space<vmem>>, %arg3: memref<4x32xf32, #tpu.memory_space<vmem>>, %arg4: memref<4x32xf32, #tpu.memory_space<vmem>>, %arg5: memref<32x32xf32, #tpu.memory_space<vmem>>, %arg6: memref<32x32xf32, #tpu.memory_space<vmem>>, %arg7: memref<32x32xf32, #tpu.memory_space<vmem>>, %arg8: memref<1x32xf32, #tpu.memory_space<vmem>>, %arg9: memref<1x32xf32, #tpu.memory_space<vmem>>, %arg10: memref<1x32xf32, #tpu.memory_space<vmem>>, %arg11: memref<1x32xf32, #tpu.memory_space<vmem>>, %arg12: memref<8x8x32xf32, #tpu.memory_space<vmem>>, %arg13: memref<8x32xf32, #tpu.memory_space<vmem>>, %arg14: memref<8x8x32xf32, #tpu.memory_space<vmem>>, %arg15: memref<8x8x32xf32, #tpu.memory_space<vmem>>, %arg16: memref<8x8x32xf32, #tpu.memory_space<vmem>>) attributes {dimension_semantics = [], scalar_prefetch = 0 : i64, scratch_operands = 3 : i64, tpu.core_type = #tpu.core_type<tc>} {
    %c0 = arith.constant 0 : index
    %c0_0 = arith.constant 0 : index
    %c0_1 = arith.constant 0 : index
    %0 = vector.load %arg0[%c0, %c0_0, %c0_1] : memref<8x8x4xf32, #tpu.memory_space<vmem>>, vector<8x8x4xf32>
    %1 = vector.shape_cast %0 : vector<8x8x4xf32> to vector<64x4xf32>
    %c0_2 = arith.constant 0 : index
    %c0_3 = arith.constant 0 : index
    %2 = vector.load %arg2[%c0_2, %c0_3] : memref<4x32xf32, #tpu.memory_space<vmem>>, vector<4x32xf32>
    %cst = arith.constant dense<0.000000e+00> : vector<64x32xf32>
    %3 = tpu.matmul %1, %2, %cst {dimension_numbers = #tpu.dot_dimension_numbers<[1], [0], [0], [1], [0, 0, 1, 1], [], []>} : vector<64x4xf32>, vector<4x32xf32>, vector<64x32xf32> -> vector<64x32xf32>
    %c0_4 = arith.constant 0 : index
    %c0_5 = arith.constant 0 : index
    %4 = vector.load %arg8[%c0_4, %c0_5] : memref<1x32xf32, #tpu.memory_space<vmem>>, vector<1x32xf32>
    %5 = vector.broadcast %4 : vector<1x32xf32> to vector<64x32xf32>
    %6 = arith.addf %3, %5 : vector<64x32xf32>
    %7 = vector.shape_cast %6 : vector<64x32xf32> to vector<8x8x32xf32>
    %c0_6 = arith.constant 0 : index
    %c0_7 = arith.constant 0 : index
    %c0_8 = arith.constant 0 : index
    %8 = vector.load %arg14[%c0_6, %c0_7, %c0_8] : memref<8x8x32xf32, #tpu.memory_space<vmem>>, vector<8x8x32xf32>
    tpu.vector_store %arg14[%c0_6, %c0_7, %c0_8], %7 {strides = array<i32>} : memref<8x8x32xf32, #tpu.memory_space<vmem>>, vector<8x8x32xf32>,
    %c0_9 = arith.constant 0 : index
    %c0_10 = arith.constant 0 : index
    %9 = vector.load %arg3[%c0_9, %c0_10] : memref<4x32xf32, #tpu.memory_space<vmem>>, vector<4x32xf32>
    %cst_11 = arith.constant dense<0.000000e+00> : vector<64x32xf32>
    %10 = tpu.matmul %1, %9, %cst_11 {dimension_numbers = #tpu.dot_dimension_numbers<[1], [0], [0], [1], [0, 0, 1, 1], [], []>} : vector<64x4xf32>, vector<4x32xf32>, vector<64x32xf32> -> vector<64x32xf32>
    %c0_12 = arith.constant 0 : index
    %c0_13 = arith.constant 0 : index
    %11 = vector.load %arg9[%c0_12, %c0_13] : memref<1x32xf32, #tpu.memory_space<vmem>>, vector<1x32xf32>
    %12 = vector.broadcast %11 : vector<1x32xf32> to vector<64x32xf32>
    %13 = arith.addf %10, %12 : vector<64x32xf32>
    %14 = vector.shape_cast %13 : vector<64x32xf32> to vector<8x8x32xf32>
    %c0_14 = arith.constant 0 : index
    %c0_15 = arith.constant 0 : index
    %c0_16 = arith.constant 0 : index
    %15 = vector.load %arg15[%c0_14, %c0_15, %c0_16] : memref<8x8x32xf32, #tpu.memory_space<vmem>>, vector<8x8x32xf32>
    tpu.vector_store %arg15[%c0_14, %c0_15, %c0_16], %14 {strides = array<i32>} : memref<8x8x32xf32, #tpu.memory_space<vmem>>, vector<8x8x32xf32>,
    %c0_17 = arith.constant 0 : index
    %c0_18 = arith.constant 0 : index
    %16 = vector.load %arg4[%c0_17, %c0_18] : memref<4x32xf32, #tpu.memory_space<vmem>>, vector<4x32xf32>
    %cst_19 = arith.constant dense<0.000000e+00> : vector<64x32xf32>
    %17 = tpu.matmul %1, %16, %cst_19 {dimension_numbers = #tpu.dot_dimension_numbers<[1], [0], [0], [1], [0, 0, 1, 1], [], []>} : vector<64x4xf32>, vector<4x32xf32>, vector<64x32xf32> -> vector<64x32xf32>
    %c0_20 = arith.constant 0 : index
    %c0_21 = arith.constant 0 : index
    %18 = vector.load %arg10[%c0_20, %c0_21] : memref<1x32xf32, #tpu.memory_space<vmem>>, vector<1x32xf32>
    %19 = vector.broadcast %18 : vector<1x32xf32> to vector<64x32xf32>
    %20 = arith.addf %17, %19 : vector<64x32xf32>
    %21 = vector.shape_cast %20 : vector<64x32xf32> to vector<8x8x32xf32>
    %c0_22 = arith.constant 0 : index
    %c0_23 = arith.constant 0 : index
    %c0_24 = arith.constant 0 : index
    %22 = vector.load %arg16[%c0_22, %c0_23, %c0_24] : memref<8x8x32xf32, #tpu.memory_space<vmem>>, vector<8x8x32xf32>
    tpu.vector_store %arg16[%c0_22, %c0_23, %c0_24], %21 {strides = array<i32>} : memref<8x8x32xf32, #tpu.memory_space<vmem>>, vector<8x8x32xf32>,
    %c0_25 = arith.constant 0 : index
    %c0_26 = arith.constant 0 : index
    %23 = vector.load %arg5[%c0_25, %c0_26] : memref<32x32xf32, #tpu.memory_space<vmem>>, vector<32x32xf32>
    %c0_27 = arith.constant 0 : index
    %c0_28 = arith.constant 0 : index
    %24 = vector.load %arg6[%c0_27, %c0_28] : memref<32x32xf32, #tpu.memory_space<vmem>>, vector<32x32xf32>
    %c0_29 = arith.constant 0 : index
    %c0_30 = arith.constant 0 : index
    %25 = vector.load %arg7[%c0_29, %c0_30] : memref<32x32xf32, #tpu.memory_space<vmem>>, vector<32x32xf32>
    %c0_31 = arith.constant 0 : index
    %c0_32 = arith.constant 0 : index
    %26 = vector.load %arg11[%c0_31, %c0_32] : memref<1x32xf32, #tpu.memory_space<vmem>>, vector<1x32xf32>
    %c0_33 = arith.constant 0 : index
    %c0_34 = arith.constant 0 : index
    %27 = vector.load %arg1[%c0_33, %c0_34] : memref<8x32xf32, #tpu.memory_space<vmem>>, vector<8x32xf32>
    %c0_i32 = arith.constant 0 : i32
    %cst_35 = arith.constant dense<0.000000e+00> : vector<8x32xf32>
    %28 = tpu.matmul %27, %23, %cst_35 {dimension_numbers = #tpu.dot_dimension_numbers<[1], [0], [0], [1], [0, 0, 1, 1], [], []>} : vector<8x32xf32>, vector<32x32xf32>, vector<8x32xf32> -> vector<8x32xf32>
    %cst_36 = arith.constant dense<0.000000e+00> : vector<8x32xf32>
    %29 = tpu.matmul %27, %24, %cst_36 {dimension_numbers = #tpu.dot_dimension_numbers<[1], [0], [0], [1], [0, 0, 1, 1], [], []>} : vector<8x32xf32>, vector<32x32xf32>, vector<8x32xf32> -> vector<8x32xf32>
    %cst_37 = arith.constant dense<0.000000e+00> : vector<8x32xf32>
    %30 = tpu.matmul %27, %25, %cst_37 {dimension_numbers = #tpu.dot_dimension_numbers<[1], [0], [0], [1], [0, 0, 1, 1], [], []>} : vector<8x32xf32>, vector<32x32xf32>, vector<8x32xf32> -> vector<8x32xf32>
    %31 = vector.broadcast %26 : vector<1x32xf32> to vector<8x32xf32>
    %32 = arith.addf %30, %31 : vector<8x32xf32>
    %33 = arith.index_cast %c0_i32 : i32 to index
    %c0_38 = arith.constant 0 : index
    %c0_39 = arith.constant 0 : index
    %34 = vector.load %arg14[%33, %c0_38, %c0_39] : memref<8x8x32xf32, #tpu.memory_space<vmem>>, vector<1x8x32xf32>
    %35 = vector.shape_cast %34 : vector<1x8x32xf32> to vector<8x32xf32>
    %36 = arith.addf %35, %28 : vector<8x32xf32>
    %37 = arith.negf %36 : vector<8x32xf32>
    %38 = math.exp %37 : vector<8x32xf32>
    %cst_40 = arith.constant 1.000000e+00 : f32
    %39 = vector.broadcast %cst_40 : f32 to vector<8x32xf32>
    %40 = arith.addf %39, %38 : vector<8x32xf32>
    %41 = arith.divf %39, %40 : vector<8x32xf32>
    %42 = arith.index_cast %c0_i32 : i32 to index
    %c0_41 = arith.constant 0 : index
    %c0_42 = arith.constant 0 : index
    %43 = vector.load %arg15[%42, %c0_41, %c0_42] : memref<8x8x32xf32, #tpu.memory_space<vmem>>, vector<1x8x32xf32>
    %44 = vector.shape_cast %43 : vector<1x8x32xf32> to vector<8x32xf32>
    %45 = arith.addf %44, %29 : vector<8x32xf32>
    %46 = arith.negf %45 : vector<8x32xf32>
    %47 = math.exp %46 : vector<8x32xf32>
    %cst_43 = arith.constant 1.000000e+00 : f32
    %48 = vector.broadcast %cst_43 : f32 to vector<8x32xf32>
    %49 = arith.addf %48, %47 : vector<8x32xf32>
    %50 = arith.divf %48, %49 : vector<8x32xf32>
    %51 = arith.index_cast %c0_i32 : i32 to index
    %c0_44 = arith.constant 0 : index
    %c0_45 = arith.constant 0 : index
    %52 = vector.load %arg16[%51, %c0_44, %c0_45] : memref<8x8x32xf32, #tpu.memory_space<vmem>>, vector<1x8x32xf32>
    %53 = vector.shape_cast %52 : vector<1x8x32xf32> to vector<8x32xf32>
    %54 = arith.mulf %41, %32 : vector<8x32xf32>
    %55 = arith.addf %53, %54 : vector<8x32xf32>
    %56 = math.tanh %55 : vector<8x32xf32>
    %cst_46 = arith.constant 1.000000e+00 : f32
    %57 = vector.broadcast %cst_46 : f32 to vector<8x32xf32>
    %58 = arith.subf %57, %50 : vector<8x32xf32>
    %59 = arith.mulf %58, %56 : vector<8x32xf32>
    %60 = arith.mulf %50, %27 : vector<8x32xf32>
    %61 = arith.addf %59, %60 : vector<8x32xf32>
    %62 = arith.index_cast %c0_i32 : i32 to index
    %c0_47 = arith.constant 0 : index
    %c0_48 = arith.constant 0 : index
    %63 = vector.load %arg12[%62, %c0_47, %c0_48] : memref<8x8x32xf32, #tpu.memory_space<vmem>>, vector<1x8x32xf32>
    %64 = vector.shape_cast %63 : vector<1x8x32xf32> to vector<8x32xf32>
    %65 = vector.shape_cast %61 : vector<8x32xf32> to vector<1x8x32xf32>
    tpu.vector_store %arg12[%62, %c0_47, %c0_48], %65 {strides = array<i32>} : memref<8x8x32xf32, #tpu.memory_space<vmem>>, vector<1x8x32xf32>,
    %c1_i32 = arith.constant 1 : i32
    %cst_49 = arith.constant dense<0.000000e+00> : vector<8x32xf32>
    %66 = tpu.matmul %61, %23, %cst_49 {dimension_numbers = #tpu.dot_dimension_numbers<[1], [0], [0], [1], [0, 0, 1, 1], [], []>} : vector<8x32xf32>, vector<32x32xf32>, vector<8x32xf32> -> vector<8x32xf32>
    %cst_50 = arith.constant dense<0.000000e+00> : vector<8x32xf32>
    %67 = tpu.matmul %61, %24, %cst_50 {dimension_numbers = #tpu.dot_dimension_numbers<[1], [0], [0], [1], [0, 0, 1, 1], [], []>} : vector<8x32xf32>, vector<32x32xf32>, vector<8x32xf32> -> vector<8x32xf32>
    %cst_51 = arith.constant dense<0.000000e+00> : vector<8x32xf32>
    %68 = tpu.matmul %61, %25, %cst_51 {dimension_numbers = #tpu.dot_dimension_numbers<[1], [0], [0], [1], [0, 0, 1, 1], [], []>} : vector<8x32xf32>, vector<32x32xf32>, vector<8x32xf32> -> vector<8x32xf32>
    %69 = vector.broadcast %26 : vector<1x32xf32> to vector<8x32xf32>
    %70 = arith.addf %68, %69 : vector<8x32xf32>
    %71 = arith.index_cast %c1_i32 : i32 to index
    %c0_52 = arith.constant 0 : index
    %c0_53 = arith.constant 0 : index
    %72 = vector.load %arg14[%71, %c0_52, %c0_53] : memref<8x8x32xf32, #tpu.memory_space<vmem>>, vector<1x8x32xf32>
    %73 = vector.shape_cast %72 : vector<1x8x32xf32> to vector<8x32xf32>
    %74 = arith.addf %73, %66 : vector<8x32xf32>
    %75 = arith.negf %74 : vector<8x32xf32>
    %76 = math.exp %75 : vector<8x32xf32>
    %cst_54 = arith.constant 1.000000e+00 : f32
    %77 = vector.broadcast %cst_54 : f32 to vector<8x32xf32>
    %78 = arith.addf %77, %76 : vector<8x32xf32>
    %79 = arith.divf %77, %78 : vector<8x32xf32>
    %80 = arith.index_cast %c1_i32 : i32 to index
    %c0_55 = arith.constant 0 : index
    %c0_56 = arith.constant 0 : index
    %81 = vector.load %arg15[%80, %c0_55, %c0_56] : memref<8x8x32xf32, #tpu.memory_space<vmem>>, vector<1x8x32xf32>
    %82 = vector.shape_cast %81 : vector<1x8x32xf32> to vector<8x32xf32>
    %83 = arith.addf %82, %67 : vector<8x32xf32>
    %84 = arith.negf %83 : vector<8x32xf32>
    %85 = math.exp %84 : vector<8x32xf32>
    %cst_57 = arith.constant 1.000000e+00 : f32
    %86 = vector.broadcast %cst_57 : f32 to vector<8x32xf32>
    %87 = arith.addf %86, %85 : vector<8x32xf32>
    %88 = arith.divf %86, %87 : vector<8x32xf32>
    %89 = arith.index_cast %c1_i32 : i32 to index
    %c0_58 = arith.constant 0 : index
    %c0_59 = arith.constant 0 : index
    %90 = vector.load %arg16[%89, %c0_58, %c0_59] : memref<8x8x32xf32, #tpu.memory_space<vmem>>, vector<1x8x32xf32>
    %91 = vector.shape_cast %90 : vector<1x8x32xf32> to vector<8x32xf32>
    %92 = arith.mulf %79, %70 : vector<8x32xf32>
    %93 = arith.addf %91, %92 : vector<8x32xf32>
    %94 = math.tanh %93 : vector<8x32xf32>
    %cst_60 = arith.constant 1.000000e+00 : f32
    %95 = vector.broadcast %cst_60 : f32 to vector<8x32xf32>
    %96 = arith.subf %95, %88 : vector<8x32xf32>
    %97 = arith.mulf %96, %94 : vector<8x32xf32>
    %98 = arith.mulf %88, %61 : vector<8x32xf32>
    %99 = arith.addf %97, %98 : vector<8x32xf32>
    %100 = arith.index_cast %c1_i32 : i32 to index
    %c0_61 = arith.constant 0 : index
    %c0_62 = arith.constant 0 : index
    %101 = vector.load %arg12[%100, %c0_61, %c0_62] : memref<8x8x32xf32, #tpu.memory_space<vmem>>, vector<1x8x32xf32>
    %102 = vector.shape_cast %101 : vector<1x8x32xf32> to vector<8x32xf32>
    %103 = vector.shape_cast %99 : vector<8x32xf32> to vector<1x8x32xf32>
    tpu.vector_store %arg12[%100, %c0_61, %c0_62], %103 {strides = array<i32>} : memref<8x8x32xf32, #tpu.memory_space<vmem>>, vector<1x8x32xf32>,
    %c2_i32 = arith.constant 2 : i32
    %cst_63 = arith.constant dense<0.000000e+00> : vector<8x32xf32>
    %104 = tpu.matmul %99, %23, %cst_63 {dimension_numbers = #tpu.dot_dimension_numbers<[1], [0], [0], [1], [0, 0, 1, 1], [], []>} : vector<8x32xf32>, vector<32x32xf32>, vector<8x32xf32> -> vector<8x32xf32>
    %cst_64 = arith.constant dense<0.000000e+00> : vector<8x32xf32>
    %105 = tpu.matmul %99, %24, %cst_64 {dimension_numbers = #tpu.dot_dimension_numbers<[1], [0], [0], [1], [0, 0, 1, 1], [], []>} : vector<8x32xf32>, vector<32x32xf32>, vector<8x32xf32> -> vector<8x32xf32>
    %cst_65 = arith.constant dense<0.000000e+00> : vector<8x32xf32>
    %106 = tpu.matmul %99, %25, %cst_65 {dimension_numbers = #tpu.dot_dimension_numbers<[1], [0], [0], [1], [0, 0, 1, 1], [], []>} : vector<8x32xf32>, vector<32x32xf32>, vector<8x32xf32> -> vector<8x32xf32>
    %107 = vector.broadcast %26 : vector<1x32xf32> to vector<8x32xf32>
    %108 = arith.addf %106, %107 : vector<8x32xf32>
    %109 = arith.index_cast %c2_i32 : i32 to index
    %c0_66 = arith.constant 0 : index
    %c0_67 = arith.constant 0 : index
    %110 = vector.load %arg14[%109, %c0_66, %c0_67] : memref<8x8x32xf32, #tpu.memory_space<vmem>>, vector<1x8x32xf32>
    %111 = vector.shape_cast %110 : vector<1x8x32xf32> to vector<8x32xf32>
    %112 = arith.addf %111, %104 : vector<8x32xf32>
    %113 = arith.negf %112 : vector<8x32xf32>
    %114 = math.exp %113 : vector<8x32xf32>
    %cst_68 = arith.constant 1.000000e+00 : f32
    %115 = vector.broadcast %cst_68 : f32 to vector<8x32xf32>
    %116 = arith.addf %115, %114 : vector<8x32xf32>
    %117 = arith.divf %115, %116 : vector<8x32xf32>
    %118 = arith.index_cast %c2_i32 : i32 to index
    %c0_69 = arith.constant 0 : index
    %c0_70 = arith.constant 0 : index
    %119 = vector.load %arg15[%118, %c0_69, %c0_70] : memref<8x8x32xf32, #tpu.memory_space<vmem>>, vector<1x8x32xf32>
    %120 = vector.shape_cast %119 : vector<1x8x32xf32> to vector<8x32xf32>
    %121 = arith.addf %120, %105 : vector<8x32xf32>
    %122 = arith.negf %121 : vector<8x32xf32>
    %123 = math.exp %122 : vector<8x32xf32>
    %cst_71 = arith.constant 1.000000e+00 : f32
    %124 = vector.broadcast %cst_71 : f32 to vector<8x32xf32>
    %125 = arith.addf %124, %123 : vector<8x32xf32>
    %126 = arith.divf %124, %125 : vector<8x32xf32>
    %127 = arith.index_cast %c2_i32 : i32 to index
    %c0_72 = arith.constant 0 : index
    %c0_73 = arith.constant 0 : index
    %128 = vector.load %arg16[%127, %c0_72, %c0_73] : memref<8x8x32xf32, #tpu.memory_space<vmem>>, vector<1x8x32xf32>
    %129 = vector.shape_cast %128 : vector<1x8x32xf32> to vector<8x32xf32>
    %130 = arith.mulf %117, %108 : vector<8x32xf32>
    %131 = arith.addf %129, %130 : vector<8x32xf32>
    %132 = math.tanh %131 : vector<8x32xf32>
    %cst_74 = arith.constant 1.000000e+00 : f32
    %133 = vector.broadcast %cst_74 : f32 to vector<8x32xf32>
    %134 = arith.subf %133, %126 : vector<8x32xf32>
    %135 = arith.mulf %134, %132 : vector<8x32xf32>
    %136 = arith.mulf %126, %99 : vector<8x32xf32>
    %137 = arith.addf %135, %136 : vector<8x32xf32>
    %138 = arith.index_cast %c2_i32 : i32 to index
    %c0_75 = arith.constant 0 : index
    %c0_76 = arith.constant 0 : index
    %139 = vector.load %arg12[%138, %c0_75, %c0_76] : memref<8x8x32xf32, #tpu.memory_space<vmem>>, vector<1x8x32xf32>
    %140 = vector.shape_cast %139 : vector<1x8x32xf32> to vector<8x32xf32>
    %141 = vector.shape_cast %137 : vector<8x32xf32> to vector<1x8x32xf32>
    tpu.vector_store %arg12[%138, %c0_75, %c0_76], %141 {strides = array<i32>} : memref<8x8x32xf32, #tpu.memory_space<vmem>>, vector<1x8x32xf32>,
    %c3_i32 = arith.constant 3 : i32
    %cst_77 = arith.constant dense<0.000000e+00> : vector<8x32xf32>
    %142 = tpu.matmul %137, %23, %cst_77 {dimension_numbers = #tpu.dot_dimension_numbers<[1], [0], [0], [1], [0, 0, 1, 1], [], []>} : vector<8x32xf32>, vector<32x32xf32>, vector<8x32xf32> -> vector<8x32xf32>
    %cst_78 = arith.constant dense<0.000000e+00> : vector<8x32xf32>
    %143 = tpu.matmul %137, %24, %cst_78 {dimension_numbers = #tpu.dot_dimension_numbers<[1], [0], [0], [1], [0, 0, 1, 1], [], []>} : vector<8x32xf32>, vector<32x32xf32>, vector<8x32xf32> -> vector<8x32xf32>
    %cst_79 = arith.constant dense<0.000000e+00> : vector<8x32xf32>
    %144 = tpu.matmul %137, %25, %cst_79 {dimension_numbers = #tpu.dot_dimension_numbers<[1], [0], [0], [1], [0, 0, 1, 1], [], []>} : vector<8x32xf32>, vector<32x32xf32>, vector<8x32xf32> -> vector<8x32xf32>
    %145 = vector.broadcast %26 : vector<1x32xf32> to vector<8x32xf32>
    %146 = arith.addf %144, %145 : vector<8x32xf32>
    %147 = arith.index_cast %c3_i32 : i32 to index
    %c0_80 = arith.constant 0 : index
    %c0_81 = arith.constant 0 : index
    %148 = vector.load %arg14[%147, %c0_80, %c0_81] : memref<8x8x32xf32, #tpu.memory_space<vmem>>, vector<1x8x32xf32>
    %149 = vector.shape_cast %148 : vector<1x8x32xf32> to vector<8x32xf32>
    %150 = arith.addf %149, %142 : vector<8x32xf32>
    %151 = arith.negf %150 : vector<8x32xf32>
    %152 = math.exp %151 : vector<8x32xf32>
    %cst_82 = arith.constant 1.000000e+00 : f32
    %153 = vector.broadcast %cst_82 : f32 to vector<8x32xf32>
    %154 = arith.addf %153, %152 : vector<8x32xf32>
    %155 = arith.divf %153, %154 : vector<8x32xf32>
    %156 = arith.index_cast %c3_i32 : i32 to index
    %c0_83 = arith.constant 0 : index
    %c0_84 = arith.constant 0 : index
    %157 = vector.load %arg15[%156, %c0_83, %c0_84] : memref<8x8x32xf32, #tpu.memory_space<vmem>>, vector<1x8x32xf32>
    %158 = vector.shape_cast %157 : vector<1x8x32xf32> to vector<8x32xf32>
    %159 = arith.addf %158, %143 : vector<8x32xf32>
    %160 = arith.negf %159 : vector<8x32xf32>
    %161 = math.exp %160 : vector<8x32xf32>
    %cst_85 = arith.constant 1.000000e+00 : f32
    %162 = vector.broadcast %cst_85 : f32 to vector<8x32xf32>
    %163 = arith.addf %162, %161 : vector<8x32xf32>
    %164 = arith.divf %162, %163 : vector<8x32xf32>
    %165 = arith.index_cast %c3_i32 : i32 to index
    %c0_86 = arith.constant 0 : index
    %c0_87 = arith.constant 0 : index
    %166 = vector.load %arg16[%165, %c0_86, %c0_87] : memref<8x8x32xf32, #tpu.memory_space<vmem>>, vector<1x8x32xf32>
    %167 = vector.shape_cast %166 : vector<1x8x32xf32> to vector<8x32xf32>
    %168 = arith.mulf %155, %146 : vector<8x32xf32>
    %169 = arith.addf %167, %168 : vector<8x32xf32>
    %170 = math.tanh %169 : vector<8x32xf32>
    %cst_88 = arith.constant 1.000000e+00 : f32
    %171 = vector.broadcast %cst_88 : f32 to vector<8x32xf32>
    %172 = arith.subf %171, %164 : vector<8x32xf32>
    %173 = arith.mulf %172, %170 : vector<8x32xf32>
    %174 = arith.mulf %164, %137 : vector<8x32xf32>
    %175 = arith.addf %173, %174 : vector<8x32xf32>
    %176 = arith.index_cast %c3_i32 : i32 to index
    %c0_89 = arith.constant 0 : index
    %c0_90 = arith.constant 0 : index
    %177 = vector.load %arg12[%176, %c0_89, %c0_90] : memref<8x8x32xf32, #tpu.memory_space<vmem>>, vector<1x8x32xf32>
    %178 = vector.shape_cast %177 : vector<1x8x32xf32> to vector<8x32xf32>
    %179 = vector.shape_cast %175 : vector<8x32xf32> to vector<1x8x32xf32>
    tpu.vector_store %arg12[%176, %c0_89, %c0_90], %179 {strides = array<i32>} : memref<8x8x32xf32, #tpu.memory_space<vmem>>, vector<1x8x32xf32>,
    %c4_i32 = arith.constant 4 : i32
    %cst_91 = arith.constant dense<0.000000e+00> : vector<8x32xf32>
    %180 = tpu.matmul %175, %23, %cst_91 {dimension_numbers = #tpu.dot_dimension_numbers<[1], [0], [0], [1], [0, 0, 1, 1], [], []>} : vector<8x32xf32>, vector<32x32xf32>, vector<8x32xf32> -> vector<8x32xf32>
    %cst_92 = arith.constant dense<0.000000e+00> : vector<8x32xf32>
    %181 = tpu.matmul %175, %24, %cst_92 {dimension_numbers = #tpu.dot_dimension_numbers<[1], [0], [0], [1], [0, 0, 1, 1], [], []>} : vector<8x32xf32>, vector<32x32xf32>, vector<8x32xf32> -> vector<8x32xf32>
    %cst_93 = arith.constant dense<0.000000e+00> : vector<8x32xf32>
    %182 = tpu.matmul %175, %25, %cst_93 {dimension_numbers = #tpu.dot_dimension_numbers<[1], [0], [0], [1], [0, 0, 1, 1], [], []>} : vector<8x32xf32>, vector<32x32xf32>, vector<8x32xf32> -> vector<8x32xf32>
    %183 = vector.broadcast %26 : vector<1x32xf32> to vector<8x32xf32>
    %184 = arith.addf %182, %183 : vector<8x32xf32>
    %185 = arith.index_cast %c4_i32 : i32 to index
    %c0_94 = arith.constant 0 : index
    %c0_95 = arith.constant 0 : index
    %186 = vector.load %arg14[%185, %c0_94, %c0_95] : memref<8x8x32xf32, #tpu.memory_space<vmem>>, vector<1x8x32xf32>
    %187 = vector.shape_cast %186 : vector<1x8x32xf32> to vector<8x32xf32>
    %188 = arith.addf %187, %180 : vector<8x32xf32>
    %189 = arith.negf %188 : vector<8x32xf32>
    %190 = math.exp %189 : vector<8x32xf32>
    %cst_96 = arith.constant 1.000000e+00 : f32
    %191 = vector.broadcast %cst_96 : f32 to vector<8x32xf32>
    %192 = arith.addf %191, %190 : vector<8x32xf32>
    %193 = arith.divf %191, %192 : vector<8x32xf32>
    %194 = arith.index_cast %c4_i32 : i32 to index
    %c0_97 = arith.constant 0 : index
    %c0_98 = arith.constant 0 : index
    %195 = vector.load %arg15[%194, %c0_97, %c0_98] : memref<8x8x32xf32, #tpu.memory_space<vmem>>, vector<1x8x32xf32>
    %196 = vector.shape_cast %195 : vector<1x8x32xf32> to vector<8x32xf32>
    %197 = arith.addf %196, %181 : vector<8x32xf32>
    %198 = arith.negf %197 : vector<8x32xf32>
    %199 = math.exp %198 : vector<8x32xf32>
    %cst_99 = arith.constant 1.000000e+00 : f32
    %200 = vector.broadcast %cst_99 : f32 to vector<8x32xf32>
    %201 = arith.addf %200, %199 : vector<8x32xf32>
    %202 = arith.divf %200, %201 : vector<8x32xf32>
    %203 = arith.index_cast %c4_i32 : i32 to index
    %c0_100 = arith.constant 0 : index
    %c0_101 = arith.constant 0 : index
    %204 = vector.load %arg16[%203, %c0_100, %c0_101] : memref<8x8x32xf32, #tpu.memory_space<vmem>>, vector<1x8x32xf32>
    %205 = vector.shape_cast %204 : vector<1x8x32xf32> to vector<8x32xf32>
    %206 = arith.mulf %193, %184 : vector<8x32xf32>
    %207 = arith.addf %205, %206 : vector<8x32xf32>
    %208 = math.tanh %207 : vector<8x32xf32>
    %cst_102 = arith.constant 1.000000e+00 : f32
    %209 = vector.broadcast %cst_102 : f32 to vector<8x32xf32>
    %210 = arith.subf %209, %202 : vector<8x32xf32>
    %211 = arith.mulf %210, %208 : vector<8x32xf32>
    %212 = arith.mulf %202, %175 : vector<8x32xf32>
    %213 = arith.addf %211, %212 : vector<8x32xf32>
    %214 = arith.index_cast %c4_i32 : i32 to index
    %c0_103 = arith.constant 0 : index
    %c0_104 = arith.constant 0 : index
    %215 = vector.load %arg12[%214, %c0_103, %c0_104] : memref<8x8x32xf32, #tpu.memory_space<vmem>>, vector<1x8x32xf32>
    %216 = vector.shape_cast %215 : vector<1x8x32xf32> to vector<8x32xf32>
    %217 = vector.shape_cast %213 : vector<8x32xf32> to vector<1x8x32xf32>
    tpu.vector_store %arg12[%214, %c0_103, %c0_104], %217 {strides = array<i32>} : memref<8x8x32xf32, #tpu.memory_space<vmem>>, vector<1x8x32xf32>,
    %c5_i32 = arith.constant 5 : i32
    %cst_105 = arith.constant dense<0.000000e+00> : vector<8x32xf32>
    %218 = tpu.matmul %213, %23, %cst_105 {dimension_numbers = #tpu.dot_dimension_numbers<[1], [0], [0], [1], [0, 0, 1, 1], [], []>} : vector<8x32xf32>, vector<32x32xf32>, vector<8x32xf32> -> vector<8x32xf32>
    %cst_106 = arith.constant dense<0.000000e+00> : vector<8x32xf32>
    %219 = tpu.matmul %213, %24, %cst_106 {dimension_numbers = #tpu.dot_dimension_numbers<[1], [0], [0], [1], [0, 0, 1, 1], [], []>} : vector<8x32xf32>, vector<32x32xf32>, vector<8x32xf32> -> vector<8x32xf32>
    %cst_107 = arith.constant dense<0.000000e+00> : vector<8x32xf32>
    %220 = tpu.matmul %213, %25, %cst_107 {dimension_numbers = #tpu.dot_dimension_numbers<[1], [0], [0], [1], [0, 0, 1, 1], [], []>} : vector<8x32xf32>, vector<32x32xf32>, vector<8x32xf32> -> vector<8x32xf32>
    %221 = vector.broadcast %26 : vector<1x32xf32> to vector<8x32xf32>
    %222 = arith.addf %220, %221 : vector<8x32xf32>
    %223 = arith.index_cast %c5_i32 : i32 to index
    %c0_108 = arith.constant 0 : index
    %c0_109 = arith.constant 0 : index
    %224 = vector.load %arg14[%223, %c0_108, %c0_109] : memref<8x8x32xf32, #tpu.memory_space<vmem>>, vector<1x8x32xf32>
    %225 = vector.shape_cast %224 : vector<1x8x32xf32> to vector<8x32xf32>
    %226 = arith.addf %225, %218 : vector<8x32xf32>
    %227 = arith.negf %226 : vector<8x32xf32>
    %228 = math.exp %227 : vector<8x32xf32>
    %cst_110 = arith.constant 1.000000e+00 : f32
    %229 = vector.broadcast %cst_110 : f32 to vector<8x32xf32>
    %230 = arith.addf %229, %228 : vector<8x32xf32>
    %231 = arith.divf %229, %230 : vector<8x32xf32>
    %232 = arith.index_cast %c5_i32 : i32 to index
    %c0_111 = arith.constant 0 : index
    %c0_112 = arith.constant 0 : index
    %233 = vector.load %arg15[%232, %c0_111, %c0_112] : memref<8x8x32xf32, #tpu.memory_space<vmem>>, vector<1x8x32xf32>
    %234 = vector.shape_cast %233 : vector<1x8x32xf32> to vector<8x32xf32>
    %235 = arith.addf %234, %219 : vector<8x32xf32>
    %236 = arith.negf %235 : vector<8x32xf32>
    %237 = math.exp %236 : vector<8x32xf32>
    %cst_113 = arith.constant 1.000000e+00 : f32
    %238 = vector.broadcast %cst_113 : f32 to vector<8x32xf32>
    %239 = arith.addf %238, %237 : vector<8x32xf32>
    %240 = arith.divf %238, %239 : vector<8x32xf32>
    %241 = arith.index_cast %c5_i32 : i32 to index
    %c0_114 = arith.constant 0 : index
    %c0_115 = arith.constant 0 : index
    %242 = vector.load %arg16[%241, %c0_114, %c0_115] : memref<8x8x32xf32, #tpu.memory_space<vmem>>, vector<1x8x32xf32>
    %243 = vector.shape_cast %242 : vector<1x8x32xf32> to vector<8x32xf32>
    %244 = arith.mulf %231, %222 : vector<8x32xf32>
    %245 = arith.addf %243, %244 : vector<8x32xf32>
    %246 = math.tanh %245 : vector<8x32xf32>
    %cst_116 = arith.constant 1.000000e+00 : f32
    %247 = vector.broadcast %cst_116 : f32 to vector<8x32xf32>
    %248 = arith.subf %247, %240 : vector<8x32xf32>
    %249 = arith.mulf %248, %246 : vector<8x32xf32>
    %250 = arith.mulf %240, %213 : vector<8x32xf32>
    %251 = arith.addf %249, %250 : vector<8x32xf32>
    %252 = arith.index_cast %c5_i32 : i32 to index
    %c0_117 = arith.constant 0 : index
    %c0_118 = arith.constant 0 : index
    %253 = vector.load %arg12[%252, %c0_117, %c0_118] : memref<8x8x32xf32, #tpu.memory_space<vmem>>, vector<1x8x32xf32>
    %254 = vector.shape_cast %253 : vector<1x8x32xf32> to vector<8x32xf32>
    %255 = vector.shape_cast %251 : vector<8x32xf32> to vector<1x8x32xf32>
    tpu.vector_store %arg12[%252, %c0_117, %c0_118], %255 {strides = array<i32>} : memref<8x8x32xf32, #tpu.memory_space<vmem>>, vector<1x8x32xf32>,
    %c6_i32 = arith.constant 6 : i32
    %cst_119 = arith.constant dense<0.000000e+00> : vector<8x32xf32>
    %256 = tpu.matmul %251, %23, %cst_119 {dimension_numbers = #tpu.dot_dimension_numbers<[1], [0], [0], [1], [0, 0, 1, 1], [], []>} : vector<8x32xf32>, vector<32x32xf32>, vector<8x32xf32> -> vector<8x32xf32>
    %cst_120 = arith.constant dense<0.000000e+00> : vector<8x32xf32>
    %257 = tpu.matmul %251, %24, %cst_120 {dimension_numbers = #tpu.dot_dimension_numbers<[1], [0], [0], [1], [0, 0, 1, 1], [], []>} : vector<8x32xf32>, vector<32x32xf32>, vector<8x32xf32> -> vector<8x32xf32>
    %cst_121 = arith.constant dense<0.000000e+00> : vector<8x32xf32>
    %258 = tpu.matmul %251, %25, %cst_121 {dimension_numbers = #tpu.dot_dimension_numbers<[1], [0], [0], [1], [0, 0, 1, 1], [], []>} : vector<8x32xf32>, vector<32x32xf32>, vector<8x32xf32> -> vector<8x32xf32>
    %259 = vector.broadcast %26 : vector<1x32xf32> to vector<8x32xf32>
    %260 = arith.addf %258, %259 : vector<8x32xf32>
    %261 = arith.index_cast %c6_i32 : i32 to index
    %c0_122 = arith.constant 0 : index
    %c0_123 = arith.constant 0 : index
    %262 = vector.load %arg14[%261, %c0_122, %c0_123] : memref<8x8x32xf32, #tpu.memory_space<vmem>>, vector<1x8x32xf32>
    %263 = vector.shape_cast %262 : vector<1x8x32xf32> to vector<8x32xf32>
    %264 = arith.addf %263, %256 : vector<8x32xf32>
    %265 = arith.negf %264 : vector<8x32xf32>
    %266 = math.exp %265 : vector<8x32xf32>
    %cst_124 = arith.constant 1.000000e+00 : f32
    %267 = vector.broadcast %cst_124 : f32 to vector<8x32xf32>
    %268 = arith.addf %267, %266 : vector<8x32xf32>
    %269 = arith.divf %267, %268 : vector<8x32xf32>
    %270 = arith.index_cast %c6_i32 : i32 to index
    %c0_125 = arith.constant 0 : index
    %c0_126 = arith.constant 0 : index
    %271 = vector.load %arg15[%270, %c0_125, %c0_126] : memref<8x8x32xf32, #tpu.memory_space<vmem>>, vector<1x8x32xf32>
    %272 = vector.shape_cast %271 : vector<1x8x32xf32> to vector<8x32xf32>
    %273 = arith.addf %272, %257 : vector<8x32xf32>
    %274 = arith.negf %273 : vector<8x32xf32>
    %275 = math.exp %274 : vector<8x32xf32>
    %cst_127 = arith.constant 1.000000e+00 : f32
    %276 = vector.broadcast %cst_127 : f32 to vector<8x32xf32>
    %277 = arith.addf %276, %275 : vector<8x32xf32>
    %278 = arith.divf %276, %277 : vector<8x32xf32>
    %279 = arith.index_cast %c6_i32 : i32 to index
    %c0_128 = arith.constant 0 : index
    %c0_129 = arith.constant 0 : index
    %280 = vector.load %arg16[%279, %c0_128, %c0_129] : memref<8x8x32xf32, #tpu.memory_space<vmem>>, vector<1x8x32xf32>
    %281 = vector.shape_cast %280 : vector<1x8x32xf32> to vector<8x32xf32>
    %282 = arith.mulf %269, %260 : vector<8x32xf32>
    %283 = arith.addf %281, %282 : vector<8x32xf32>
    %284 = math.tanh %283 : vector<8x32xf32>
    %cst_130 = arith.constant 1.000000e+00 : f32
    %285 = vector.broadcast %cst_130 : f32 to vector<8x32xf32>
    %286 = arith.subf %285, %278 : vector<8x32xf32>
    %287 = arith.mulf %286, %284 : vector<8x32xf32>
    %288 = arith.mulf %278, %251 : vector<8x32xf32>
    %289 = arith.addf %287, %288 : vector<8x32xf32>
    %290 = arith.index_cast %c6_i32 : i32 to index
    %c0_131 = arith.constant 0 : index
    %c0_132 = arith.constant 0 : index
    %291 = vector.load %arg12[%290, %c0_131, %c0_132] : memref<8x8x32xf32, #tpu.memory_space<vmem>>, vector<1x8x32xf32>
    %292 = vector.shape_cast %291 : vector<1x8x32xf32> to vector<8x32xf32>
    %293 = vector.shape_cast %289 : vector<8x32xf32> to vector<1x8x32xf32>
    tpu.vector_store %arg12[%290, %c0_131, %c0_132], %293 {strides = array<i32>} : memref<8x8x32xf32, #tpu.memory_space<vmem>>, vector<1x8x32xf32>,
    %c7_i32 = arith.constant 7 : i32
    %cst_133 = arith.constant dense<0.000000e+00> : vector<8x32xf32>
    %294 = tpu.matmul %289, %23, %cst_133 {dimension_numbers = #tpu.dot_dimension_numbers<[1], [0], [0], [1], [0, 0, 1, 1], [], []>} : vector<8x32xf32>, vector<32x32xf32>, vector<8x32xf32> -> vector<8x32xf32>
    %cst_134 = arith.constant dense<0.000000e+00> : vector<8x32xf32>
    %295 = tpu.matmul %289, %24, %cst_134 {dimension_numbers = #tpu.dot_dimension_numbers<[1], [0], [0], [1], [0, 0, 1, 1], [], []>} : vector<8x32xf32>, vector<32x32xf32>, vector<8x32xf32> -> vector<8x32xf32>
    %cst_135 = arith.constant dense<0.000000e+00> : vector<8x32xf32>
    %296 = tpu.matmul %289, %25, %cst_135 {dimension_numbers = #tpu.dot_dimension_numbers<[1], [0], [0], [1], [0, 0, 1, 1], [], []>} : vector<8x32xf32>, vector<32x32xf32>, vector<8x32xf32> -> vector<8x32xf32>
    %297 = vector.broadcast %26 : vector<1x32xf32> to vector<8x32xf32>
    %298 = arith.addf %296, %297 : vector<8x32xf32>
    %299 = arith.index_cast %c7_i32 : i32 to index
    %c0_136 = arith.constant 0 : index
    %c0_137 = arith.constant 0 : index
    %300 = vector.load %arg14[%299, %c0_136, %c0_137] : memref<8x8x32xf32, #tpu.memory_space<vmem>>, vector<1x8x32xf32>
    %301 = vector.shape_cast %300 : vector<1x8x32xf32> to vector<8x32xf32>
    %302 = arith.addf %301, %294 : vector<8x32xf32>
    %303 = arith.negf %302 : vector<8x32xf32>
    %304 = math.exp %303 : vector<8x32xf32>
    %cst_138 = arith.constant 1.000000e+00 : f32
    %305 = vector.broadcast %cst_138 : f32 to vector<8x32xf32>
    %306 = arith.addf %305, %304 : vector<8x32xf32>
    %307 = arith.divf %305, %306 : vector<8x32xf32>
    %308 = arith.index_cast %c7_i32 : i32 to index
    %c0_139 = arith.constant 0 : index
    %c0_140 = arith.constant 0 : index
    %309 = vector.load %arg15[%308, %c0_139, %c0_140] : memref<8x8x32xf32, #tpu.memory_space<vmem>>, vector<1x8x32xf32>
    %310 = vector.shape_cast %309 : vector<1x8x32xf32> to vector<8x32xf32>
    %311 = arith.addf %310, %295 : vector<8x32xf32>
    %312 = arith.negf %311 : vector<8x32xf32>
    %313 = math.exp %312 : vector<8x32xf32>
    %cst_141 = arith.constant 1.000000e+00 : f32
    %314 = vector.broadcast %cst_141 : f32 to vector<8x32xf32>
    %315 = arith.addf %314, %313 : vector<8x32xf32>
    %316 = arith.divf %314, %315 : vector<8x32xf32>
    %317 = arith.index_cast %c7_i32 : i32 to index
    %c0_142 = arith.constant 0 : index
    %c0_143 = arith.constant 0 : index
    %318 = vector.load %arg16[%317, %c0_142, %c0_143] : memref<8x8x32xf32, #tpu.memory_space<vmem>>, vector<1x8x32xf32>
    %319 = vector.shape_cast %318 : vector<1x8x32xf32> to vector<8x32xf32>
    %320 = arith.mulf %307, %298 : vector<8x32xf32>
    %321 = arith.addf %319, %320 : vector<8x32xf32>
    %322 = math.tanh %321 : vector<8x32xf32>
    %cst_144 = arith.constant 1.000000e+00 : f32
    %323 = vector.broadcast %cst_144 : f32 to vector<8x32xf32>
    %324 = arith.subf %323, %316 : vector<8x32xf32>
    %325 = arith.mulf %324, %322 : vector<8x32xf32>
    %326 = arith.mulf %316, %289 : vector<8x32xf32>
    %327 = arith.addf %325, %326 : vector<8x32xf32>
    %328 = arith.index_cast %c7_i32 : i32 to index
    %c0_145 = arith.constant 0 : index
    %c0_146 = arith.constant 0 : index
    %329 = vector.load %arg12[%328, %c0_145, %c0_146] : memref<8x8x32xf32, #tpu.memory_space<vmem>>, vector<1x8x32xf32>
    %330 = vector.shape_cast %329 : vector<1x8x32xf32> to vector<8x32xf32>
    %331 = vector.shape_cast %327 : vector<8x32xf32> to vector<1x8x32xf32>
    tpu.vector_store %arg12[%328, %c0_145, %c0_146], %331 {strides = array<i32>} : memref<8x8x32xf32, #tpu.memory_space<vmem>>, vector<1x8x32xf32>,
    %c8_i32 = arith.constant 8 : i32
    %c0_147 = arith.constant 0 : index
    %c0_148 = arith.constant 0 : index
    %332 = vector.load %arg13[%c0_147, %c0_148] : memref<8x32xf32, #tpu.memory_space<vmem>>, vector<8x32xf32>
    tpu.vector_store %arg13[%c0_147, %c0_148], %327 {strides = array<i32>} : memref<8x32xf32, #tpu.memory_space<vmem>>, vector<8x32xf32>,
    return
  }
}

</mosaic_0001>

<llo_original>
// kernel: tpu_custom_call.1
$region0: #{tpu_custom_call.1}
  #allocation0 [shape = 'u32[]', space=smem, size = 0x4, offset = 0x4, fixed_abs, tag = 'smem constant byte address 0x4 - core index']
  #allocation1 [shape = 'u32[144,128]{1,0:T(1,128)}', space=vmem, size = 0x12000, scoped, tag = 'internal scratch']
  #allocation2 [shape = 'f32[8,8,32]{2,1,0:T(8,128)}', space=vmem, size = 0x8000, scoped, tag = 'scratch operand']
  #allocation3 [shape = 'f32[8,8,32]{2,1,0:T(8,128)}', space=vmem, size = 0x8000, scoped, tag = 'scratch operand']
  #allocation4 [shape = 'f32[8,8,32]{2,1,0:T(8,128)}', space=vmem, size = 0x8000, scoped, tag = 'scratch operand']
  %s0 = inlined_call_operand.vmem [shape: f32[8,8,4], index: 0, kind: input, shape index: {}]
  %s1 = inlined_call_operand.hbm [shape: f32[8,32], index: 1, kind: input, shape index: {}]
  %s2 = inlined_call_operand.vmem [shape: f32[4,32], index: 2, kind: input, shape index: {}]
  %s3 = inlined_call_operand.vmem [shape: f32[4,32], index: 3, kind: input, shape index: {}]
  %s4 = inlined_call_operand.vmem [shape: f32[4,32], index: 4, kind: input, shape index: {}]
  %s5 = inlined_call_operand.vmem [shape: f32[32,32], index: 5, kind: input, shape index: {}]
  %s6 = inlined_call_operand.vmem [shape: f32[32,32], index: 6, kind: input, shape index: {}]
  %s7 = inlined_call_operand.vmem [shape: f32[32,32], index: 7, kind: input, shape index: {}]
  %s8 = inlined_call_operand.vmem [shape: f32[1,32], index: 8, kind: input, shape index: {}]
  %s9 = inlined_call_operand.vmem [shape: f32[1,32], index: 9, kind: input, shape index: {}]
  %s10 = inlined_call_operand.vmem [shape: f32[1,32], index: 10, kind: input, shape index: {}]
  %s11 = inlined_call_operand.vmem [shape: f32[1,32], index: 11, kind: input, shape index: {}]
  %s12 = inlined_call_operand.hbm [shape: f32[8,8,32], index: 12, kind: output, shape index: {0}]
  %s13 = inlined_call_operand.hbm [shape: f32[8,32], index: 13, kind: output, shape index: {1}]
  %14 = xla_tuple %s12, %s13
  %s15 = sld [smem:[#allocation0]]
  $region70: #{tpu_custom_call.1} parent=0
    _
  %s17 = ssub.s32 1, %s15
  %s18 = scalar_select 0, %s17, %s15
  $region1: #{tpu_custom_call.1} parent=0
    #allocation5 [shape = 'u8[4096]{0}', space=vmem, size = 0x1000, scoped, tag = 'input window, operand 1, single buffered']
    #allocation6 [shape = 's32[1]{0}', space=sflag, size = 0x4, scoped, tag = 'scoped memory for tpu_custom_call.1']
    #allocation7 [shape = 's32[1]{0}', space=sflag, size = 0x4, scoped, tag = 'scoped memory for tpu_custom_call.1']
    #allocation8 [shape = 'u8[32768]{0}', space=vmem, size = 0x8000, scoped, tag = 'output window, operand 0, single buffered']
    #allocation9 [shape = 'u8[4096]{0}', space=vmem, size = 0x1000, scoped, tag = 'output window, operand 1, single buffered']
    #allocation10 [shape = 's32[1]{0}', space=sflag, size = 0x4, scoped, tag = 'scoped memory for tpu_custom_call.1']
    %19 = vsyncpa [#allocation6], 0
    %20 = vsyncpa [#allocation7], 0
    %21 = vsyncpa [#allocation10], 0
    // Predicated region
    $region2: #{tpu_custom_call.1} parent=1 // pred_check
      _
    $region3: #{tpu_custom_call.1} parent=1 // pred_check_branch
      %23 = sbr.rel (0) target = $region5
    $region4: #{tpu_custom_call.1} parent=1 // pred_region
      _
    $region5: #{tpu_custom_call.1} parent=1 // pred_fallthru
      _
    // Predicated region
    $region6: #{tpu_custom_call.1} parent=1 // pred_check
      _
    $region7: #{tpu_custom_call.1} parent=1 // pred_check_branch
      %25 = sbr.rel (0) target = $region9
    $region8: #{tpu_custom_call.1} parent=1 // pred_region
      %s27 = ssub.s32 128, 128
      %28 = vsyncadd [#allocation6], %s27
      %s30 = sshll.u32 [#allocation5], 4
      %s31 = int_to_ptr.vmem [resolvable:$true] %s30
      %33 = dma.hbm_to_vmem [thread:$0]  %s1, 128, %s31, [#allocation6]
    $region9: #{tpu_custom_call.1} parent=1 // pred_fallthru
      _
    // Predicated region
    $region10: #{tpu_custom_call.1} parent=1 // pred_check
      _
    $region11: #{tpu_custom_call.1} parent=1 // pred_check_branch
      %35 = sbr.rel (0) target = $region13
    $region12: #{tpu_custom_call.1} parent=1 // pred_region
      _
    $region13: #{tpu_custom_call.1} parent=1 // pred_fallthru
      _
    // Predicated region
    $region14: #{tpu_custom_call.1} parent=1 // pred_check
      _
    $region15: #{tpu_custom_call.1} parent=1 // pred_check_branch
      %37 = sbr.rel (0) target = $region17
    $region16: #{tpu_custom_call.1} parent=1 // pred_region
      _
    $region17: #{tpu_custom_call.1} parent=1 // pred_fallthru
      _
    // Predicated region
    $region18: #{tpu_custom_call.1} parent=1 // pred_check
      _
    $region19: #{tpu_custom_call.1} parent=1 // pred_check_branch
      %39 = sbr.rel (0) target = $region21
    $region20: #{tpu_custom_call.1} parent=1 // pred_region
      _
    $region21: #{tpu_custom_call.1} parent=1 // pred_fallthru
      _
    // Predicated region
    $region22: #{tpu_custom_call.1} parent=1 // pred_check
      _
    $region23: #{tpu_custom_call.1} parent=1 // pred_check_branch
      %41 = sbr.rel (0) target = $region25
    $region24: #{tpu_custom_call.1} parent=1 // pred_region
      _
    $region25: #{tpu_custom_call.1} parent=1 // pred_fallthru
      _
    // Predicated region
    $region26: #{tpu_custom_call.1} parent=1 // pred_check
      _
    $region27: #{tpu_custom_call.1} parent=1 // pred_check_branch
      %43 = sbr.rel (0) target = $region29
    $region28: #{tpu_custom_call.1} parent=1 // pred_region
      _
    $region29: #{tpu_custom_call.1} parent=1 // pred_fallthru
      _
    // Predicated region
    $region30: #{tpu_custom_call.1} parent=1 // pred_check
      _
    $region31: #{tpu_custom_call.1} parent=1 // pred_check_branch
      %45 = sbr.rel (0) target = $region33
    $region32: #{tpu_custom_call.1} parent=1 // pred_region
      _
    $region33: #{tpu_custom_call.1} parent=1 // pred_fallthru
      _
    // Predicated region
    $region34: #{tpu_custom_call.1} parent=1 // pred_check
      _
    $region35: #{tpu_custom_call.1} parent=1 // pred_check_branch
      %47 = sbr.rel (0) target = $region37
    $region36: #{tpu_custom_call.1} parent=1 // pred_region
      _
    $region37: #{tpu_custom_call.1} parent=1 // pred_fallthru
      _
    // Predicated region
    $region38: #{tpu_custom_call.1} parent=1 // pred_check
      _
    $region39: #{tpu_custom_call.1} parent=1 // pred_check_branch
      %49 = sbr.rel (0) target = $region41
    $region40: #{tpu_custom_call.1} parent=1 // pred_region
      _
    $region41: #{tpu_custom_call.1} parent=1 // pred_fallthru
      _
    // Predicated region
    $region42: #{tpu_custom_call.1} parent=1 // pred_check
      _
    $region43: #{tpu_custom_call.1} parent=1 // pred_check_branch
      %51 = sbr.rel (0) target = $region45
    $region44: #{tpu_custom_call.1} parent=1 // pred_region
      _
    $region45: #{tpu_custom_call.1} parent=1 // pred_fallthru
      _
    // Predicated region
    $region46: #{tpu_custom_call.1} parent=1 // pred_check
      _
    $region47: #{tpu_custom_call.1} parent=1 // pred_check_branch
      %53 = sbr.rel (0) target = $region49
    $region48: #{tpu_custom_call.1} parent=1 // pred_region
      _
    $region49: #{tpu_custom_call.1} parent=1 // pred_fallthru
      _
    // Predicated region
    $region50: #{tpu_custom_call.1} parent=1 // pred_check
      _
    $region51: #{tpu_custom_call.1} parent=1 // pred_check_branch
      %55 = sbr.rel (0) target = $region53
    $region52: #{tpu_custom_call.1} parent=1 // pred_region
      %56 = dma.done [#allocation6], 128
    $region53: #{tpu_custom_call.1} parent=1 // pred_fallthru
      _
    %v57 = vld [vmem:[%s0] sm:$0xff]
    %v58 = vld [vmem:[%s0 + $0x8] sm:$0xff]
    %v59 = vld [vmem:[%s0 + $0x10] sm:$0xff]
    %v60 = vld [vmem:[%s0 + $0x18] sm:$0xff]
    %v61 = vld [vmem:[%s0 + $0x20] sm:$0xff]
    %v62 = vld [vmem:[%s0 + $0x28] sm:$0xff]
    %v63 = vld [vmem:[%s0 + $0x30] sm:$0xff]
    %v64 = vld [vmem:[%s0 + $0x38] sm:$0xff]
    %v65 = vld [vmem:[%s2] sm:$0xf]
    %v66 = vld [vmem:[%s8] sm:$0x1]
    %v68 = vlaneseq
    %v69 = vshrl.u32 %v68, 7
    %v70 = vsub.s32 0, %v69
    %v71 = vrot.slane %v66, %v70
    %vm73 = vcmask 31744
    %v75 = vsel %vm73, %v57, 0
    %v78 = vsel %vm73, %v58, 0
    %v81 = vsel %vm73, %v59, 0
    %v84 = vsel %vm73, %v60, 0
    %v87 = vsel %vm73, %v61, 0
    %v90 = vsel %vm73, %v62, 0
    %v93 = vsel %vm73, %v63, 0
    %v96 = vsel %vm73, %v64, 0
    %vm98 = vcmask 1043456
    %v100 = vsel %vm98, %v65, 0
    %102 = vmatprep.subr.mxu0 0.0
    %103 = vmatpush1.msra.mxu0 %v100
    %104 = vmatprep.subr.mxu0 0.0
    %105 = vmatpush1.msra.mxu0 0.0
    %106 = vmatprep.subr.mxu0 0.0
    %107 = vmatpush1.msra.mxu0 0.0
    %108 = vmatprep.subr.mxu0 0.0
    %109 = vmatpush1.msra.mxu0 0.0
    %110 = vmatprep.subr.mxu0 0.0
    %111 = vmatpush1.msra.mxu0 0.0
    %112 = vmatprep.subr.mxu0 0.0
    %113 = vmatpush1.msra.mxu0 0.0
    %114 = vmatprep.subr.mxu0 0.0
    %115 = vmatpush1.msra.mxu0 0.0
    %116 = vmatprep.subr.mxu0 0.0
    %117 = vmatpush1.msra.mxu0 0.0
    %118 = vmatprep.subr.mxu0 0.0
    %119 = vmatpush1.msra.mxu0 0.0
    %120 = vmatprep.subr.mxu0 0.0
    %121 = vmatpush1.msra.mxu0 0.0
    %122 = vmatprep.subr.mxu0 0.0
    %123 = vmatpush1.msra.mxu0 0.0
    %124 = vmatprep.subr.mxu0 0.0
    %125 = vmatpush1.msra.mxu0 0.0
    %126 = vmatprep.subr.mxu0 0.0
    %127 = vmatpush1.msra.mxu0 0.0
    %128 = vmatprep.subr.mxu0 0.0
    %129 = vmatpush1.msra.mxu0 0.0
    %130 = vmatprep.subr.mxu0 0.0
    %131 = vmatpush1.msra.mxu0 0.0
    %132 = vmatprep.subr.mxu0 0.0
    %133 = vmatpush1.msra.mxu0 0.0
    %134 = vmatprep.subr.mxu0 0.0
    %135 = vmatpush1.msra.mxu0 0.0
    %136 = vmatprep.subr.mxu0 0.0
    %137 = vmatpush1.msra.mxu0 0.0
    %138 = vmatprep.subr.mxu0 0.0
    %139 = vmatpush1.msra.mxu0 0.0
    %140 = vmatprep.subr.mxu0 0.0
    %141 = vmatpush1.msra.mxu0 0.0
    %142 = vmatprep.subr.mxu0 0.0
    %143 = vmatpush1.msra.mxu0 0.0
    %144 = vmatprep.subr.mxu0 0.0
    %145 = vmatpush1.msra.mxu0 0.0
    %146 = vmatprep.subr.mxu0 0.0
    %147 = vmatpush1.msra.mxu0 0.0
    %148 = vmatprep.subr.mxu0 0.0
    %149 = vmatpush1.msra.mxu0 0.0
    %150 = vmatprep.subr.mxu0 0.0
    %151 = vmatpush1.msra.mxu0 0.0
    %152 = vmatprep.subr.mxu0 0.0
    %153 = vmatpush1.msra.mxu0 0.0
    %154 = vmatprep.subr.mxu0 0.0
    %155 = vmatpush1.msra.mxu0 0.0
    %156 = vmatprep.subr.mxu0 0.0
    %157 = vmatpush1.msra.mxu0 0.0
    %158 = vmatprep.subr.mxu0 0.0
    %159 = vmatpush1.msra.mxu0 0.0
    %160 = vmatprep.subr.mxu0 0.0
    %161 = vmatpush1.msra.mxu0 0.0
    %162 = vmatprep.subr.mxu0 0.0
    %163 = vmatpush1.msra.mxu0 0.0
    %164 = vmatprep.subr.mxu0 0.0
    %165 = vmatpush1.msra.mxu0 0.0
    %166 = vmatprep.mubr.f32.mxu0 0.0
    %167 = vmatmul.mubr.f32.gmra.mrb[0].mxu0 %v75
    %v168 = vpop.f32.mrb[0].mxu0
    %v169 = vadd.f32 %v71, %v168
    %v170 = vpop.f32.mrb[0].mxu0
    %171 = vmatprep.mubr.f32.mxu0 0.0
    %172 = vmatmul.mubr.f32.gmra.mrb[0].mxu0 %v78
    %v173 = vpop.f32.mrb[0].mxu0
    %v174 = vadd.f32 %v71, %v173
    %v175 = vpop.f32.mrb[0].mxu0
    %176 = vmatprep.mubr.f32.mxu0 0.0
    %177 = vmatmul.mubr.f32.gmra.mrb[0].mxu0 %v81
    %v178 = vpop.f32.mrb[0].mxu0
    %v179 = vadd.f32 %v71, %v178
    %v180 = vpop.f32.mrb[0].mxu0
    %181 = vmatprep.mubr.f32.mxu0 0.0
    %182 = vmatmul.mubr.f32.gmra.mrb[0].mxu0 %v84
    %v183 = vpop.f32.mrb[0].mxu0
    %v184 = vadd.f32 %v71, %v183
    %v185 = vpop.f32.mrb[0].mxu0
    %186 = vmatprep.mubr.f32.mxu0 0.0
    %187 = vmatmul.mubr.f32.gmra.mrb[0].mxu0 %v87
    %v188 = vpop.f32.mrb[0].mxu0
    %v189 = vadd.f32 %v71, %v188
    %v190 = vpop.f32.mrb[0].mxu0
    %191 = vmatprep.mubr.f32.mxu0 0.0
    %192 = vmatmul.mubr.f32.gmra.mrb[0].mxu0 %v90
    %v193 = vpop.f32.mrb[0].mxu0
    %v194 = vadd.f32 %v71, %v193
    %v195 = vpop.f32.mrb[0].mxu0
    %196 = vmatprep.mubr.f32.mxu0 0.0
    %197 = vmatmul.mubr.f32.gmra.mrb[0].mxu0 %v93
    %v198 = vpop.f32.mrb[0].mxu0
    %v199 = vadd.f32 %v71, %v198
    %v200 = vpop.f32.mrb[0].mxu0
    %201 = vmatprep.mubr.f32.mxu0 0.0
    %202 = vmatmul.mubr.f32.gmra.mrb[0].mxu0 %v96
    %v203 = vpop.f32.mrb[0].mxu0
    %v204 = vadd.f32 %v71, %v203
    %v205 = vpop.f32.mrb[0].mxu0
    %206 = vdwg.mxu0
    %vm207 = vcmask 261120
    %208 = vst.msk [vmem:[#allocation2] sm:$0xff] %vm207, %v169
    %209 = vst.msk [vmem:[#allocation2 + $0x8] sm:$0xff] %vm207, %v174
    %210 = vst.msk [vmem:[#allocation2 + $0x10] sm:$0xff] %vm207, %v179
    %211 = vst.msk [vmem:[#allocation2 + $0x18] sm:$0xff] %vm207, %v184
    %212 = vst.msk [vmem:[#allocation2 + $0x20] sm:$0xff] %vm207, %v189
    %213 = vst.msk [vmem:[#allocation2 + $0x28] sm:$0xff] %vm207, %v194
    %214 = vst.msk [vmem:[#allocation2 + $0x30] sm:$0xff] %vm207, %v199
    %215 = vst.msk [vmem:[#allocation2 + $0x38] sm:$0xff] %vm207, %v204
    %v216 = vld [vmem:[%s3] sm:$0xf]
    %v217 = vld [vmem:[%s9] sm:$0x1]
    %v219 = vlaneseq
    %v220 = vshrl.u32 %v219, 7
    %v221 = vsub.s32 0, %v220
    %v222 = vrot.slane %v217, %v221
    %v225 = vsel %vm98, %v216, 0
    %227 = vmatprep.subr.mxu0 0.0
    %228 = vmatpush1.msra.mxu0 %v225
    %229 = vmatprep.subr.mxu0 0.0
    %230 = vmatpush1.msra.mxu0 0.0
    %231 = vmatprep.subr.mxu0 0.0
    %232 = vmatpush1.msra.mxu0 0.0
    %233 = vmatprep.subr.mxu0 0.0
    %234 = vmatpush1.msra.mxu0 0.0
    %235 = vmatprep.subr.mxu0 0.0
    %236 = vmatpush1.msra.mxu0 0.0
    %237 = vmatprep.subr.mxu0 0.0
    %238 = vmatpush1.msra.mxu0 0.0
    %239 = vmatprep.subr.mxu0 0.0
    %240 = vmatpush1.msra.mxu0 0.0
    %241 = vmatprep.subr.mxu0 0.0
    %242 = vmatpush1.msra.mxu0 0.0
    %243 = vmatprep.subr.mxu0 0.0
    %244 = vmatpush1.msra.mxu0 0.0
    %245 = vmatprep.subr.mxu0 0.0
    %246 = vmatpush1.msra.mxu0 0.0
    %247 = vmatprep.subr.mxu0 0.0
    %248 = vmatpush1.msra.mxu0 0.0
    %249 = vmatprep.subr.mxu0 0.0
    %250 = vmatpush1.msra.mxu0 0.0
    %251 = vmatprep.subr.mxu0 0.0
    %252 = vmatpush1.msra.mxu0 0.0
    %253 = vmatprep.subr.mxu0 0.0
    %254 = vmatpush1.msra.mxu0 0.0
    %255 = vmatprep.subr.mxu0 0.0
    %256 = vmatpush1.msra.mxu0 0.0
    %257 = vmatprep.subr.mxu0 0.0
    %258 = vmatpush1.msra.mxu0 0.0
    %259 = vmatprep.subr.mxu0 0.0
    %260 = vmatpush1.msra.mxu0 0.0
    %261 = vmatprep.subr.mxu0 0.0
    %262 = vmatpush1.msra.mxu0 0.0
    %263 = vmatprep.subr.mxu0 0.0
    %264 = vmatpush1.msra.mxu0 0.0
    %265 = vmatprep.subr.mxu0 0.0
    %266 = vmatpush1.msra.mxu0 0.0
    %267 = vmatprep.subr.mxu0 0.0
    %268 = vmatpush1.msra.mxu0 0.0
    %269 = vmatprep.subr.mxu0 0.0
    %270 = vmatpush1.msra.mxu0 0.0
    %271 = vmatprep.subr.mxu0 0.0
    %272 = vmatpush1.msra.mxu0 0.0
    %273 = vmatprep.subr.mxu0 0.0
    %274 = vmatpush1.msra.mxu0 0.0
    %275 = vmatprep.subr.mxu0 0.0
    %276 = vmatpush1.msra.mxu0 0.0
    %277 = vmatprep.subr.mxu0 0.0
    %278 = vmatpush1.msra.mxu0 0.0
    %279 = vmatprep.subr.mxu0 0.0
    %280 = vmatpush1.msra.mxu0 0.0
    %281 = vmatprep.subr.mxu0 0.0
    %282 = vmatpush1.msra.mxu0 0.0
    %283 = vmatprep.subr.mxu0 0.0
    %284 = vmatpush1.msra.mxu0 0.0
    %285 = vmatprep.subr.mxu0 0.0
    %286 = vmatpush1.msra.mxu0 0.0
    %287 = vmatprep.subr.mxu0 0.0
    %288 = vmatpush1.msra.mxu0 0.0
    %289 = vmatprep.subr.mxu0 0.0
    %290 = vmatpush1.msra.mxu0 0.0
    %291 = vmatprep.mubr.f32.mxu0 0.0
    %292 = vmatmul.mubr.f32.gmra.mrb[0].mxu0 %v75
    %v293 = vpop.f32.mrb[0].mxu0
    %v294 = vadd.f32 %v222, %v293
    %v295 = vpop.f32.mrb[0].mxu0
    %296 = vmatprep.mubr.f32.mxu0 0.0
    %297 = vmatmul.mubr.f32.gmra.mrb[0].mxu0 %v78
    %v298 = vpop.f32.mrb[0].mxu0
    %v299 = vadd.f32 %v222, %v298
    %v300 = vpop.f32.mrb[0].mxu0
    %301 = vmatprep.mubr.f32.mxu0 0.0
    %302 = vmatmul.mubr.f32.gmra.mrb[0].mxu0 %v81
    %v303 = vpop.f32.mrb[0].mxu0
    %v304 = vadd.f32 %v222, %v303
    %v305 = vpop.f32.mrb[0].mxu0
    %306 = vmatprep.mubr.f32.mxu0 0.0
    %307 = vmatmul.mubr.f32.gmra.mrb[0].mxu0 %v84
    %v308 = vpop.f32.mrb[0].mxu0
    %v309 = vadd.f32 %v222, %v308
    %v310 = vpop.f32.mrb[0].mxu0
    %311 = vmatprep.mubr.f32.mxu0 0.0
    %312 = vmatmul.mubr.f32.gmra.mrb[0].mxu0 %v87
    %v313 = vpop.f32.mrb[0].mxu0
    %v314 = vadd.f32 %v222, %v313
    %v315 = vpop.f32.mrb[0].mxu0
    %316 = vmatprep.mubr.f32.mxu0 0.0
    %317 = vmatmul.mubr.f32.gmra.mrb[0].mxu0 %v90
    %v318 = vpop.f32.mrb[0].mxu0
    %v319 = vadd.f32 %v222, %v318
    %v320 = vpop.f32.mrb[0].mxu0
    %321 = vmatprep.mubr.f32.mxu0 0.0
    %322 = vmatmul.mubr.f32.gmra.mrb[0].mxu0 %v93
    %v323 = vpop.f32.mrb[0].mxu0
    %v324 = vadd.f32 %v222, %v323
    %v325 = vpop.f32.mrb[0].mxu0
    %326 = vmatprep.mubr.f32.mxu0 0.0
    %327 = vmatmul.mubr.f32.gmra.mrb[0].mxu0 %v96
    %v328 = vpop.f32.mrb[0].mxu0
    %v329 = vadd.f32 %v222, %v328
    %v330 = vpop.f32.mrb[0].mxu0
    %331 = vdwg.mxu0
    %332 = vst.msk [vmem:[#allocation3] sm:$0xff] %vm207, %v294
    %333 = vst.msk [vmem:[#allocation3 + $0x8] sm:$0xff] %vm207, %v299
    %334 = vst.msk [vmem:[#allocation3 + $0x10] sm:$0xff] %vm207, %v304
    %335 = vst.msk [vmem:[#allocation3 + $0x18] sm:$0xff] %vm207, %v309
    %336 = vst.msk [vmem:[#allocation3 + $0x20] sm:$0xff] %vm207, %v314
    %337 = vst.msk [vmem:[#allocation3 + $0x28] sm:$0xff] %vm207, %v319
    %338 = vst.msk [vmem:[#allocation3 + $0x30] sm:$0xff] %vm207, %v324
    %339 = vst.msk [vmem:[#allocation3 + $0x38] sm:$0xff] %vm207, %v329
    %v340 = vld [vmem:[%s4] sm:$0xf]
    %v341 = vld [vmem:[%s10] sm:$0x1]
    %v343 = vlaneseq
    %v344 = vshrl.u32 %v343, 7
    %v345 = vsub.s32 0, %v344
    %v346 = vrot.slane %v341, %v345
    %v349 = vsel %vm98, %v340, 0
    %351 = vmatprep.subr.mxu0 0.0
    %352 = vmatpush1.msra.mxu0 %v349
    %353 = vmatprep.subr.mxu0 0.0
    %354 = vmatpush1.msra.mxu0 0.0
    %355 = vmatprep.subr.mxu0 0.0
    %356 = vmatpush1.msra.mxu0 0.0
    %357 = vmatprep.subr.mxu0 0.0
    %358 = vmatpush1.msra.mxu0 0.0
    %359 = vmatprep.subr.mxu0 0.0
    %360 = vmatpush1.msra.mxu0 0.0
    %361 = vmatprep.subr.mxu0 0.0
    %362 = vmatpush1.msra.mxu0 0.0
    %363 = vmatprep.subr.mxu0 0.0
    %364 = vmatpush1.msra.mxu0 0.0
    %365 = vmatprep.subr.mxu0 0.0
    %366 = vmatpush1.msra.mxu0 0.0
    %367 = vmatprep.subr.mxu0 0.0
    %368 = vmatpush1.msra.mxu0 0.0
    %369 = vmatprep.subr.mxu0 0.0
    %370 = vmatpush1.msra.mxu0 0.0
    %371 = vmatprep.subr.mxu0 0.0
    %372 = vmatpush1.msra.mxu0 0.0
    %373 = vmatprep.subr.mxu0 0.0
    %374 = vmatpush1.msra.mxu0 0.0
    %375 = vmatprep.subr.mxu0 0.0
    %376 = vmatpush1.msra.mxu0 0.0
    %377 = vmatprep.subr.mxu0 0.0
    %378 = vmatpush1.msra.mxu0 0.0
    %379 = vmatprep.subr.mxu0 0.0
    %380 = vmatpush1.msra.mxu0 0.0
    %381 = vmatprep.subr.mxu0 0.0
    %382 = vmatpush1.msra.mxu0 0.0
    %383 = vmatprep.subr.mxu0 0.0
    %384 = vmatpush1.msra.mxu0 0.0
    %385 = vmatprep.subr.mxu0 0.0
    %386 = vmatpush1.msra.mxu0 0.0
    %387 = vmatprep.subr.mxu0 0.0
    %388 = vmatpush1.msra.mxu0 0.0
    %389 = vmatprep.subr.mxu0 0.0
    %390 = vmatpush1.msra.mxu0 0.0
    %391 = vmatprep.subr.mxu0 0.0
    %392 = vmatpush1.msra.mxu0 0.0
    %393 = vmatprep.subr.mxu0 0.0
    %394 = vmatpush1.msra.mxu0 0.0
    %395 = vmatprep.subr.mxu0 0.0
    %396 = vmatpush1.msra.mxu0 0.0
    %397 = vmatprep.subr.mxu0 0.0
    %398 = vmatpush1.msra.mxu0 0.0
    %399 = vmatprep.subr.mxu0 0.0
    %400 = vmatpush1.msra.mxu0 0.0
    %401 = vmatprep.subr.mxu0 0.0
    %402 = vmatpush1.msra.mxu0 0.0
    %403 = vmatprep.subr.mxu0 0.0
    %404 = vmatpush1.msra.mxu0 0.0
    %405 = vmatprep.subr.mxu0 0.0
    %406 = vmatpush1.msra.mxu0 0.0
    %407 = vmatprep.subr.mxu0 0.0
    %408 = vmatpush1.msra.mxu0 0.0
    %409 = vmatprep.subr.mxu0 0.0
    %410 = vmatpush1.msra.mxu0 0.0
    %411 = vmatprep.subr.mxu0 0.0
    %412 = vmatpush1.msra.mxu0 0.0
    %413 = vmatprep.subr.mxu0 0.0
    %414 = vmatpush1.msra.mxu0 0.0
    %415 = vmatprep.mubr.f32.mxu0 0.0
    %416 = vmatmul.mubr.f32.gmra.mrb[0].mxu0 %v75
    %v417 = vpop.f32.mrb[0].mxu0
    %v418 = vadd.f32 %v346, %v417
    %v419 = vpop.f32.mrb[0].mxu0
    %420 = vmatprep.mubr.f32.mxu0 0.0
    %421 = vmatmul.mubr.f32.gmra.mrb[0].mxu0 %v78
    %v422 = vpop.f32.mrb[0].mxu0
    %v423 = vadd.f32 %v346, %v422
    %v424 = vpop.f32.mrb[0].mxu0
    %425 = vmatprep.mubr.f32.mxu0 0.0
    %426 = vmatmul.mubr.f32.gmra.mrb[0].mxu0 %v81
    %v427 = vpop.f32.mrb[0].mxu0
    %v428 = vadd.f32 %v346, %v427
    %v429 = vpop.f32.mrb[0].mxu0
    %430 = vmatprep.mubr.f32.mxu0 0.0
    %431 = vmatmul.mubr.f32.gmra.mrb[0].mxu0 %v84
    %v432 = vpop.f32.mrb[0].mxu0
    %v433 = vadd.f32 %v346, %v432
    %v434 = vpop.f32.mrb[0].mxu0
    %435 = vmatprep.mubr.f32.mxu0 0.0
    %436 = vmatmul.mubr.f32.gmra.mrb[0].mxu0 %v87
    %v437 = vpop.f32.mrb[0].mxu0
    %v438 = vadd.f32 %v346, %v437
    %v439 = vpop.f32.mrb[0].mxu0
    %440 = vmatprep.mubr.f32.mxu0 0.0
    %441 = vmatmul.mubr.f32.gmra.mrb[0].mxu0 %v90
    %v442 = vpop.f32.mrb[0].mxu0
    %v443 = vadd.f32 %v346, %v442
    %v444 = vpop.f32.mrb[0].mxu0
    %445 = vmatprep.mubr.f32.mxu0 0.0
    %446 = vmatmul.mubr.f32.gmra.mrb[0].mxu0 %v93
    %v447 = vpop.f32.mrb[0].mxu0
    %v448 = vadd.f32 %v346, %v447
    %v449 = vpop.f32.mrb[0].mxu0
    %450 = vmatprep.mubr.f32.mxu0 0.0
    %451 = vmatmul.mubr.f32.gmra.mrb[0].mxu0 %v96
    %v452 = vpop.f32.mrb[0].mxu0
    %v453 = vadd.f32 %v346, %v452
    %v454 = vpop.f32.mrb[0].mxu0
    %455 = vdwg.mxu0
    %456 = vst.msk [vmem:[#allocation4] sm:$0xff] %vm207, %v418
    %457 = vst.msk [vmem:[#allocation4 + $0x8] sm:$0xff] %vm207, %v423
    %458 = vst.msk [vmem:[#allocation4 + $0x10] sm:$0xff] %vm207, %v428
    %459 = vst.msk [vmem:[#allocation4 + $0x18] sm:$0xff] %vm207, %v433
    %460 = vst.msk [vmem:[#allocation4 + $0x20] sm:$0xff] %vm207, %v438
    %461 = vst.msk [vmem:[#allocation4 + $0x28] sm:$0xff] %vm207, %v443
    %462 = vst.msk [vmem:[#allocation4 + $0x30] sm:$0xff] %vm207, %v448
    %463 = vst.msk [vmem:[#allocation4 + $0x38] sm:$0xff] %vm207, %v453
    %v464 = vld [vmem:[%s5] sm:$0xff]
    %v465 = vld [vmem:[%s5 + $0x8] sm:$0xff]
    %v466 = vld [vmem:[%s5 + $0x10] sm:$0xff]
    %v467 = vld [vmem:[%s5 + $0x18] sm:$0xff]
    %v468 = vld [vmem:[%s6] sm:$0xff]
    %v469 = vld [vmem:[%s6 + $0x8] sm:$0xff]
    %v470 = vld [vmem:[%s6 + $0x10] sm:$0xff]
    %v471 = vld [vmem:[%s6 + $0x18] sm:$0xff]
    %v472 = vld [vmem:[%s7] sm:$0xff]
    %v473 = vld [vmem:[%s7 + $0x8] sm:$0xff]
    %v474 = vld [vmem:[%s7 + $0x10] sm:$0xff]
    %v475 = vld [vmem:[%s7 + $0x18] sm:$0xff]
    %v476 = vld [vmem:[%s11] sm:$0x1]
    %v477 = vld [vmem:[#allocation5] sm:$0xff]
    %v479 = vsel %vm207, %v477, 0
    %481 = vmatprep.subr.mxu0 0.0
    %482 = vmatpush1.msra.mxu0 %v464
    %483 = vmatprep.subr.mxu0 0.0
    %484 = vmatpush1.msra.mxu0 %v465
    %485 = vmatprep.subr.mxu0 0.0
    %486 = vmatpush1.msra.mxu0 %v466
    %487 = vmatprep.subr.mxu0 0.0
    %488 = vmatpush1.msra.mxu0 %v467
    %489 = vmatprep.subr.mxu0 0.0
    %490 = vmatpush1.msra.mxu0 0.0
    %491 = vmatprep.subr.mxu0 0.0
    %492 = vmatpush1.msra.mxu0 0.0
    %493 = vmatprep.subr.mxu0 0.0
    %494 = vmatpush1.msra.mxu0 0.0
    %495 = vmatprep.subr.mxu0 0.0
    %496 = vmatpush1.msra.mxu0 0.0
    %497 = vmatprep.subr.mxu0 0.0
    %498 = vmatpush1.msra.mxu0 0.0
    %499 = vmatprep.subr.mxu0 0.0
    %500 = vmatpush1.msra.mxu0 0.0
    %501 = vmatprep.subr.mxu0 0.0
    %502 = vmatpush1.msra.mxu0 0.0
    %503 = vmatprep.subr.mxu0 0.0
    %504 = vmatpush1.msra.mxu0 0.0
    %505 = vmatprep.subr.mxu0 0.0
    %506 = vmatpush1.msra.mxu0 0.0
    %507 = vmatprep.subr.mxu0 0.0
    %508 = vmatpush1.msra.mxu0 0.0
    %509 = vmatprep.subr.mxu0 0.0
    %510 = vmatpush1.msra.mxu0 0.0
    %511 = vmatprep.subr.mxu0 0.0
    %512 = vmatpush1.msra.mxu0 0.0
    %513 = vmatprep.subr.mxu0 0.0
    %514 = vmatpush1.msra.mxu0 0.0
    %515 = vmatprep.subr.mxu0 0.0
    %516 = vmatpush1.msra.mxu0 0.0
    %517 = vmatprep.subr.mxu0 0.0
    %518 = vmatpush1.msra.mxu0 0.0
    %519 = vmatprep.subr.mxu0 0.0
    %520 = vmatpush1.msra.mxu0 0.0
    %521 = vmatprep.subr.mxu0 0.0
    %522 = vmatpush1.msra.mxu0 0.0
    %523 = vmatprep.subr.mxu0 0.0
    %524 = vmatpush1.msra.mxu0 0.0
    %525 = vmatprep.subr.mxu0 0.0
    %526 = vmatpush1.msra.mxu0 0.0
    %527 = vmatprep.subr.mxu0 0.0
    %528 = vmatpush1.msra.mxu0 0.0
    %529 = vmatprep.subr.mxu0 0.0
    %530 = vmatpush1.msra.mxu0 0.0
    %531 = vmatprep.subr.mxu0 0.0
    %532 = vmatpush1.msra.mxu0 0.0
    %533 = vmatprep.subr.mxu0 0.0
    %534 = vmatpush1.msra.mxu0 0.0
    %535 = vmatprep.subr.mxu0 0.0
    %536 = vmatpush1.msra.mxu0 0.0
    %537 = vmatprep.subr.mxu0 0.0
    %538 = vmatpush1.msra.mxu0 0.0
    %539 = vmatprep.subr.mxu0 0.0
    %540 = vmatpush1.msra.mxu0 0.0
    %541 = vmatprep.subr.mxu0 0.0
    %542 = vmatpush1.msra.mxu0 0.0
    %543 = vmatprep.subr.mxu0 0.0
    %544 = vmatpush1.msra.mxu0 0.0
    %545 = vmatprep.mubr.f32.mxu0 0.0
    %546 = vmatmul.mubr.f32.gmra.mrb[0].mxu0 %v479
    %v547 = vpop.f32.mrb[0].mxu0
    %v548 = vadd.f32 0.0, %v547
    %v549 = vpop.f32.mrb[0].mxu0
    %550 = vdwg.mxu0
    %551 = vmatprep.subr.mxu0 0.0
    %552 = vmatpush1.msra.mxu0 %v468
    %553 = vmatprep.subr.mxu0 0.0
    %554 = vmatpush1.msra.mxu0 %v469
    %555 = vmatprep.subr.mxu0 0.0
    %556 = vmatpush1.msra.mxu0 %v470
    %557 = vmatprep.subr.mxu0 0.0
    %558 = vmatpush1.msra.mxu0 %v471
    %559 = vmatprep.subr.mxu0 0.0
    %560 = vmatpush1.msra.mxu0 0.0
    %561 = vmatprep.subr.mxu0 0.0
    %562 = vmatpush1.msra.mxu0 0.0
    %563 = vmatprep.subr.mxu0 0.0
    %564 = vmatpush1.msra.mxu0 0.0
    %565 = vmatprep.subr.mxu0 0.0
    %566 = vmatpush1.msra.mxu0 0.0
    %567 = vmatprep.subr.mxu0 0.0
    %568 = vmatpush1.msra.mxu0 0.0
    %569 = vmatprep.subr.mxu0 0.0
    %570 = vmatpush1.msra.mxu0 0.0
    %571 = vmatprep.subr.mxu0 0.0
    %572 = vmatpush1.msra.mxu0 0.0
    %573 = vmatprep.subr.mxu0 0.0
    %574 = vmatpush1.msra.mxu0 0.0
    %575 = vmatprep.subr.mxu0 0.0
    %576 = vmatpush1.msra.mxu0 0.0
    %577 = vmatprep.subr.mxu0 0.0
    %578 = vmatpush1.msra.mxu0 0.0
    %579 = vmatprep.subr.mxu0 0.0
    %580 = vmatpush1.msra.mxu0 0.0
    %581 = vmatprep.subr.mxu0 0.0
    %582 = vmatpush1.msra.mxu0 0.0
    %583 = vmatprep.subr.mxu0 0.0
    %584 = vmatpush1.msra.mxu0 0.0
    %585 = vmatprep.subr.mxu0 0.0
    %586 = vmatpush1.msra.mxu0 0.0
    %587 = vmatprep.subr.mxu0 0.0
    %588 = vmatpush1.msra.mxu0 0.0
    %589 = vmatprep.subr.mxu0 0.0
    %590 = vmatpush1.msra.mxu0 0.0
    %591 = vmatprep.subr.mxu0 0.0
    %592 = vmatpush1.msra.mxu0 0.0
    %593 = vmatprep.subr.mxu0 0.0
    %594 = vmatpush1.msra.mxu0 0.0
    %595 = vmatprep.subr.mxu0 0.0
    %596 = vmatpush1.msra.mxu0 0.0
    %597 = vmatprep.subr.mxu0 0.0
    %598 = vmatpush1.msra.mxu0 0.0
    %599 = vmatprep.subr.mxu0 0.0
    %600 = vmatpush1.msra.mxu0 0.0
    %601 = vmatprep.subr.mxu0 0.0
    %602 = vmatpush1.msra.mxu0 0.0
    %603 = vmatprep.subr.mxu0 0.0
    %604 = vmatpush1.msra.mxu0 0.0
    %605 = vmatprep.subr.mxu0 0.0
    %606 = vmatpush1.msra.mxu0 0.0
    %607 = vmatprep.subr.mxu0 0.0
    %608 = vmatpush1.msra.mxu0 0.0
    %609 = vmatprep.subr.mxu0 0.0
    %610 = vmatpush1.msra.mxu0 0.0
    %611 = vmatprep.subr.mxu0 0.0
    %612 = vmatpush1.msra.mxu0 0.0
    %613 = vmatprep.subr.mxu0 0.0
    %614 = vmatpush1.msra.mxu0 0.0
    %615 = vmatprep.mubr.f32.mxu0 0.0
    %616 = vmatmul.mubr.f32.gmra.mrb[0].mxu0 %v479
    %v617 = vpop.f32.mrb[0].mxu0
    %v618 = vadd.f32 0.0, %v617
    %v619 = vpop.f32.mrb[0].mxu0
    %620 = vdwg.mxu0
    %v622 = vlaneseq
    %v623 = vshrl.u32 %v622, 7
    %v624 = vsub.s32 0, %v623
    %v625 = vrot.slane %v476, %v624
    %627 = vmatprep.subr.mxu0 0.0
    %628 = vmatpush1.msra.mxu0 %v472
    %629 = vmatprep.subr.mxu0 0.0
    %630 = vmatpush1.msra.mxu0 %v473
    %631 = vmatprep.subr.mxu0 0.0
    %632 = vmatpush1.msra.mxu0 %v474
    %633 = vmatprep.subr.mxu0 0.0
    %634 = vmatpush1.msra.mxu0 %v475
    %635 = vmatprep.subr.mxu0 0.0
    %636 = vmatpush1.msra.mxu0 0.0
    %637 = vmatprep.subr.mxu0 0.0
    %638 = vmatpush1.msra.mxu0 0.0
    %639 = vmatprep.subr.mxu0 0.0
    %640 = vmatpush1.msra.mxu0 0.0
    %641 = vmatprep.subr.mxu0 0.0
    %642 = vmatpush1.msra.mxu0 0.0
    %643 = vmatprep.subr.mxu0 0.0
    %644 = vmatpush1.msra.mxu0 0.0
    %645 = vmatprep.subr.mxu0 0.0
    %646 = vmatpush1.msra.mxu0 0.0
    %647 = vmatprep.subr.mxu0 0.0
    %648 = vmatpush1.msra.mxu0 0.0
    %649 = vmatprep.subr.mxu0 0.0
    %650 = vmatpush1.msra.mxu0 0.0
    %651 = vmatprep.subr.mxu0 0.0
    %652 = vmatpush1.msra.mxu0 0.0
    %653 = vmatprep.subr.mxu0 0.0
    %654 = vmatpush1.msra.mxu0 0.0
    %655 = vmatprep.subr.mxu0 0.0
    %656 = vmatpush1.msra.mxu0 0.0
    %657 = vmatprep.subr.mxu0 0.0
    %658 = vmatpush1.msra.mxu0 0.0
    %659 = vmatprep.subr.mxu0 0.0
    %660 = vmatpush1.msra.mxu0 0.0
    %661 = vmatprep.subr.mxu0 0.0
    %662 = vmatpush1.msra.mxu0 0.0
    %663 = vmatprep.subr.mxu0 0.0
    %664 = vmatpush1.msra.mxu0 0.0
    %665 = vmatprep.subr.mxu0 0.0
    %666 = vmatpush1.msra.mxu0 0.0
    %667 = vmatprep.subr.mxu0 0.0
    %668 = vmatpush1.msra.mxu0 0.0
    %669 = vmatprep.subr.mxu0 0.0
    %670 = vmatpush1.msra.mxu0 0.0
    %671 = vmatprep.subr.mxu0 0.0
    %672 = vmatpush1.msra.mxu0 0.0
    %673 = vmatprep.subr.mxu0 0.0
    %674 = vmatpush1.msra.mxu0 0.0
    %675 = vmatprep.subr.mxu0 0.0
    %676 = vmatpush1.msra.mxu0 0.0
    %677 = vmatprep.subr.mxu0 0.0
    %678 = vmatpush1.msra.mxu0 0.0
    %679 = vmatprep.subr.mxu0 0.0
    %680 = vmatpush1.msra.mxu0 0.0
    %681 = vmatprep.subr.mxu0 0.0
    %682 = vmatpush1.msra.mxu0 0.0
    %683 = vmatprep.subr.mxu0 0.0
    %684 = vmatpush1.msra.mxu0 0.0
    %685 = vmatprep.subr.mxu0 0.0
    %686 = vmatpush1.msra.mxu0 0.0
    %687 = vmatprep.subr.mxu0 0.0
    %688 = vmatpush1.msra.mxu0 0.0
    %689 = vmatprep.subr.mxu0 0.0
    %690 = vmatpush1.msra.mxu0 0.0
    %691 = vmatprep.mubr.f32.mxu0 0.0
    %692 = vmatmul.mubr.f32.gmra.mrb[0].mxu0 %v479
    %v693 = vpop.f32.mrb[0].mxu0
    %v694 = vadd.f32 %v625, %v693
    %v695 = vpop.f32.mrb[0].mxu0
    %696 = vdwg.mxu0
    %v697 = vld [vmem:[#allocation2] sm:$0xff]
    %v698 = vadd.f32 %v697, %v548
    %v699 = vxor.u32 %v698, 2147483648
    %v700 = vmul.f32 %v699, 1.442695
    %v701 = vpow.pop %v700
    %v702 = vadd.f32 %v701, 1.0
    %v703 = vrcp.pop %v702
    %v704 = vmul.f32 1.0, %v703
    %v705 = vld [vmem:[#allocation3] sm:$0xff]
    %v706 = vadd.f32 %v705, %v618
    %v707 = vxor.u32 %v706, 2147483648
    %v708 = vmul.f32 %v707, 1.442695
    %v709 = vpow.pop %v708
    %v710 = vadd.f32 %v709, 1.0
    %v711 = vrcp.pop %v710
    %v712 = vmul.f32 1.0, %v711
    %v713 = vld [vmem:[#allocation4] sm:$0xff]
    %v714 = vmul.f32 %v704, %v694
    %v715 = vadd.f32 %v713, %v714
    %v716 = vtanh.pop %v715
    %v717 = vsub.f32 1.0, %v712
    %v718 = vmul.f32 %v717, %v716
    %v719 = vmul.f32 %v712, %v477
    %v720 = vadd.f32 %v718, %v719
    %721 = vst.msk [vmem:[#allocation8] sm:$0xff] %vm207, %v720
    %v723 = vsel %vm207, %v720, 0
    %725 = vmatprep.subr.mxu0 0.0
    %726 = vmatpush1.msra.mxu0 %v464
    %727 = vmatprep.subr.mxu0 0.0
    %728 = vmatpush1.msra.mxu0 %v465
    %729 = vmatprep.subr.mxu0 0.0
    %730 = vmatpush1.msra.mxu0 %v466
    %731 = vmatprep.subr.mxu0 0.0
    %732 = vmatpush1.msra.mxu0 %v467
    %733 = vmatprep.subr.mxu0 0.0
    %734 = vmatpush1.msra.mxu0 0.0
    %735 = vmatprep.subr.mxu0 0.0
    %736 = vmatpush1.msra.mxu0 0.0
    %737 = vmatprep.subr.mxu0 0.0
    %738 = vmatpush1.msra.mxu0 0.0
    %739 = vmatprep.subr.mxu0 0.0
    %740 = vmatpush1.msra.mxu0 0.0
    %741 = vmatprep.subr.mxu0 0.0
    %742 = vmatpush1.msra.mxu0 0.0
    %743 = vmatprep.subr.mxu0 0.0
    %744 = vmatpush1.msra.mxu0 0.0
    %745 = vmatprep.subr.mxu0 0.0
    %746 = vmatpush1.msra.mxu0 0.0
    %747 = vmatprep.subr.mxu0 0.0
    %748 = vmatpush1.msra.mxu0 0.0
    %749 = vmatprep.subr.mxu0 0.0
    %750 = vmatpush1.msra.mxu0 0.0
    %751 = vmatprep.subr.mxu0 0.0
    %752 = vmatpush1.msra.mxu0 0.0
    %753 = vmatprep.subr.mxu0 0.0
    %754 = vmatpush1.msra.mxu0 0.0
    %755 = vmatprep.subr.mxu0 0.0
    %756 = vmatpush1.msra.mxu0 0.0
    %757 = vmatprep.subr.mxu0 0.0
    %758 = vmatpush1.msra.mxu0 0.0
    %759 = vmatprep.subr.mxu0 0.0
    %760 = vmatpush1.msra.mxu0 0.0
    %761 = vmatprep.subr.mxu0 0.0
    %762 = vmatpush1.msra.mxu0 0.0
    %763 = vmatprep.subr.mxu0 0.0
    %764 = vmatpush1.msra.mxu0 0.0
    %765 = vmatprep.subr.mxu0 0.0
    %766 = vmatpush1.msra.mxu0 0.0
    %767 = vmatprep.subr.mxu0 0.0
    %768 = vmatpush1.msra.mxu0 0.0
    %769 = vmatprep.subr.mxu0 0.0
    %770 = vmatpush1.msra.mxu0 0.0
    %771 = vmatprep.subr.mxu0 0.0
    %772 = vmatpush1.msra.mxu0 0.0
    %773 = vmatprep.subr.mxu0 0.0
    %774 = vmatpush1.msra.mxu0 0.0
    %775 = vmatprep.subr.mxu0 0.0
    %776 = vmatpush1.msra.mxu0 0.0
    %777 = vmatprep.subr.mxu0 0.0
    %778 = vmatpush1.msra.mxu0 0.0
    %779 = vmatprep.subr.mxu0 0.0
    %780 = vmatpush1.msra.mxu0 0.0
    %781 = vmatprep.subr.mxu0 0.0
    %782 = vmatpush1.msra.mxu0 0.0
    %783 = vmatprep.subr.mxu0 0.0
    %784 = vmatpush1.msra.mxu0 0.0
    %785 = vmatprep.subr.mxu0 0.0
    %786 = vmatpush1.msra.mxu0 0.0
    %787 = vmatprep.subr.mxu0 0.0
    %788 = vmatpush1.msra.mxu0 0.0
    %789 = vmatprep.mubr.f32.mxu0 0.0
    %790 = vmatmul.mubr.f32.gmra.mrb[0].mxu0 %v723
    %v791 = vpop.f32.mrb[0].mxu0
    %v792 = vadd.f32 0.0, %v791
    %v793 = vpop.f32.mrb[0].mxu0
    %794 = vdwg.mxu0
    %795 = vmatprep.subr.mxu0 0.0
    %796 = vmatpush1.msra.mxu0 %v468
    %797 = vmatprep.subr.mxu0 0.0
    %798 = vmatpush1.msra.mxu0 %v469
    %799 = vmatprep.subr.mxu0 0.0
    %800 = vmatpush1.msra.mxu0 %v470
    %801 = vmatprep.subr.mxu0 0.0
    %802 = vmatpush1.msra.mxu0 %v471
    %803 = vmatprep.subr.mxu0 0.0
    %804 = vmatpush1.msra.mxu0 0.0
    %805 = vmatprep.subr.mxu0 0.0
    %806 = vmatpush1.msra.mxu0 0.0
    %807 = vmatprep.subr.mxu0 0.0
    %808 = vmatpush1.msra.mxu0 0.0
    %809 = vmatprep.subr.mxu0 0.0
    %810 = vmatpush1.msra.mxu0 0.0
    %811 = vmatprep.subr.mxu0 0.0
    %812 = vmatpush1.msra.mxu0 0.0
    %813 = vmatprep.subr.mxu0 0.0
    %814 = vmatpush1.msra.mxu0 0.0
    %815 = vmatprep.subr.mxu0 0.0
    %816 = vmatpush1.msra.mxu0 0.0
    %817 = vmatprep.subr.mxu0 0.0
    %818 = vmatpush1.msra.mxu0 0.0
    %819 = vmatprep.subr.mxu0 0.0
    %820 = vmatpush1.msra.mxu0 0.0
    %821 = vmatprep.subr.mxu0 0.0
    %822 = vmatpush1.msra.mxu0 0.0
    %823 = vmatprep.subr.mxu0 0.0
    %824 = vmatpush1.msra.mxu0 0.0
    %825 = vmatprep.subr.mxu0 0.0
    %826 = vmatpush1.msra.mxu0 0.0
    %827 = vmatprep.subr.mxu0 0.0
    %828 = vmatpush1.msra.mxu0 0.0
    %829 = vmatprep.subr.mxu0 0.0
    %830 = vmatpush1.msra.mxu0 0.0
    %831 = vmatprep.subr.mxu0 0.0
    %832 = vmatpush1.msra.mxu0 0.0
    %833 = vmatprep.subr.mxu0 0.0
    %834 = vmatpush1.msra.mxu0 0.0
    %835 = vmatprep.subr.mxu0 0.0
    %836 = vmatpush1.msra.mxu0 0.0
    %837 = vmatprep.subr.mxu0 0.0
    %838 = vmatpush1.msra.mxu0 0.0
    %839 = vmatprep.subr.mxu0 0.0
    %840 = vmatpush1.msra.mxu0 0.0
    %841 = vmatprep.subr.mxu0 0.0
    %842 = vmatpush1.msra.mxu0 0.0
    %843 = vmatprep.subr.mxu0 0.0
    %844 = vmatpush1.msra.mxu0 0.0
    %845 = vmatprep.subr.mxu0 0.0
    %846 = vmatpush1.msra.mxu0 0.0
    %847 = vmatprep.subr.mxu0 0.0
    %848 = vmatpush1.msra.mxu0 0.0
    %849 = vmatprep.subr.mxu0 0.0
    %850 = vmatpush1.msra.mxu0 0.0
    %851 = vmatprep.subr.mxu0 0.0
    %852 = vmatpush1.msra.mxu0 0.0
    %853 = vmatprep.subr.mxu0 0.0
    %854 = vmatpush1.msra.mxu0 0.0
    %855 = vmatprep.subr.mxu0 0.0
    %856 = vmatpush1.msra.mxu0 0.0
    %857 = vmatprep.subr.mxu0 0.0
    %858 = vmatpush1.msra.mxu0 0.0
    %859 = vmatprep.mubr.f32.mxu0 0.0
    %860 = vmatmul.mubr.f32.gmra.mrb[0].mxu0 %v723
    %v861 = vpop.f32.mrb[0].mxu0
    %v862 = vadd.f32 0.0, %v861
    %v863 = vpop.f32.mrb[0].mxu0
    %864 = vdwg.mxu0
    %865 = vmatprep.subr.mxu0 0.0
    %866 = vmatpush1.msra.mxu0 %v472
    %867 = vmatprep.subr.mxu0 0.0
    %868 = vmatpush1.msra.mxu0 %v473
    %869 = vmatprep.subr.mxu0 0.0
    %870 = vmatpush1.msra.mxu0 %v474
    %871 = vmatprep.subr.mxu0 0.0
    %872 = vmatpush1.msra.mxu0 %v475
    %873 = vmatprep.subr.mxu0 0.0
    %874 = vmatpush1.msra.mxu0 0.0
    %875 = vmatprep.subr.mxu0 0.0
    %876 = vmatpush1.msra.mxu0 0.0
    %877 = vmatprep.subr.mxu0 0.0
    %878 = vmatpush1.msra.mxu0 0.0
    %879 = vmatprep.subr.mxu0 0.0
    %880 = vmatpush1.msra.mxu0 0.0
    %881 = vmatprep.subr.mxu0 0.0
    %882 = vmatpush1.msra.mxu0 0.0
    %883 = vmatprep.subr.mxu0 0.0
    %884 = vmatpush1.msra.mxu0 0.0
    %885 = vmatprep.subr.mxu0 0.0
    %886 = vmatpush1.msra.mxu0 0.0
    %887 = vmatprep.subr.mxu0 0.0
    %888 = vmatpush1.msra.mxu0 0.0
    %889 = vmatprep.subr.mxu0 0.0
    %890 = vmatpush1.msra.mxu0 0.0
    %891 = vmatprep.subr.mxu0 0.0
    %892 = vmatpush1.msra.mxu0 0.0
    %893 = vmatprep.subr.mxu0 0.0
    %894 = vmatpush1.msra.mxu0 0.0
    %895 = vmatprep.subr.mxu0 0.0
    %896 = vmatpush1.msra.mxu0 0.0
    %897 = vmatprep.subr.mxu0 0.0
    %898 = vmatpush1.msra.mxu0 0.0
    %899 = vmatprep.subr.mxu0 0.0
    %900 = vmatpush1.msra.mxu0 0.0
    %901 = vmatprep.subr.mxu0 0.0
    %902 = vmatpush1.msra.mxu0 0.0
    %903 = vmatprep.subr.mxu0 0.0
    %904 = vmatpush1.msra.mxu0 0.0
    %905 = vmatprep.subr.mxu0 0.0
    %906 = vmatpush1.msra.mxu0 0.0
    %907 = vmatprep.subr.mxu0 0.0
    %908 = vmatpush1.msra.mxu0 0.0
    %909 = vmatprep.subr.mxu0 0.0
    %910 = vmatpush1.msra.mxu0 0.0
    %911 = vmatprep.subr.mxu0 0.0
    %912 = vmatpush1.msra.mxu0 0.0
    %913 = vmatprep.subr.mxu0 0.0
    %914 = vmatpush1.msra.mxu0 0.0
    %915 = vmatprep.subr.mxu0 0.0
    %916 = vmatpush1.msra.mxu0 0.0
    %917 = vmatprep.subr.mxu0 0.0
    %918 = vmatpush1.msra.mxu0 0.0
    %919 = vmatprep.subr.mxu0 0.0
    %920 = vmatpush1.msra.mxu0 0.0
    %921 = vmatprep.subr.mxu0 0.0
    %922 = vmatpush1.msra.mxu0 0.0
    %923 = vmatprep.subr.mxu0 0.0
    %924 = vmatpush1.msra.mxu0 0.0
    %925 = vmatprep.subr.mxu0 0.0
    %926 = vmatpush1.msra.mxu0 0.0
    %927 = vmatprep.subr.mxu0 0.0
    %928 = vmatpush1.msra.mxu0 0.0
    %929 = vmatprep.mubr.f32.mxu0 0.0
    %930 = vmatmul.mubr.f32.gmra.mrb[0].mxu0 %v723
    %v931 = vpop.f32.mrb[0].mxu0
    %v932 = vadd.f32 %v625, %v931
    %v933 = vpop.f32.mrb[0].mxu0
    %934 = vdwg.mxu0
    %s935 = scalar_lea.vmem [#allocation2], 8
    %v936 = vld [vmem:[%s935] sm:$0xff]
    %v937 = vadd.f32 %v936, %v792
    %v938 = vxor.u32 %v937, 2147483648
    %v939 = vmul.f32 %v938, 1.442695
    %v940 = vpow.pop %v939
    %v941 = vadd.f32 %v940, 1.0
    %v942 = vrcp.pop %v941
    %v943 = vmul.f32 1.0, %v942
    %s944 = scalar_lea.vmem [#allocation3], 8
    %v945 = vld [vmem:[%s944] sm:$0xff]
    %v946 = vadd.f32 %v945, %v862
    %v947 = vxor.u32 %v946, 2147483648
    %v948 = vmul.f32 %v947, 1.442695
    %v949 = vpow.pop %v948
    %v950 = vadd.f32 %v949, 1.0
    %v951 = vrcp.pop %v950
    %v952 = vmul.f32 1.0, %v951
    %s953 = scalar_lea.vmem [#allocation4], 8
    %v954 = vld [vmem:[%s953] sm:$0xff]
    %v955 = vmul.f32 %v943, %v932
    %v956 = vadd.f32 %v954, %v955
    %v957 = vtanh.pop %v956
    %v958 = vsub.f32 1.0, %v952
    %v959 = vmul.f32 %v958, %v957
    %v960 = vmul.f32 %v952, %v720
    %v961 = vadd.f32 %v959, %v960
    %s962 = scalar_lea.vmem [#allocation8], 8
    %963 = vst.msk [vmem:[%s962] sm:$0xff] %vm207, %v961
    %v965 = vsel %vm207, %v961, 0
    %967 = vmatprep.subr.mxu0 0.0
    %968 = vmatpush1.msra.mxu0 %v464
    %969 = vmatprep.subr.mxu0 0.0
    %970 = vmatpush1.msra.mxu0 %v465
    %971 = vmatprep.subr.mxu0 0.0
    %972 = vmatpush1.msra.mxu0 %v466
    %973 = vmatprep.subr.mxu0 0.0
    %974 = vmatpush1.msra.mxu0 %v467
    %975 = vmatprep.subr.mxu0 0.0
    %976 = vmatpush1.msra.mxu0 0.0
    %977 = vmatprep.subr.mxu0 0.0
    %978 = vmatpush1.msra.mxu0 0.0
    %979 = vmatprep.subr.mxu0 0.0
    %980 = vmatpush1.msra.mxu0 0.0
    %981 = vmatprep.subr.mxu0 0.0
    %982 = vmatpush1.msra.mxu0 0.0
    %983 = vmatprep.subr.mxu0 0.0
    %984 = vmatpush1.msra.mxu0 0.0
    %985 = vmatprep.subr.mxu0 0.0
    %986 = vmatpush1.msra.mxu0 0.0
    %987 = vmatprep.subr.mxu0 0.0
    %988 = vmatpush1.msra.mxu0 0.0
    %989 = vmatprep.subr.mxu0 0.0
    %990 = vmatpush1.msra.mxu0 0.0
    %991 = vmatprep.subr.mxu0 0.0
    %992 = vmatpush1.msra.mxu0 0.0
    %993 = vmatprep.subr.mxu0 0.0
    %994 = vmatpush1.msra.mxu0 0.0
    %995 = vmatprep.subr.mxu0 0.0
    %996 = vmatpush1.msra.mxu0 0.0
    %997 = vmatprep.subr.mxu0 0.0
    %998 = vmatpush1.msra.mxu0 0.0
    %999 = vmatprep.subr.mxu0 0.0
    %1000 = vmatpush1.msra.mxu0 0.0
    %1001 = vmatprep.subr.mxu0 0.0
    %1002 = vmatpush1.msra.mxu0 0.0
    %1003 = vmatprep.subr.mxu0 0.0
    %1004 = vmatpush1.msra.mxu0 0.0
    %1005 = vmatprep.subr.mxu0 0.0
    %1006 = vmatpush1.msra.mxu0 0.0
    %1007 = vmatprep.subr.mxu0 0.0
    %1008 = vmatpush1.msra.mxu0 0.0
    %1009 = vmatprep.subr.mxu0 0.0
    %1010 = vmatpush1.msra.mxu0 0.0
    %1011 = vmatprep.subr.mxu0 0.0
    %1012 = vmatpush1.msra.mxu0 0.0
    %1013 = vmatprep.subr.mxu0 0.0
    %1014 = vmatpush1.msra.mxu0 0.0
    %1015 = vmatprep.subr.mxu0 0.0
    %1016 = vmatpush1.msra.mxu0 0.0
    %1017 = vmatprep.subr.mxu0 0.0
    %1018 = vmatpush1.msra.mxu0 0.0
    %1019 = vmatprep.subr.mxu0 0.0
    %1020 = vmatpush1.msra.mxu0 0.0
    %1021 = vmatprep.subr.mxu0 0.0
    %1022 = vmatpush1.msra.mxu0 0.0
    %1023 = vmatprep.subr.mxu0 0.0
    %1024 = vmatpush1.msra.mxu0 0.0
    %1025 = vmatprep.subr.mxu0 0.0
    %1026 = vmatpush1.msra.mxu0 0.0
    %1027 = vmatprep.subr.mxu0 0.0
    %1028 = vmatpush1.msra.mxu0 0.0
    %1029 = vmatprep.subr.mxu0 0.0
    %1030 = vmatpush1.msra.mxu0 0.0
    %1031 = vmatprep.mubr.f32.mxu0 0.0
    %1032 = vmatmul.mubr.f32.gmra.mrb[0].mxu0 %v965
    %v1033 = vpop.f32.mrb[0].mxu0
    %v1034 = vadd.f32 0.0, %v1033
    %v1035 = vpop.f32.mrb[0].mxu0
    %1036 = vdwg.mxu0
    %1037 = vmatprep.subr.mxu0 0.0
    %1038 = vmatpush1.msra.mxu0 %v468
    %1039 = vmatprep.subr.mxu0 0.0
    %1040 = vmatpush1.msra.mxu0 %v469
    %1041 = vmatprep.subr.mxu0 0.0
    %1042 = vmatpush1.msra.mxu0 %v470
    %1043 = vmatprep.subr.mxu0 0.0
    %1044 = vmatpush1.msra.mxu0 %v471
    %1045 = vmatprep.subr.mxu0 0.0
    %1046 = vmatpush1.msra.mxu0 0.0
    %1047 = vmatprep.subr.mxu0 0.0
    %1048 = vmatpush1.msra.mxu0 0.0
    %1049 = vmatprep.subr.mxu0 0.0
    %1050 = vmatpush1.msra.mxu0 0.0
    %1051 = vmatprep.subr.mxu0 0.0
    %1052 = vmatpush1.msra.mxu0 0.0
    %1053 = vmatprep.subr.mxu0 0.0
    %1054 = vmatpush1.msra.mxu0 0.0
    %1055 = vmatprep.subr.mxu0 0.0
    %1056 = vmatpush1.msra.mxu0 0.0
    %1057 = vmatprep.subr.mxu0 0.0
    %1058 = vmatpush1.msra.mxu0 0.0
    %1059 = vmatprep.subr.mxu0 0.0
    %1060 = vmatpush1.msra.mxu0 0.0
    %1061 = vmatprep.subr.mxu0 0.0
    %1062 = vmatpush1.msra.mxu0 0.0
    %1063 = vmatprep.subr.mxu0 0.0
    %1064 = vmatpush1.msra.mxu0 0.0
    %1065 = vmatprep.subr.mxu0 0.0
    %1066 = vmatpush1.msra.mxu0 0.0
    %1067 = vmatprep.subr.mxu0 0.0
    %1068 = vmatpush1.msra.mxu0 0.0
    %1069 = vmatprep.subr.mxu0 0.0
    %1070 = vmatpush1.msra.mxu0 0.0
    %1071 = vmatprep.subr.mxu0 0.0
    %1072 = vmatpush1.msra.mxu0 0.0
    %1073 = vmatprep.subr.mxu0 0.0
    %1074 = vmatpush1.msra.mxu0 0.0
    %1075 = vmatprep.subr.mxu0 0.0
    %1076 = vmatpush1.msra.mxu0 0.0
    %1077 = vmatprep.subr.mxu0 0.0
    %1078 = vmatpush1.msra.mxu0 0.0
    %1079 = vmatprep.subr.mxu0 0.0
    %1080 = vmatpush1.msra.mxu0 0.0
    %1081 = vmatprep.subr.mxu0 0.0
    %1082 = vmatpush1.msra.mxu0 0.0
    %1083 = vmatprep.subr.mxu0 0.0
    %1084 = vmatpush1.msra.mxu0 0.0
    %1085 = vmatprep.subr.mxu0 0.0
    %1086 = vmatpush1.msra.mxu0 0.0
    %1087 = vmatprep.subr.mxu0 0.0
    %1088 = vmatpush1.msra.mxu0 0.0
    %1089 = vmatprep.subr.mxu0 0.0
    %1090 = vmatpush1.msra.mxu0 0.0
    %1091 = vmatprep.subr.mxu0 0.0
    %1092 = vmatpush1.msra.mxu0 0.0
    %1093 = vmatprep.subr.mxu0 0.0
    %1094 = vmatpush1.msra.mxu0 0.0
    %1095 = vmatprep.subr.mxu0 0.0
    %1096 = vmatpush1.msra.mxu0 0.0
    %1097 = vmatprep.subr.mxu0 0.0
    %1098 = vmatpush1.msra.mxu0 0.0
    %1099 = vmatprep.subr.mxu0 0.0
    %1100 = vmatpush1.msra.mxu0 0.0
    %1101 = vmatprep.mubr.f32.mxu0 0.0
    %1102 = vmatmul.mubr.f32.gmra.mrb[0].mxu0 %v965
    %v1103 = vpop.f32.mrb[0].mxu0
    %v1104 = vadd.f32 0.0, %v1103
    %v1105 = vpop.f32.mrb[0].mxu0
    %1106 = vdwg.mxu0
    %1107 = vmatprep.subr.mxu0 0.0
    %1108 = vmatpush1.msra.mxu0 %v472
    %1109 = vmatprep.subr.mxu0 0.0
    %1110 = vmatpush1.msra.mxu0 %v473
    %1111 = vmatprep.subr.mxu0 0.0
    %1112 = vmatpush1.msra.mxu0 %v474
    %1113 = vmatprep.subr.mxu0 0.0
    %1114 = vmatpush1.msra.mxu0 %v475
    %1115 = vmatprep.subr.mxu0 0.0
    %1116 = vmatpush1.msra.mxu0 0.0
    %1117 = vmatprep.subr.mxu0 0.0
    %1118 = vmatpush1.msra.mxu0 0.0
    %1119 = vmatprep.subr.mxu0 0.0
    %1120 = vmatpush1.msra.mxu0 0.0
    %1121 = vmatprep.subr.mxu0 0.0
    %1122 = vmatpush1.msra.mxu0 0.0
    %1123 = vmatprep.subr.mxu0 0.0
    %1124 = vmatpush1.msra.mxu0 0.0
    %1125 = vmatprep.subr.mxu0 0.0
    %1126 = vmatpush1.msra.mxu0 0.0
    %1127 = vmatprep.subr.mxu0 0.0
    %1128 = vmatpush1.msra.mxu0 0.0
    %1129 = vmatprep.subr.mxu0 0.0
    %1130 = vmatpush1.msra.mxu0 0.0
    %1131 = vmatprep.subr.mxu0 0.0
    %1132 = vmatpush1.msra.mxu0 0.0
    %1133 = vmatprep.subr.mxu0 0.0
    %1134 = vmatpush1.msra.mxu0 0.0
    %1135 = vmatprep.subr.mxu0 0.0
    %1136 = vmatpush1.msra.mxu0 0.0
    %1137 = vmatprep.subr.mxu0 0.0
    %1138 = vmatpush1.msra.mxu0 0.0
    %1139 = vmatprep.subr.mxu0 0.0
    %1140 = vmatpush1.msra.mxu0 0.0
    %1141 = vmatprep.subr.mxu0 0.0
    %1142 = vmatpush1.msra.mxu0 0.0
    %1143 = vmatprep.subr.mxu0 0.0
    %1144 = vmatpush1.msra.mxu0 0.0
    %1145 = vmatprep.subr.mxu0 0.0
    %1146 = vmatpush1.msra.mxu0 0.0
    %1147 = vmatprep.subr.mxu0 0.0
    %1148 = vmatpush1.msra.mxu0 0.0
    %1149 = vmatprep.subr.mxu0 0.0
    %1150 = vmatpush1.msra.mxu0 0.0
    %1151 = vmatprep.subr.mxu0 0.0
    %1152 = vmatpush1.msra.mxu0 0.0
    %1153 = vmatprep.subr.mxu0 0.0
    %1154 = vmatpush1.msra.mxu0 0.0
    %1155 = vmatprep.subr.mxu0 0.0
    %1156 = vmatpush1.msra.mxu0 0.0
    %1157 = vmatprep.subr.mxu0 0.0
    %1158 = vmatpush1.msra.mxu0 0.0
    %1159 = vmatprep.subr.mxu0 0.0
    %1160 = vmatpush1.msra.mxu0 0.0
    %1161 = vmatprep.subr.mxu0 0.0
    %1162 = vmatpush1.msra.mxu0 0.0
    %1163 = vmatprep.subr.mxu0 0.0
    %1164 = vmatpush1.msra.mxu0 0.0
    %1165 = vmatprep.subr.mxu0 0.0
    %1166 = vmatpush1.msra.mxu0 0.0
    %1167 = vmatprep.subr.mxu0 0.0
    %1168 = vmatpush1.msra.mxu0 0.0
    %1169 = vmatprep.subr.mxu0 0.0
    %1170 = vmatpush1.msra.mxu0 0.0
    %1171 = vmatprep.mubr.f32.mxu0 0.0
    %1172 = vmatmul.mubr.f32.gmra.mrb[0].mxu0 %v965
    %v1173 = vpop.f32.mrb[0].mxu0
    %v1174 = vadd.f32 %v625, %v1173
    %v1175 = vpop.f32.mrb[0].mxu0
    %1176 = vdwg.mxu0
    %s1177 = scalar_lea.vmem [#allocation2], 16
    %v1178 = vld [vmem:[%s1177] sm:$0xff]
    %v1179 = vadd.f32 %v1178, %v1034
    %v1180 = vxor.u32 %v1179, 2147483648
    %v1181 = vmul.f32 %v1180, 1.442695
    %v1182 = vpow.pop %v1181
    %v1183 = vadd.f32 %v1182, 1.0
    %v1184 = vrcp.pop %v1183
    %v1185 = vmul.f32 1.0, %v1184
    %s1186 = scalar_lea.vmem [#allocation3], 16
    %v1187 = vld [vmem:[%s1186] sm:$0xff]
    %v1188 = vadd.f32 %v1187, %v1104
    %v1189 = vxor.u32 %v1188, 2147483648
    %v1190 = vmul.f32 %v1189, 1.442695
    %v1191 = vpow.pop %v1190
    %v1192 = vadd.f32 %v1191, 1.0
    %v1193 = vrcp.pop %v1192
    %v1194 = vmul.f32 1.0, %v1193
    %s1195 = scalar_lea.vmem [#allocation4], 16
    %v1196 = vld [vmem:[%s1195] sm:$0xff]
    %v1197 = vmul.f32 %v1185, %v1174
    %v1198 = vadd.f32 %v1196, %v1197
    %v1199 = vtanh.pop %v1198
    %v1200 = vsub.f32 1.0, %v1194
    %v1201 = vmul.f32 %v1200, %v1199
    %v1202 = vmul.f32 %v1194, %v961
    %v1203 = vadd.f32 %v1201, %v1202
    %s1204 = scalar_lea.vmem [#allocation8], 16
    %1205 = vst.msk [vmem:[%s1204] sm:$0xff] %vm207, %v1203
    %v1207 = vsel %vm207, %v1203, 0
    %1209 = vmatprep.subr.mxu0 0.0
    %1210 = vmatpush1.msra.mxu0 %v464
    %1211 = vmatprep.subr.mxu0 0.0
    %1212 = vmatpush1.msra.mxu0 %v465
    %1213 = vmatprep.subr.mxu0 0.0
    %1214 = vmatpush1.msra.mxu0 %v466
    %1215 = vmatprep.subr.mxu0 0.0
    %1216 = vmatpush1.msra.mxu0 %v467
    %1217 = vmatprep.subr.mxu0 0.0
    %1218 = vmatpush1.msra.mxu0 0.0
    %1219 = vmatprep.subr.mxu0 0.0
    %1220 = vmatpush1.msra.mxu0 0.0
    %1221 = vmatprep.subr.mxu0 0.0
    %1222 = vmatpush1.msra.mxu0 0.0
    %1223 = vmatprep.subr.mxu0 0.0
    %1224 = vmatpush1.msra.mxu0 0.0
    %1225 = vmatprep.subr.mxu0 0.0
    %1226 = vmatpush1.msra.mxu0 0.0
    %1227 = vmatprep.subr.mxu0 0.0
    %1228 = vmatpush1.msra.mxu0 0.0
    %1229 = vmatprep.subr.mxu0 0.0
    %1230 = vmatpush1.msra.mxu0 0.0
    %1231 = vmatprep.subr.mxu0 0.0
    %1232 = vmatpush1.msra.mxu0 0.0
    %1233 = vmatprep.subr.mxu0 0.0
    %1234 = vmatpush1.msra.mxu0 0.0
    %1235 = vmatprep.subr.mxu0 0.0
    %1236 = vmatpush1.msra.mxu0 0.0
    %1237 = vmatprep.subr.mxu0 0.0
    %1238 = vmatpush1.msra.mxu0 0.0
    %1239 = vmatprep.subr.mxu0 0.0
    %1240 = vmatpush1.msra.mxu0 0.0
    %1241 = vmatprep.subr.mxu0 0.0
    %1242 = vmatpush1.msra.mxu0 0.0
    %1243 = vmatprep.subr.mxu0 0.0
    %1244 = vmatpush1.msra.mxu0 0.0
    %1245 = vmatprep.subr.mxu0 0.0
    %1246 = vmatpush1.msra.mxu0 0.0
    %1247 = vmatprep.subr.mxu0 0.0
    %1248 = vmatpush1.msra.mxu0 0.0
    %1249 = vmatprep.subr.mxu0 0.0
    %1250 = vmatpush1.msra.mxu0 0.0
    %1251 = vmatprep.subr.mxu0 0.0
    %1252 = vmatpush1.msra.mxu0 0.0
    %1253 = vmatprep.subr.mxu0 0.0
    %1254 = vmatpush1.msra.mxu0 0.0
    %1255 = vmatprep.subr.mxu0 0.0
    %1256 = vmatpush1.msra.mxu0 0.0
    %1257 = vmatprep.subr.mxu0 0.0
    %1258 = vmatpush1.msra.mxu0 0.0
    %1259 = vmatprep.subr.mxu0 0.0
    %1260 = vmatpush1.msra.mxu0 0.0
    %1261 = vmatprep.subr.mxu0 0.0
    %1262 = vmatpush1.msra.mxu0 0.0
    %1263 = vmatprep.subr.mxu0 0.0
    %1264 = vmatpush1.msra.mxu0 0.0
    %1265 = vmatprep.subr.mxu0 0.0
    %1266 = vmatpush1.msra.mxu0 0.0
    %1267 = vmatprep.subr.mxu0 0.0
    %1268 = vmatpush1.msra.mxu0 0.0
    %1269 = vmatprep.subr.mxu0 0.0
    %1270 = vmatpush1.msra.mxu0 0.0
    %1271 = vmatprep.subr.mxu0 0.0
    %1272 = vmatpush1.msra.mxu0 0.0
    %1273 = vmatprep.mubr.f32.mxu0 0.0
    %1274 = vmatmul.mubr.f32.gmra.mrb[0].mxu0 %v1207
    %v1275 = vpop.f32.mrb[0].mxu0
    %v1276 = vadd.f32 0.0, %v1275
    %v1277 = vpop.f32.mrb[0].mxu0
    %1278 = vdwg.mxu0
    %1279 = vmatprep.subr.mxu0 0.0
    %1280 = vmatpush1.msra.mxu0 %v468
    %1281 = vmatprep.subr.mxu0 0.0
    %1282 = vmatpush1.msra.mxu0 %v469
    %1283 = vmatprep.subr.mxu0 0.0
    %1284 = vmatpush1.msra.mxu0 %v470
    %1285 = vmatprep.subr.mxu0 0.0
    %1286 = vmatpush1.msra.mxu0 %v471
    %1287 = vmatprep.subr.mxu0 0.0
    %1288 = vmatpush1.msra.mxu0 0.0
    %1289 = vmatprep.subr.mxu0 0.0
    %1290 = vmatpush1.msra.mxu0 0.0
    %1291 = vmatprep.subr.mxu0 0.0
    %1292 = vmatpush1.msra.mxu0 0.0
    %1293 = vmatprep.subr.mxu0 0.0
    %1294 = vmatpush1.msra.mxu0 0.0
    %1295 = vmatprep.subr.mxu0 0.0
    %1296 = vmatpush1.msra.mxu0 0.0
    %1297 = vmatprep.subr.mxu0 0.0
    %1298 = vmatpush1.msra.mxu0 0.0
    %1299 = vmatprep.subr.mxu0 0.0
    %1300 = vmatpush1.msra.mxu0 0.0
    %1301 = vmatprep.subr.mxu0 0.0
    %1302 = vmatpush1.msra.mxu0 0.0
    %1303 = vmatprep.subr.mxu0 0.0
    %1304 = vmatpush1.msra.mxu0 0.0
    %1305 = vmatprep.subr.mxu0 0.0
    %1306 = vmatpush1.msra.mxu0 0.0
    %1307 = vmatprep.subr.mxu0 0.0
    %1308 = vmatpush1.msra.mxu0 0.0
    %1309 = vmatprep.subr.mxu0 0.0
    %1310 = vmatpush1.msra.mxu0 0.0
    %1311 = vmatprep.subr.mxu0 0.0
    %1312 = vmatpush1.msra.mxu0 0.0
    %1313 = vmatprep.subr.mxu0 0.0
    %1314 = vmatpush1.msra.mxu0 0.0
    %1315 = vmatprep.subr.mxu0 0.0
    %1316 = vmatpush1.msra.mxu0 0.0
    %1317 = vmatprep.subr.mxu0 0.0
    %1318 = vmatpush1.msra.mxu0 0.0
    %1319 = vmatprep.subr.mxu0 0.0
    %1320 = vmatpush1.msra.mxu0 0.0
    %1321 = vmatprep.subr.mxu0 0.0
    %1322 = vmatpush1.msra.mxu0 0.0
    %1323 = vmatprep.subr.mxu0 0.0
    %1324 = vmatpush1.msra.mxu0 0.0
    %1325 = vmatprep.subr.mxu0 0.0
    %1326 = vmatpush1.msra.mxu0 0.0
    %1327 = vmatprep.subr.mxu0 0.0
    %1328 = vmatpush1.msra.mxu0 0.0
    %1329 = vmatprep.subr.mxu0 0.0
    %1330 = vmatpush1.msra.mxu0 0.0
    %1331 = vmatprep.subr.mxu0 0.0
    %1332 = vmatpush1.msra.mxu0 0.0
    %1333 = vmatprep.subr.mxu0 0.0
    %1334 = vmatpush1.msra.mxu0 0.0
    %1335 = vmatprep.subr.mxu0 0.0
    %1336 = vmatpush1.msra.mxu0 0.0
    %1337 = vmatprep.subr.mxu0 0.0
    %1338 = vmatpush1.msra.mxu0 0.0
    %1339 = vmatprep.subr.mxu0 0.0
    %1340 = vmatpush1.msra.mxu0 0.0
    %1341 = vmatprep.subr.mxu0 0.0
    %1342 = vmatpush1.msra.mxu0 0.0
    %1343 = vmatprep.mubr.f32.mxu0 0.0
    %1344 = vmatmul.mubr.f32.gmra.mrb[0].mxu0 %v1207
    %v1345 = vpop.f32.mrb[0].mxu0
    %v1346 = vadd.f32 0.0, %v1345
    %v1347 = vpop.f32.mrb[0].mxu0
    %1348 = vdwg.mxu0
    %1349 = vmatprep.subr.mxu0 0.0
    %1350 = vmatpush1.msra.mxu0 %v472
    %1351 = vmatprep.subr.mxu0 0.0
    %1352 = vmatpush1.msra.mxu0 %v473
    %1353 = vmatprep.subr.mxu0 0.0
    %1354 = vmatpush1.msra.mxu0 %v474
    %1355 = vmatprep.subr.mxu0 0.0
    %1356 = vmatpush1.msra.mxu0 %v475
    %1357 = vmatprep.subr.mxu0 0.0
    %1358 = vmatpush1.msra.mxu0 0.0
    %1359 = vmatprep.subr.mxu0 0.0
    %1360 = vmatpush1.msra.mxu0 0.0
    %1361 = vmatprep.subr.mxu0 0.0
    %1362 = vmatpush1.msra.mxu0 0.0
    %1363 = vmatprep.subr.mxu0 0.0
    %1364 = vmatpush1.msra.mxu0 0.0
    %1365 = vmatprep.subr.mxu0 0.0
    %1366 = vmatpush1.msra.mxu0 0.0
    %1367 = vmatprep.subr.mxu0 0.0
    %1368 = vmatpush1.msra.mxu0 0.0
    %1369 = vmatprep.subr.mxu0 0.0
    %1370 = vmatpush1.msra.mxu0 0.0
    %1371 = vmatprep.subr.mxu0 0.0
    %1372 = vmatpush1.msra.mxu0 0.0
    %1373 = vmatprep.subr.mxu0 0.0
    %1374 = vmatpush1.msra.mxu0 0.0
    %1375 = vmatprep.subr.mxu0 0.0
    %1376 = vmatpush1.msra.mxu0 0.0
    %1377 = vmatprep.subr.mxu0 0.0
    %1378 = vmatpush1.msra.mxu0 0.0
    %1379 = vmatprep.subr.mxu0 0.0
    %1380 = vmatpush1.msra.mxu0 0.0
    %1381 = vmatprep.subr.mxu0 0.0
    %1382 = vmatpush1.msra.mxu0 0.0
    %1383 = vmatprep.subr.mxu0 0.0
    %1384 = vmatpush1.msra.mxu0 0.0
    %1385 = vmatprep.subr.mxu0 0.0
    %1386 = vmatpush1.msra.mxu0 0.0
    %1387 = vmatprep.subr.mxu0 0.0
    %1388 = vmatpush1.msra.mxu0 0.0
    %1389 = vmatprep.subr.mxu0 0.0
    %1390 = vmatpush1.msra.mxu0 0.0
    %1391 = vmatprep.subr.mxu0 0.0
    %1392 = vmatpush1.msra.mxu0 0.0
    %1393 = vmatprep.subr.mxu0 0.0
    %1394 = vmatpush1.msra.mxu0 0.0
    %1395 = vmatprep.subr.mxu0 0.0
    %1396 = vmatpush1.msra.mxu0 0.0
    %1397 = vmatprep.subr.mxu0 0.0
    %1398 = vmatpush1.msra.mxu0 0.0
    %1399 = vmatprep.subr.mxu0 0.0
    %1400 = vmatpush1.msra.mxu0 0.0
    %1401 = vmatprep.subr.mxu0 0.0
    %1402 = vmatpush1.msra.mxu0 0.0
    %1403 = vmatprep.subr.mxu0 0.0
    %1404 = vmatpush1.msra.mxu0 0.0
    %1405 = vmatprep.subr.mxu0 0.0
    %1406 = vmatpush1.msra.mxu0 0.0
    %1407 = vmatprep.subr.mxu0 0.0
    %1408 = vmatpush1.msra.mxu0 0.0
    %1409 = vmatprep.subr.mxu0 0.0
    %1410 = vmatpush1.msra.mxu0 0.0
    %1411 = vmatprep.subr.mxu0 0.0
    %1412 = vmatpush1.msra.mxu0 0.0
    %1413 = vmatprep.mubr.f32.mxu0 0.0
    %1414 = vmatmul.mubr.f32.gmra.mrb[0].mxu0 %v1207
    %v1415 = vpop.f32.mrb[0].mxu0
    %v1416 = vadd.f32 %v625, %v1415
    %v1417 = vpop.f32.mrb[0].mxu0
    %1418 = vdwg.mxu0
    %s1419 = scalar_lea.vmem [#allocation2], 24
    %v1420 = vld [vmem:[%s1419] sm:$0xff]
    %v1421 = vadd.f32 %v1420, %v1276
    %v1422 = vxor.u32 %v1421, 2147483648
    %v1423 = vmul.f32 %v1422, 1.442695
    %v1424 = vpow.pop %v1423
    %v1425 = vadd.f32 %v1424, 1.0
    %v1426 = vrcp.pop %v1425
    %v1427 = vmul.f32 1.0, %v1426
    %s1428 = scalar_lea.vmem [#allocation3], 24
    %v1429 = vld [vmem:[%s1428] sm:$0xff]
    %v1430 = vadd.f32 %v1429, %v1346
    %v1431 = vxor.u32 %v1430, 2147483648
    %v1432 = vmul.f32 %v1431, 1.442695
    %v1433 = vpow.pop %v1432
    %v1434 = vadd.f32 %v1433, 1.0
    %v1435 = vrcp.pop %v1434
    %v1436 = vmul.f32 1.0, %v1435
    %s1437 = scalar_lea.vmem [#allocation4], 24
    %v1438 = vld [vmem:[%s1437] sm:$0xff]
    %v1439 = vmul.f32 %v1427, %v1416
    %v1440 = vadd.f32 %v1438, %v1439
    %v1441 = vtanh.pop %v1440
    %v1442 = vsub.f32 1.0, %v1436
    %v1443 = vmul.f32 %v1442, %v1441
    %v1444 = vmul.f32 %v1436, %v1203
    %v1445 = vadd.f32 %v1443, %v1444
    %s1446 = scalar_lea.vmem [#allocation8], 24
    %1447 = vst.msk [vmem:[%s1446] sm:$0xff] %vm207, %v1445
    %v1449 = vsel %vm207, %v1445, 0
    %1451 = vmatprep.subr.mxu0 0.0
    %1452 = vmatpush1.msra.mxu0 %v464
    %1453 = vmatprep.subr.mxu0 0.0
    %1454 = vmatpush1.msra.mxu0 %v465
    %1455 = vmatprep.subr.mxu0 0.0
    %1456 = vmatpush1.msra.mxu0 %v466
    %1457 = vmatprep.subr.mxu0 0.0
    %1458 = vmatpush1.msra.mxu0 %v467
    %1459 = vmatprep.subr.mxu0 0.0
    %1460 = vmatpush1.msra.mxu0 0.0
    %1461 = vmatprep.subr.mxu0 0.0
    %1462 = vmatpush1.msra.mxu0 0.0
    %1463 = vmatprep.subr.mxu0 0.0
    %1464 = vmatpush1.msra.mxu0 0.0
    %1465 = vmatprep.subr.mxu0 0.0
    %1466 = vmatpush1.msra.mxu0 0.0
    %1467 = vmatprep.subr.mxu0 0.0
    %1468 = vmatpush1.msra.mxu0 0.0
    %1469 = vmatprep.subr.mxu0 0.0
    %1470 = vmatpush1.msra.mxu0 0.0
    %1471 = vmatprep.subr.mxu0 0.0
    %1472 = vmatpush1.msra.mxu0 0.0
    %1473 = vmatprep.subr.mxu0 0.0
    %1474 = vmatpush1.msra.mxu0 0.0
    %1475 = vmatprep.subr.mxu0 0.0
    %1476 = vmatpush1.msra.mxu0 0.0
    %1477 = vmatprep.subr.mxu0 0.0
    %1478 = vmatpush1.msra.mxu0 0.0
    %1479 = vmatprep.subr.mxu0 0.0
    %1480 = vmatpush1.msra.mxu0 0.0
    %1481 = vmatprep.subr.mxu0 0.0
    %1482 = vmatpush1.msra.mxu0 0.0
    %1483 = vmatprep.subr.mxu0 0.0
    %1484 = vmatpush1.msra.mxu0 0.0
    %1485 = vmatprep.subr.mxu0 0.0
    %1486 = vmatpush1.msra.mxu0 0.0
    %1487 = vmatprep.subr.mxu0 0.0
    %1488 = vmatpush1.msra.mxu0 0.0
    %1489 = vmatprep.subr.mxu0 0.0
    %1490 = vmatpush1.msra.mxu0 0.0
    %1491 = vmatprep.subr.mxu0 0.0
    %1492 = vmatpush1.msra.mxu0 0.0
    %1493 = vmatprep.subr.mxu0 0.0
    %1494 = vmatpush1.msra.mxu0 0.0
    %1495 = vmatprep.subr.mxu0 0.0
    %1496 = vmatpush1.msra.mxu0 0.0
    %1497 = vmatprep.subr.mxu0 0.0
    %1498 = vmatpush1.msra.mxu0 0.0
    %1499 = vmatprep.subr.mxu0 0.0
    %1500 = vmatpush1.msra.mxu0 0.0
    %1501 = vmatprep.subr.mxu0 0.0
    %1502 = vmatpush1.msra.mxu0 0.0
    %1503 = vmatprep.subr.mxu0 0.0
    %1504 = vmatpush1.msra.mxu0 0.0
    %1505 = vmatprep.subr.mxu0 0.0
    %1506 = vmatpush1.msra.mxu0 0.0
    %1507 = vmatprep.subr.mxu0 0.0
    %1508 = vmatpush1.msra.mxu0 0.0
    %1509 = vmatprep.subr.mxu0 0.0
    %1510 = vmatpush1.msra.mxu0 0.0
    %1511 = vmatprep.subr.mxu0 0.0
    %1512 = vmatpush1.msra.mxu0 0.0
    %1513 = vmatprep.subr.mxu0 0.0
    %1514 = vmatpush1.msra.mxu0 0.0
    %1515 = vmatprep.mubr.f32.mxu0 0.0
    %1516 = vmatmul.mubr.f32.gmra.mrb[0].mxu0 %v1449
    %v1517 = vpop.f32.mrb[0].mxu0
    %v1518 = vadd.f32 0.0, %v1517
    %v1519 = vpop.f32.mrb[0].mxu0
    %1520 = vdwg.mxu0
    %1521 = vmatprep.subr.mxu0 0.0
    %1522 = vmatpush1.msra.mxu0 %v468
    %1523 = vmatprep.subr.mxu0 0.0
    %1524 = vmatpush1.msra.mxu0 %v469
    %1525 = vmatprep.subr.mxu0 0.0
    %1526 = vmatpush1.msra.mxu0 %v470
    %1527 = vmatprep.subr.mxu0 0.0
    %1528 = vmatpush1.msra.mxu0 %v471
    %1529 = vmatprep.subr.mxu0 0.0
    %1530 = vmatpush1.msra.mxu0 0.0
    %1531 = vmatprep.subr.mxu0 0.0
    %1532 = vmatpush1.msra.mxu0 0.0
    %1533 = vmatprep.subr.mxu0 0.0
    %1534 = vmatpush1.msra.mxu0 0.0
    %1535 = vmatprep.subr.mxu0 0.0
    %1536 = vmatpush1.msra.mxu0 0.0
    %1537 = vmatprep.subr.mxu0 0.0
    %1538 = vmatpush1.msra.mxu0 0.0
    %1539 = vmatprep.subr.mxu0 0.0
    %1540 = vmatpush1.msra.mxu0 0.0
    %1541 = vmatprep.subr.mxu0 0.0
    %1542 = vmatpush1.msra.mxu0 0.0
    %1543 = vmatprep.subr.mxu0 0.0
    %1544 = vmatpush1.msra.mxu0 0.0
    %1545 = vmatprep.subr.mxu0 0.0
    %1546 = vmatpush1.msra.mxu0 0.0
    %1547 = vmatprep.subr.mxu0 0.0
    %1548 = vmatpush1.msra.mxu0 0.0
    %1549 = vmatprep.subr.mxu0 0.0
    %1550 = vmatpush1.msra.mxu0 0.0
    %1551 = vmatprep.subr.mxu0 0.0
    %1552 = vmatpush1.msra.mxu0 0.0
    %1553 = vmatprep.subr.mxu0 0.0
    %1554 = vmatpush1.msra.mxu0 0.0
    %1555 = vmatprep.subr.mxu0 0.0
    %1556 = vmatpush1.msra.mxu0 0.0
    %1557 = vmatprep.subr.mxu0 0.0
    %1558 = vmatpush1.msra.mxu0 0.0
    %1559 = vmatprep.subr.mxu0 0.0
    %1560 = vmatpush1.msra.mxu0 0.0
    %1561 = vmatprep.subr.mxu0 0.0
    %1562 = vmatpush1.msra.mxu0 0.0
    %1563 = vmatprep.subr.mxu0 0.0
    %1564 = vmatpush1.msra.mxu0 0.0
    %1565 = vmatprep.subr.mxu0 0.0
    %1566 = vmatpush1.msra.mxu0 0.0
    %1567 = vmatprep.subr.mxu0 0.0
    %1568 = vmatpush1.msra.mxu0 0.0
    %1569 = vmatprep.subr.mxu0 0.0
    %1570 = vmatpush1.msra.mxu0 0.0
    %1571 = vmatprep.subr.mxu0 0.0
    %1572 = vmatpush1.msra.mxu0 0.0
    %1573 = vmatprep.subr.mxu0 0.0
    %1574 = vmatpush1.msra.mxu0 0.0
    %1575 = vmatprep.subr.mxu0 0.0
    %1576 = vmatpush1.msra.mxu0 0.0
    %1577 = vmatprep.subr.mxu0 0.0
    %1578 = vmatpush1.msra.mxu0 0.0
    %1579 = vmatprep.subr.mxu0 0.0
    %1580 = vmatpush1.msra.mxu0 0.0
    %1581 = vmatprep.subr.mxu0 0.0
    %1582 = vmatpush1.msra.mxu0 0.0
    %1583 = vmatprep.subr.mxu0 0.0
    %1584 = vmatpush1.msra.mxu0 0.0
    %1585 = vmatprep.mubr.f32.mxu0 0.0
    %1586 = vmatmul.mubr.f32.gmra.mrb[0].mxu0 %v1449
    %v1587 = vpop.f32.mrb[0].mxu0
    %v1588 = vadd.f32 0.0, %v1587
    %v1589 = vpop.f32.mrb[0].mxu0
    %1590 = vdwg.mxu0
    %1591 = vmatprep.subr.mxu0 0.0
    %1592 = vmatpush1.msra.mxu0 %v472
    %1593 = vmatprep.subr.mxu0 0.0
    %1594 = vmatpush1.msra.mxu0 %v473
    %1595 = vmatprep.subr.mxu0 0.0
    %1596 = vmatpush1.msra.mxu0 %v474
    %1597 = vmatprep.subr.mxu0 0.0
    %1598 = vmatpush1.msra.mxu0 %v475
    %1599 = vmatprep.subr.mxu0 0.0
    %1600 = vmatpush1.msra.mxu0 0.0
    %1601 = vmatprep.subr.mxu0 0.0
    %1602 = vmatpush1.msra.mxu0 0.0
    %1603 = vmatprep.subr.mxu0 0.0
    %1604 = vmatpush1.msra.mxu0 0.0
    %1605 = vmatprep.subr.mxu0 0.0
    %1606 = vmatpush1.msra.mxu0 0.0
    %1607 = vmatprep.subr.mxu0 0.0
    %1608 = vmatpush1.msra.mxu0 0.0
    %1609 = vmatprep.subr.mxu0 0.0
    %1610 = vmatpush1.msra.mxu0 0.0
    %1611 = vmatprep.subr.mxu0 0.0
    %1612 = vmatpush1.msra.mxu0 0.0
    %1613 = vmatprep.subr.mxu0 0.0
    %1614 = vmatpush1.msra.mxu0 0.0
    %1615 = vmatprep.subr.mxu0 0.0
    %1616 = vmatpush1.msra.mxu0 0.0
    %1617 = vmatprep.subr.mxu0 0.0
    %1618 = vmatpush1.msra.mxu0 0.0
    %1619 = vmatprep.subr.mxu0 0.0
    %1620 = vmatpush1.msra.mxu0 0.0
    %1621 = vmatprep.subr.mxu0 0.0
    %1622 = vmatpush1.msra.mxu0 0.0
    %1623 = vmatprep.subr.mxu0 0.0
    %1624 = vmatpush1.msra.mxu0 0.0
    %1625 = vmatprep.subr.mxu0 0.0
    %1626 = vmatpush1.msra.mxu0 0.0
    %1627 = vmatprep.subr.mxu0 0.0
    %1628 = vmatpush1.msra.mxu0 0.0
    %1629 = vmatprep.subr.mxu0 0.0
    %1630 = vmatpush1.msra.mxu0 0.0
    %1631 = vmatprep.subr.mxu0 0.0
    %1632 = vmatpush1.msra.mxu0 0.0
    %1633 = vmatprep.subr.mxu0 0.0
    %1634 = vmatpush1.msra.mxu0 0.0
    %1635 = vmatprep.subr.mxu0 0.0
    %1636 = vmatpush1.msra.mxu0 0.0
    %1637 = vmatprep.subr.mxu0 0.0
    %1638 = vmatpush1.msra.mxu0 0.0
    %1639 = vmatprep.subr.mxu0 0.0
    %1640 = vmatpush1.msra.mxu0 0.0
    %1641 = vmatprep.subr.mxu0 0.0
    %1642 = vmatpush1.msra.mxu0 0.0
    %1643 = vmatprep.subr.mxu0 0.0
    %1644 = vmatpush1.msra.mxu0 0.0
    %1645 = vmatprep.subr.mxu0 0.0
    %1646 = vmatpush1.msra.mxu0 0.0
    %1647 = vmatprep.subr.mxu0 0.0
    %1648 = vmatpush1.msra.mxu0 0.0
    %1649 = vmatprep.subr.mxu0 0.0
    %1650 = vmatpush1.msra.mxu0 0.0
    %1651 = vmatprep.subr.mxu0 0.0
    %1652 = vmatpush1.msra.mxu0 0.0
    %1653 = vmatprep.subr.mxu0 0.0
    %1654 = vmatpush1.msra.mxu0 0.0
    %1655 = vmatprep.mubr.f32.mxu0 0.0
    %1656 = vmatmul.mubr.f32.gmra.mrb[0].mxu0 %v1449
    %v1657 = vpop.f32.mrb[0].mxu0
    %v1658 = vadd.f32 %v625, %v1657
    %v1659 = vpop.f32.mrb[0].mxu0
    %1660 = vdwg.mxu0
    %s1661 = scalar_lea.vmem [#allocation2], 32
    %v1662 = vld [vmem:[%s1661] sm:$0xff]
    %v1663 = vadd.f32 %v1662, %v1518
    %v1664 = vxor.u32 %v1663, 2147483648
    %v1665 = vmul.f32 %v1664, 1.442695
    %v1666 = vpow.pop %v1665
    %v1667 = vadd.f32 %v1666, 1.0
    %v1668 = vrcp.pop %v1667
    %v1669 = vmul.f32 1.0, %v1668
    %s1670 = scalar_lea.vmem [#allocation3], 32
    %v1671 = vld [vmem:[%s1670] sm:$0xff]
    %v1672 = vadd.f32 %v1671, %v1588
    %v1673 = vxor.u32 %v1672, 2147483648
    %v1674 = vmul.f32 %v1673, 1.442695
    %v1675 = vpow.pop %v1674
    %v1676 = vadd.f32 %v1675, 1.0
    %v1677 = vrcp.pop %v1676
    %v1678 = vmul.f32 1.0, %v1677
    %s1679 = scalar_lea.vmem [#allocation4], 32
    %v1680 = vld [vmem:[%s1679] sm:$0xff]
    %v1681 = vmul.f32 %v1669, %v1658
    %v1682 = vadd.f32 %v1680, %v1681
    %v1683 = vtanh.pop %v1682
    %v1684 = vsub.f32 1.0, %v1678
    %v1685 = vmul.f32 %v1684, %v1683
    %v1686 = vmul.f32 %v1678, %v1445
    %v1687 = vadd.f32 %v1685, %v1686
    %s1688 = scalar_lea.vmem [#allocation8], 32
    %1689 = vst.msk [vmem:[%s1688] sm:$0xff] %vm207, %v1687
    %v1691 = vsel %vm207, %v1687, 0
    %1693 = vmatprep.subr.mxu0 0.0
    %1694 = vmatpush1.msra.mxu0 %v464
    %1695 = vmatprep.subr.mxu0 0.0
    %1696 = vmatpush1.msra.mxu0 %v465
    %1697 = vmatprep.subr.mxu0 0.0
    %1698 = vmatpush1.msra.mxu0 %v466
    %1699 = vmatprep.subr.mxu0 0.0
    %1700 = vmatpush1.msra.mxu0 %v467
    %1701 = vmatprep.subr.mxu0 0.0
    %1702 = vmatpush1.msra.mxu0 0.0
    %1703 = vmatprep.subr.mxu0 0.0
    %1704 = vmatpush1.msra.mxu0 0.0
    %1705 = vmatprep.subr.mxu0 0.0
    %1706 = vmatpush1.msra.mxu0 0.0
    %1707 = vmatprep.subr.mxu0 0.0
    %1708 = vmatpush1.msra.mxu0 0.0
    %1709 = vmatprep.subr.mxu0 0.0
    %1710 = vmatpush1.msra.mxu0 0.0
    %1711 = vmatprep.subr.mxu0 0.0
    %1712 = vmatpush1.msra.mxu0 0.0
    %1713 = vmatprep.subr.mxu0 0.0
    %1714 = vmatpush1.msra.mxu0 0.0
    %1715 = vmatprep.subr.mxu0 0.0
    %1716 = vmatpush1.msra.mxu0 0.0
    %1717 = vmatprep.subr.mxu0 0.0
    %1718 = vmatpush1.msra.mxu0 0.0
    %1719 = vmatprep.subr.mxu0 0.0
    %1720 = vmatpush1.msra.mxu0 0.0
    %1721 = vmatprep.subr.mxu0 0.0
    %1722 = vmatpush1.msra.mxu0 0.0
    %1723 = vmatprep.subr.mxu0 0.0
    %1724 = vmatpush1.msra.mxu0 0.0
    %1725 = vmatprep.subr.mxu0 0.0
    %1726 = vmatpush1.msra.mxu0 0.0
    %1727 = vmatprep.subr.mxu0 0.0
    %1728 = vmatpush1.msra.mxu0 0.0
    %1729 = vmatprep.subr.mxu0 0.0
    %1730 = vmatpush1.msra.mxu0 0.0
    %1731 = vmatprep.subr.mxu0 0.0
    %1732 = vmatpush1.msra.mxu0 0.0
    %1733 = vmatprep.subr.mxu0 0.0
    %1734 = vmatpush1.msra.mxu0 0.0
    %1735 = vmatprep.subr.mxu0 0.0
    %1736 = vmatpush1.msra.mxu0 0.0
    %1737 = vmatprep.subr.mxu0 0.0
    %1738 = vmatpush1.msra.mxu0 0.0
    %1739 = vmatprep.subr.mxu0 0.0
    %1740 = vmatpush1.msra.mxu0 0.0
    %1741 = vmatprep.subr.mxu0 0.0
    %1742 = vmatpush1.msra.mxu0 0.0
    %1743 = vmatprep.subr.mxu0 0.0
    %1744 = vmatpush1.msra.mxu0 0.0
    %1745 = vmatprep.subr.mxu0 0.0
    %1746 = vmatpush1.msra.mxu0 0.0
    %1747 = vmatprep.subr.mxu0 0.0
    %1748 = vmatpush1.msra.mxu0 0.0
    %1749 = vmatprep.subr.mxu0 0.0
    %1750 = vmatpush1.msra.mxu0 0.0
    %1751 = vmatprep.subr.mxu0 0.0
    %1752 = vmatpush1.msra.mxu0 0.0
    %1753 = vmatprep.subr.mxu0 0.0
    %1754 = vmatpush1.msra.mxu0 0.0
    %1755 = vmatprep.subr.mxu0 0.0
    %1756 = vmatpush1.msra.mxu0 0.0
    %1757 = vmatprep.mubr.f32.mxu0 0.0
    %1758 = vmatmul.mubr.f32.gmra.mrb[0].mxu0 %v1691
    %v1759 = vpop.f32.mrb[0].mxu0
    %v1760 = vadd.f32 0.0, %v1759
    %v1761 = vpop.f32.mrb[0].mxu0
    %1762 = vdwg.mxu0
    %1763 = vmatprep.subr.mxu0 0.0
    %1764 = vmatpush1.msra.mxu0 %v468
    %1765 = vmatprep.subr.mxu0 0.0
    %1766 = vmatpush1.msra.mxu0 %v469
    %1767 = vmatprep.subr.mxu0 0.0
    %1768 = vmatpush1.msra.mxu0 %v470
    %1769 = vmatprep.subr.mxu0 0.0
    %1770 = vmatpush1.msra.mxu0 %v471
    %1771 = vmatprep.subr.mxu0 0.0
    %1772 = vmatpush1.msra.mxu0 0.0
    %1773 = vmatprep.subr.mxu0 0.0
    %1774 = vmatpush1.msra.mxu0 0.0
    %1775 = vmatprep.subr.mxu0 0.0
    %1776 = vmatpush1.msra.mxu0 0.0
    %1777 = vmatprep.subr.mxu0 0.0
    %1778 = vmatpush1.msra.mxu0 0.0
    %1779 = vmatprep.subr.mxu0 0.0
    %1780 = vmatpush1.msra.mxu0 0.0
    %1781 = vmatprep.subr.mxu0 0.0
    %1782 = vmatpush1.msra.mxu0 0.0
    %1783 = vmatprep.subr.mxu0 0.0
    %1784 = vmatpush1.msra.mxu0 0.0
    %1785 = vmatprep.subr.mxu0 0.0
    %1786 = vmatpush1.msra.mxu0 0.0
    %1787 = vmatprep.subr.mxu0 0.0
    %1788 = vmatpush1.msra.mxu0 0.0
    %1789 = vmatprep.subr.mxu0 0.0
    %1790 = vmatpush1.msra.mxu0 0.0
    %1791 = vmatprep.subr.mxu0 0.0
    %1792 = vmatpush1.msra.mxu0 0.0
    %1793 = vmatprep.subr.mxu0 0.0
    %1794 = vmatpush1.msra.mxu0 0.0
    %1795 = vmatprep.subr.mxu0 0.0
    %1796 = vmatpush1.msra.mxu0 0.0
    %1797 = vmatprep.subr.mxu0 0.0
    %1798 = vmatpush1.msra.mxu0 0.0
    %1799 = vmatprep.subr.mxu0 0.0
    %1800 = vmatpush1.msra.mxu0 0.0
    %1801 = vmatprep.subr.mxu0 0.0
    %1802 = vmatpush1.msra.mxu0 0.0
    %1803 = vmatprep.subr.mxu0 0.0
    %1804 = vmatpush1.msra.mxu0 0.0
    %1805 = vmatprep.subr.mxu0 0.0
    %1806 = vmatpush1.msra.mxu0 0.0
    %1807 = vmatprep.subr.mxu0 0.0
    %1808 = vmatpush1.msra.mxu0 0.0
    %1809 = vmatprep.subr.mxu0 0.0
    %1810 = vmatpush1.msra.mxu0 0.0
    %1811 = vmatprep.subr.mxu0 0.0
    %1812 = vmatpush1.msra.mxu0 0.0
    %1813 = vmatprep.subr.mxu0 0.0
    %1814 = vmatpush1.msra.mxu0 0.0
    %1815 = vmatprep.subr.mxu0 0.0
    %1816 = vmatpush1.msra.mxu0 0.0
    %1817 = vmatprep.subr.mxu0 0.0
    %1818 = vmatpush1.msra.mxu0 0.0
    %1819 = vmatprep.subr.mxu0 0.0
    %1820 = vmatpush1.msra.mxu0 0.0
    %1821 = vmatprep.subr.mxu0 0.0
    %1822 = vmatpush1.msra.mxu0 0.0
    %1823 = vmatprep.subr.mxu0 0.0
    %1824 = vmatpush1.msra.mxu0 0.0
    %1825 = vmatprep.subr.mxu0 0.0
    %1826 = vmatpush1.msra.mxu0 0.0
    %1827 = vmatprep.mubr.f32.mxu0 0.0
    %1828 = vmatmul.mubr.f32.gmra.mrb[0].mxu0 %v1691
    %v1829 = vpop.f32.mrb[0].mxu0
    %v1830 = vadd.f32 0.0, %v1829
    %v1831 = vpop.f32.mrb[0].mxu0
    %1832 = vdwg.mxu0
    %1833 = vmatprep.subr.mxu0 0.0
    %1834 = vmatpush1.msra.mxu0 %v472
    %1835 = vmatprep.subr.mxu0 0.0
    %1836 = vmatpush1.msra.mxu0 %v473
    %1837 = vmatprep.subr.mxu0 0.0
    %1838 = vmatpush1.msra.mxu0 %v474
    %1839 = vmatprep.subr.mxu0 0.0
    %1840 = vmatpush1.msra.mxu0 %v475
    %1841 = vmatprep.subr.mxu0 0.0
    %1842 = vmatpush1.msra.mxu0 0.0
    %1843 = vmatprep.subr.mxu0 0.0
    %1844 = vmatpush1.msra.mxu0 0.0
    %1845 = vmatprep.subr.mxu0 0.0
    %1846 = vmatpush1.msra.mxu0 0.0
    %1847 = vmatprep.subr.mxu0 0.0
    %1848 = vmatpush1.msra.mxu0 0.0
    %1849 = vmatprep.subr.mxu0 0.0
    %1850 = vmatpush1.msra.mxu0 0.0
    %1851 = vmatprep.subr.mxu0 0.0
    %1852 = vmatpush1.msra.mxu0 0.0
    %1853 = vmatprep.subr.mxu0 0.0
    %1854 = vmatpush1.msra.mxu0 0.0
    %1855 = vmatprep.subr.mxu0 0.0
    %1856 = vmatpush1.msra.mxu0 0.0
    %1857 = vmatprep.subr.mxu0 0.0
    %1858 = vmatpush1.msra.mxu0 0.0
    %1859 = vmatprep.subr.mxu0 0.0
    %1860 = vmatpush1.msra.mxu0 0.0
    %1861 = vmatprep.subr.mxu0 0.0
    %1862 = vmatpush1.msra.mxu0 0.0
    %1863 = vmatprep.subr.mxu0 0.0
    %1864 = vmatpush1.msra.mxu0 0.0
    %1865 = vmatprep.subr.mxu0 0.0
    %1866 = vmatpush1.msra.mxu0 0.0
    %1867 = vmatprep.subr.mxu0 0.0
    %1868 = vmatpush1.msra.mxu0 0.0
    %1869 = vmatprep.subr.mxu0 0.0
    %1870 = vmatpush1.msra.mxu0 0.0
    %1871 = vmatprep.subr.mxu0 0.0
    %1872 = vmatpush1.msra.mxu0 0.0
    %1873 = vmatprep.subr.mxu0 0.0
    %1874 = vmatpush1.msra.mxu0 0.0
    %1875 = vmatprep.subr.mxu0 0.0
    %1876 = vmatpush1.msra.mxu0 0.0
    %1877 = vmatprep.subr.mxu0 0.0
    %1878 = vmatpush1.msra.mxu0 0.0
    %1879 = vmatprep.subr.mxu0 0.0
    %1880 = vmatpush1.msra.mxu0 0.0
    %1881 = vmatprep.subr.mxu0 0.0
    %1882 = vmatpush1.msra.mxu0 0.0
    %1883 = vmatprep.subr.mxu0 0.0
    %1884 = vmatpush1.msra.mxu0 0.0
    %1885 = vmatprep.subr.mxu0 0.0
    %1886 = vmatpush1.msra.mxu0 0.0
    %1887 = vmatprep.subr.mxu0 0.0
    %1888 = vmatpush1.msra.mxu0 0.0
    %1889 = vmatprep.subr.mxu0 0.0
    %1890 = vmatpush1.msra.mxu0 0.0
    %1891 = vmatprep.subr.mxu0 0.0
    %1892 = vmatpush1.msra.mxu0 0.0
    %1893 = vmatprep.subr.mxu0 0.0
    %1894 = vmatpush1.msra.mxu0 0.0
    %1895 = vmatprep.subr.mxu0 0.0
    %1896 = vmatpush1.msra.mxu0 0.0
    %1897 = vmatprep.mubr.f32.mxu0 0.0
    %1898 = vmatmul.mubr.f32.gmra.mrb[0].mxu0 %v1691
    %v1899 = vpop.f32.mrb[0].mxu0
    %v1900 = vadd.f32 %v625, %v1899
    %v1901 = vpop.f32.mrb[0].mxu0
    %1902 = vdwg.mxu0
    %s1903 = scalar_lea.vmem [#allocation2], 40
    %v1904 = vld [vmem:[%s1903] sm:$0xff]
    %v1905 = vadd.f32 %v1904, %v1760
    %v1906 = vxor.u32 %v1905, 2147483648
    %v1907 = vmul.f32 %v1906, 1.442695
    %v1908 = vpow.pop %v1907
    %v1909 = vadd.f32 %v1908, 1.0
    %v1910 = vrcp.pop %v1909
    %v1911 = vmul.f32 1.0, %v1910
    %s1912 = scalar_lea.vmem [#allocation3], 40
    %v1913 = vld [vmem:[%s1912] sm:$0xff]
    %v1914 = vadd.f32 %v1913, %v1830
    %v1915 = vxor.u32 %v1914, 2147483648
    %v1916 = vmul.f32 %v1915, 1.442695
    %v1917 = vpow.pop %v1916
    %v1918 = vadd.f32 %v1917, 1.0
    %v1919 = vrcp.pop %v1918
    %v1920 = vmul.f32 1.0, %v1919
    %s1921 = scalar_lea.vmem [#allocation4], 40
    %v1922 = vld [vmem:[%s1921] sm:$0xff]
    %v1923 = vmul.f32 %v1911, %v1900
    %v1924 = vadd.f32 %v1922, %v1923
    %v1925 = vtanh.pop %v1924
    %v1926 = vsub.f32 1.0, %v1920
    %v1927 = vmul.f32 %v1926, %v1925
    %v1928 = vmul.f32 %v1920, %v1687
    %v1929 = vadd.f32 %v1927, %v1928
    %s1930 = scalar_lea.vmem [#allocation8], 40
    %1931 = vst.msk [vmem:[%s1930] sm:$0xff] %vm207, %v1929
    %v1933 = vsel %vm207, %v1929, 0
    %1935 = vmatprep.subr.mxu0 0.0
    %1936 = vmatpush1.msra.mxu0 %v464
    %1937 = vmatprep.subr.mxu0 0.0
    %1938 = vmatpush1.msra.mxu0 %v465
    %1939 = vmatprep.subr.mxu0 0.0
    %1940 = vmatpush1.msra.mxu0 %v466
    %1941 = vmatprep.subr.mxu0 0.0
    %1942 = vmatpush1.msra.mxu0 %v467
    %1943 = vmatprep.subr.mxu0 0.0
    %1944 = vmatpush1.msra.mxu0 0.0
    %1945 = vmatprep.subr.mxu0 0.0
    %1946 = vmatpush1.msra.mxu0 0.0
    %1947 = vmatprep.subr.mxu0 0.0
    %1948 = vmatpush1.msra.mxu0 0.0
    %1949 = vmatprep.subr.mxu0 0.0
    %1950 = vmatpush1.msra.mxu0 0.0
    %1951 = vmatprep.subr.mxu0 0.0
    %1952 = vmatpush1.msra.mxu0 0.0
    %1953 = vmatprep.subr.mxu0 0.0
    %1954 = vmatpush1.msra.mxu0 0.0
    %1955 = vmatprep.subr.mxu0 0.0
    %1956 = vmatpush1.msra.mxu0 0.0
    %1957 = vmatprep.subr.mxu0 0.0
    %1958 = vmatpush1.msra.mxu0 0.0
    %1959 = vmatprep.subr.mxu0 0.0
    %1960 = vmatpush1.msra.mxu0 0.0
    %1961 = vmatprep.subr.mxu0 0.0
    %1962 = vmatpush1.msra.mxu0 0.0
    %1963 = vmatprep.subr.mxu0 0.0
    %1964 = vmatpush1.msra.mxu0 0.0
    %1965 = vmatprep.subr.mxu0 0.0
    %1966 = vmatpush1.msra.mxu0 0.0
    %1967 = vmatprep.subr.mxu0 0.0
    %1968 = vmatpush1.msra.mxu0 0.0
    %1969 = vmatprep.subr.mxu0 0.0
    %1970 = vmatpush1.msra.mxu0 0.0
    %1971 = vmatprep.subr.mxu0 0.0
    %1972 = vmatpush1.msra.mxu0 0.0
    %1973 = vmatprep.subr.mxu0 0.0
    %1974 = vmatpush1.msra.mxu0 0.0
    %1975 = vmatprep.subr.mxu0 0.0
    %1976 = vmatpush1.msra.mxu0 0.0
    %1977 = vmatprep.subr.mxu0 0.0
    %1978 = vmatpush1.msra.mxu0 0.0
    %1979 = vmatprep.subr.mxu0 0.0
    %1980 = vmatpush1.msra.mxu0 0.0
    %1981 = vmatprep.subr.mxu0 0.0
    %1982 = vmatpush1.msra.mxu0 0.0
    %1983 = vmatprep.subr.mxu0 0.0
    %1984 = vmatpush1.msra.mxu0 0.0
    %1985 = vmatprep.subr.mxu0 0.0
    %1986 = vmatpush1.msra.mxu0 0.0
    %1987 = vmatprep.subr.mxu0 0.0
    %1988 = vmatpush1.msra.mxu0 0.0
    %1989 = vmatprep.subr.mxu0 0.0
    %1990 = vmatpush1.msra.mxu0 0.0
    %1991 = vmatprep.subr.mxu0 0.0
    %1992 = vmatpush1.msra.mxu0 0.0
    %1993 = vmatprep.subr.mxu0 0.0
    %1994 = vmatpush1.msra.mxu0 0.0
    %1995 = vmatprep.subr.mxu0 0.0
    %1996 = vmatpush1.msra.mxu0 0.0
    %1997 = vmatprep.subr.mxu0 0.0
    %1998 = vmatpush1.msra.mxu0 0.0
    %1999 = vmatprep.mubr.f32.mxu0 0.0
    %2000 = vmatmul.mubr.f32.gmra.mrb[0].mxu0 %v1933
    %v2001 = vpop.f32.mrb[0].mxu0
    %v2002 = vadd.f32 0.0, %v2001
    %v2003 = vpop.f32.mrb[0].mxu0
    %2004 = vdwg.mxu0
    %2005 = vmatprep.subr.mxu0 0.0
    %2006 = vmatpush1.msra.mxu0 %v468
    %2007 = vmatprep.subr.mxu0 0.0
    %2008 = vmatpush1.msra.mxu0 %v469
    %2009 = vmatprep.subr.mxu0 0.0
    %2010 = vmatpush1.msra.mxu0 %v470
    %2011 = vmatprep.subr.mxu0 0.0
    %2012 = vmatpush1.msra.mxu0 %v471
    %2013 = vmatprep.subr.mxu0 0.0
    %2014 = vmatpush1.msra.mxu0 0.0
    %2015 = vmatprep.subr.mxu0 0.0
    %2016 = vmatpush1.msra.mxu0 0.0
    %2017 = vmatprep.subr.mxu0 0.0
    %2018 = vmatpush1.msra.mxu0 0.0
    %2019 = vmatprep.subr.mxu0 0.0
    %2020 = vmatpush1.msra.mxu0 0.0
    %2021 = vmatprep.subr.mxu0 0.0
    %2022 = vmatpush1.msra.mxu0 0.0
    %2023 = vmatprep.subr.mxu0 0.0
    %2024 = vmatpush1.msra.mxu0 0.0
    %2025 = vmatprep.subr.mxu0 0.0
    %2026 = vmatpush1.msra.mxu0 0.0
    %2027 = vmatprep.subr.mxu0 0.0
    %2028 = vmatpush1.msra.mxu0 0.0
    %2029 = vmatprep.subr.mxu0 0.0
    %2030 = vmatpush1.msra.mxu0 0.0
    %2031 = vmatprep.subr.mxu0 0.0
    %2032 = vmatpush1.msra.mxu0 0.0
    %2033 = vmatprep.subr.mxu0 0.0
    %2034 = vmatpush1.msra.mxu0 0.0
    %2035 = vmatprep.subr.mxu0 0.0
    %2036 = vmatpush1.msra.mxu0 0.0
    %2037 = vmatprep.subr.mxu0 0.0
    %2038 = vmatpush1.msra.mxu0 0.0
    %2039 = vmatprep.subr.mxu0 0.0
    %2040 = vmatpush1.msra.mxu0 0.0
    %2041 = vmatprep.subr.mxu0 0.0
    %2042 = vmatpush1.msra.mxu0 0.0
    %2043 = vmatprep.subr.mxu0 0.0
    %2044 = vmatpush1.msra.mxu0 0.0
    %2045 = vmatprep.subr.mxu0 0.0
    %2046 = vmatpush1.msra.mxu0 0.0
    %2047 = vmatprep.subr.mxu0 0.0
    %2048 = vmatpush1.msra.mxu0 0.0
    %2049 = vmatprep.subr.mxu0 0.0
    %2050 = vmatpush1.msra.mxu0 0.0
    %2051 = vmatprep.subr.mxu0 0.0
    %2052 = vmatpush1.msra.mxu0 0.0
    %2053 = vmatprep.subr.mxu0 0.0
    %2054 = vmatpush1.msra.mxu0 0.0
    %2055 = vmatprep.subr.mxu0 0.0
    %2056 = vmatpush1.msra.mxu0 0.0
    %2057 = vmatprep.subr.mxu0 0.0
    %2058 = vmatpush1.msra.mxu0 0.0
    %2059 = vmatprep.subr.mxu0 0.0
    %2060 = vmatpush1.msra.mxu0 0.0
    %2061 = vmatprep.subr.mxu0 0.0
    %2062 = vmatpush1.msra.mxu0 0.0
    %2063 = vmatprep.subr.mxu0 0.0
    %2064 = vmatpush1.msra.mxu0 0.0
    %2065 = vmatprep.subr.mxu0 0.0
    %2066 = vmatpush1.msra.mxu0 0.0
    %2067 = vmatprep.subr.mxu0 0.0
    %2068 = vmatpush1.msra.mxu0 0.0
    %2069 = vmatprep.mubr.f32.mxu0 0.0
    %2070 = vmatmul.mubr.f32.gmra.mrb[0].mxu0 %v1933
    %v2071 = vpop.f32.mrb[0].mxu0
    %v2072 = vadd.f32 0.0, %v2071
    %v2073 = vpop.f32.mrb[0].mxu0
    %2074 = vdwg.mxu0
    %2075 = vmatprep.subr.mxu0 0.0
    %2076 = vmatpush1.msra.mxu0 %v472
    %2077 = vmatprep.subr.mxu0 0.0
    %2078 = vmatpush1.msra.mxu0 %v473
    %2079 = vmatprep.subr.mxu0 0.0
    %2080 = vmatpush1.msra.mxu0 %v474
    %2081 = vmatprep.subr.mxu0 0.0
    %2082 = vmatpush1.msra.mxu0 %v475
    %2083 = vmatprep.subr.mxu0 0.0
    %2084 = vmatpush1.msra.mxu0 0.0
    %2085 = vmatprep.subr.mxu0 0.0
    %2086 = vmatpush1.msra.mxu0 0.0
    %2087 = vmatprep.subr.mxu0 0.0
    %2088 = vmatpush1.msra.mxu0 0.0
    %2089 = vmatprep.subr.mxu0 0.0
    %2090 = vmatpush1.msra.mxu0 0.0
    %2091 = vmatprep.subr.mxu0 0.0
    %2092 = vmatpush1.msra.mxu0 0.0
    %2093 = vmatprep.subr.mxu0 0.0
    %2094 = vmatpush1.msra.mxu0 0.0
    %2095 = vmatprep.subr.mxu0 0.0
    %2096 = vmatpush1.msra.mxu0 0.0
    %2097 = vmatprep.subr.mxu0 0.0
    %2098 = vmatpush1.msra.mxu0 0.0
    %2099 = vmatprep.subr.mxu0 0.0
    %2100 = vmatpush1.msra.mxu0 0.0
    %2101 = vmatprep.subr.mxu0 0.0
    %2102 = vmatpush1.msra.mxu0 0.0
    %2103 = vmatprep.subr.mxu0 0.0
    %2104 = vmatpush1.msra.mxu0 0.0
    %2105 = vmatprep.subr.mxu0 0.0
    %2106 = vmatpush1.msra.mxu0 0.0
    %2107 = vmatprep.subr.mxu0 0.0
    %2108 = vmatpush1.msra.mxu0 0.0
    %2109 = vmatprep.subr.mxu0 0.0
    %2110 = vmatpush1.msra.mxu0 0.0
    %2111 = vmatprep.subr.mxu0 0.0
    %2112 = vmatpush1.msra.mxu0 0.0
    %2113 = vmatprep.subr.mxu0 0.0
    %2114 = vmatpush1.msra.mxu0 0.0
    %2115 = vmatprep.subr.mxu0 0.0
    %2116 = vmatpush1.msra.mxu0 0.0
    %2117 = vmatprep.subr.mxu0 0.0
    %2118 = vmatpush1.msra.mxu0 0.0
    %2119 = vmatprep.subr.mxu0 0.0
    %2120 = vmatpush1.msra.mxu0 0.0
    %2121 = vmatprep.subr.mxu0 0.0
    %2122 = vmatpush1.msra.mxu0 0.0
    %2123 = vmatprep.subr.mxu0 0.0
    %2124 = vmatpush1.msra.mxu0 0.0
    %2125 = vmatprep.subr.mxu0 0.0
    %2126 = vmatpush1.msra.mxu0 0.0
    %2127 = vmatprep.subr.mxu0 0.0
    %2128 = vmatpush1.msra.mxu0 0.0
    %2129 = vmatprep.subr.mxu0 0.0
    %2130 = vmatpush1.msra.mxu0 0.0
    %2131 = vmatprep.subr.mxu0 0.0
    %2132 = vmatpush1.msra.mxu0 0.0
    %2133 = vmatprep.subr.mxu0 0.0
    %2134 = vmatpush1.msra.mxu0 0.0
    %2135 = vmatprep.subr.mxu0 0.0
    %2136 = vmatpush1.msra.mxu0 0.0
    %2137 = vmatprep.subr.mxu0 0.0
    %2138 = vmatpush1.msra.mxu0 0.0
    %2139 = vmatprep.mubr.f32.mxu0 0.0
    %2140 = vmatmul.mubr.f32.gmra.mrb[0].mxu0 %v1933
    %v2141 = vpop.f32.mrb[0].mxu0
    %v2142 = vadd.f32 %v625, %v2141
    %v2143 = vpop.f32.mrb[0].mxu0
    %2144 = vdwg.mxu0
    %s2145 = scalar_lea.vmem [#allocation2], 48
    %v2146 = vld [vmem:[%s2145] sm:$0xff]
    %v2147 = vadd.f32 %v2146, %v2002
    %v2148 = vxor.u32 %v2147, 2147483648
    %v2149 = vmul.f32 %v2148, 1.442695
    %v2150 = vpow.pop %v2149
    %v2151 = vadd.f32 %v2150, 1.0
    %v2152 = vrcp.pop %v2151
    %v2153 = vmul.f32 1.0, %v2152
    %s2154 = scalar_lea.vmem [#allocation3], 48
    %v2155 = vld [vmem:[%s2154] sm:$0xff]
    %v2156 = vadd.f32 %v2155, %v2072
    %v2157 = vxor.u32 %v2156, 2147483648
    %v2158 = vmul.f32 %v2157, 1.442695
    %v2159 = vpow.pop %v2158
    %v2160 = vadd.f32 %v2159, 1.0
    %v2161 = vrcp.pop %v2160
    %v2162 = vmul.f32 1.0, %v2161
    %s2163 = scalar_lea.vmem [#allocation4], 48
    %v2164 = vld [vmem:[%s2163] sm:$0xff]
    %v2165 = vmul.f32 %v2153, %v2142
    %v2166 = vadd.f32 %v2164, %v2165
    %v2167 = vtanh.pop %v2166
    %v2168 = vsub.f32 1.0, %v2162
    %v2169 = vmul.f32 %v2168, %v2167
    %v2170 = vmul.f32 %v2162, %v1929
    %v2171 = vadd.f32 %v2169, %v2170
    %s2172 = scalar_lea.vmem [#allocation8], 48
    %2173 = vst.msk [vmem:[%s2172] sm:$0xff] %vm207, %v2171
    %v2175 = vsel %vm207, %v2171, 0
    %2177 = vmatprep.subr.mxu0 0.0
    %2178 = vmatpush1.msra.mxu0 %v464
    %2179 = vmatprep.subr.mxu0 0.0
    %2180 = vmatpush1.msra.mxu0 %v465
    %2181 = vmatprep.subr.mxu0 0.0
    %2182 = vmatpush1.msra.mxu0 %v466
    %2183 = vmatprep.subr.mxu0 0.0
    %2184 = vmatpush1.msra.mxu0 %v467
    %2185 = vmatprep.subr.mxu0 0.0
    %2186 = vmatpush1.msra.mxu0 0.0
    %2187 = vmatprep.subr.mxu0 0.0
    %2188 = vmatpush1.msra.mxu0 0.0
    %2189 = vmatprep.subr.mxu0 0.0
    %2190 = vmatpush1.msra.mxu0 0.0
    %2191 = vmatprep.subr.mxu0 0.0
    %2192 = vmatpush1.msra.mxu0 0.0
    %2193 = vmatprep.subr.mxu0 0.0
    %2194 = vmatpush1.msra.mxu0 0.0
    %2195 = vmatprep.subr.mxu0 0.0
    %2196 = vmatpush1.msra.mxu0 0.0
    %2197 = vmatprep.subr.mxu0 0.0
    %2198 = vmatpush1.msra.mxu0 0.0
    %2199 = vmatprep.subr.mxu0 0.0
    %2200 = vmatpush1.msra.mxu0 0.0
    %2201 = vmatprep.subr.mxu0 0.0
    %2202 = vmatpush1.msra.mxu0 0.0
    %2203 = vmatprep.subr.mxu0 0.0
    %2204 = vmatpush1.msra.mxu0 0.0
    %2205 = vmatprep.subr.mxu0 0.0
    %2206 = vmatpush1.msra.mxu0 0.0
    %2207 = vmatprep.subr.mxu0 0.0
    %2208 = vmatpush1.msra.mxu0 0.0
    %2209 = vmatprep.subr.mxu0 0.0
    %2210 = vmatpush1.msra.mxu0 0.0
    %2211 = vmatprep.subr.mxu0 0.0
    %2212 = vmatpush1.msra.mxu0 0.0
    %2213 = vmatprep.subr.mxu0 0.0
    %2214 = vmatpush1.msra.mxu0 0.0
    %2215 = vmatprep.subr.mxu0 0.0
    %2216 = vmatpush1.msra.mxu0 0.0
    %2217 = vmatprep.subr.mxu0 0.0
    %2218 = vmatpush1.msra.mxu0 0.0
    %2219 = vmatprep.subr.mxu0 0.0
    %2220 = vmatpush1.msra.mxu0 0.0
    %2221 = vmatprep.subr.mxu0 0.0
    %2222 = vmatpush1.msra.mxu0 0.0
    %2223 = vmatprep.subr.mxu0 0.0
    %2224 = vmatpush1.msra.mxu0 0.0
    %2225 = vmatprep.subr.mxu0 0.0
    %2226 = vmatpush1.msra.mxu0 0.0
    %2227 = vmatprep.subr.mxu0 0.0
    %2228 = vmatpush1.msra.mxu0 0.0
    %2229 = vmatprep.subr.mxu0 0.0
    %2230 = vmatpush1.msra.mxu0 0.0
    %2231 = vmatprep.subr.mxu0 0.0
    %2232 = vmatpush1.msra.mxu0 0.0
    %2233 = vmatprep.subr.mxu0 0.0
    %2234 = vmatpush1.msra.mxu0 0.0
    %2235 = vmatprep.subr.mxu0 0.0
    %2236 = vmatpush1.msra.mxu0 0.0
    %2237 = vmatprep.subr.mxu0 0.0
    %2238 = vmatpush1.msra.mxu0 0.0
    %2239 = vmatprep.subr.mxu0 0.0
    %2240 = vmatpush1.msra.mxu0 0.0
    %2241 = vmatprep.mubr.f32.mxu0 0.0
    %2242 = vmatmul.mubr.f32.gmra.mrb[0].mxu0 %v2175
    %v2243 = vpop.f32.mrb[0].mxu0
    %v2244 = vadd.f32 0.0, %v2243
    %v2245 = vpop.f32.mrb[0].mxu0
    %2246 = vdwg.mxu0
    %2247 = vmatprep.subr.mxu0 0.0
    %2248 = vmatpush1.msra.mxu0 %v468
    %2249 = vmatprep.subr.mxu0 0.0
    %2250 = vmatpush1.msra.mxu0 %v469
    %2251 = vmatprep.subr.mxu0 0.0
    %2252 = vmatpush1.msra.mxu0 %v470
    %2253 = vmatprep.subr.mxu0 0.0
    %2254 = vmatpush1.msra.mxu0 %v471
    %2255 = vmatprep.subr.mxu0 0.0
    %2256 = vmatpush1.msra.mxu0 0.0
    %2257 = vmatprep.subr.mxu0 0.0
    %2258 = vmatpush1.msra.mxu0 0.0
    %2259 = vmatprep.subr.mxu0 0.0
    %2260 = vmatpush1.msra.mxu0 0.0
    %2261 = vmatprep.subr.mxu0 0.0
    %2262 = vmatpush1.msra.mxu0 0.0
    %2263 = vmatprep.subr.mxu0 0.0
    %2264 = vmatpush1.msra.mxu0 0.0
    %2265 = vmatprep.subr.mxu0 0.0
    %2266 = vmatpush1.msra.mxu0 0.0
    %2267 = vmatprep.subr.mxu0 0.0
    %2268 = vmatpush1.msra.mxu0 0.0
    %2269 = vmatprep.subr.mxu0 0.0
    %2270 = vmatpush1.msra.mxu0 0.0
    %2271 = vmatprep.subr.mxu0 0.0
    %2272 = vmatpush1.msra.mxu0 0.0
    %2273 = vmatprep.subr.mxu0 0.0
    %2274 = vmatpush1.msra.mxu0 0.0
    %2275 = vmatprep.subr.mxu0 0.0
    %2276 = vmatpush1.msra.mxu0 0.0
    %2277 = vmatprep.subr.mxu0 0.0
    %2278 = vmatpush1.msra.mxu0 0.0
    %2279 = vmatprep.subr.mxu0 0.0
    %2280 = vmatpush1.msra.mxu0 0.0
    %2281 = vmatprep.subr.mxu0 0.0
    %2282 = vmatpush1.msra.mxu0 0.0
    %2283 = vmatprep.subr.mxu0 0.0
    %2284 = vmatpush1.msra.mxu0 0.0
    %2285 = vmatprep.subr.mxu0 0.0
    %2286 = vmatpush1.msra.mxu0 0.0
    %2287 = vmatprep.subr.mxu0 0.0
    %2288 = vmatpush1.msra.mxu0 0.0
    %2289 = vmatprep.subr.mxu0 0.0
    %2290 = vmatpush1.msra.mxu0 0.0
    %2291 = vmatprep.subr.mxu0 0.0
    %2292 = vmatpush1.msra.mxu0 0.0
    %2293 = vmatprep.subr.mxu0 0.0
    %2294 = vmatpush1.msra.mxu0 0.0
    %2295 = vmatprep.subr.mxu0 0.0
    %2296 = vmatpush1.msra.mxu0 0.0
    %2297 = vmatprep.subr.mxu0 0.0
    %2298 = vmatpush1.msra.mxu0 0.0
    %2299 = vmatprep.subr.mxu0 0.0
    %2300 = vmatpush1.msra.mxu0 0.0
    %2301 = vmatprep.subr.mxu0 0.0
    %2302 = vmatpush1.msra.mxu0 0.0
    %2303 = vmatprep.subr.mxu0 0.0
    %2304 = vmatpush1.msra.mxu0 0.0
    %2305 = vmatprep.subr.mxu0 0.0
    %2306 = vmatpush1.msra.mxu0 0.0
    %2307 = vmatprep.subr.mxu0 0.0
    %2308 = vmatpush1.msra.mxu0 0.0
    %2309 = vmatprep.subr.mxu0 0.0
    %2310 = vmatpush1.msra.mxu0 0.0
    %2311 = vmatprep.mubr.f32.mxu0 0.0
    %2312 = vmatmul.mubr.f32.gmra.mrb[0].mxu0 %v2175
    %v2313 = vpop.f32.mrb[0].mxu0
    %v2314 = vadd.f32 0.0, %v2313
    %v2315 = vpop.f32.mrb[0].mxu0
    %2316 = vdwg.mxu0
    %2317 = vmatprep.subr.mxu0 0.0
    %2318 = vmatpush1.msra.mxu0 %v472
    %2319 = vmatprep.subr.mxu0 0.0
    %2320 = vmatpush1.msra.mxu0 %v473
    %2321 = vmatprep.subr.mxu0 0.0
    %2322 = vmatpush1.msra.mxu0 %v474
    %2323 = vmatprep.subr.mxu0 0.0
    %2324 = vmatpush1.msra.mxu0 %v475
    %2325 = vmatprep.subr.mxu0 0.0
    %2326 = vmatpush1.msra.mxu0 0.0
    %2327 = vmatprep.subr.mxu0 0.0
    %2328 = vmatpush1.msra.mxu0 0.0
    %2329 = vmatprep.subr.mxu0 0.0
    %2330 = vmatpush1.msra.mxu0 0.0
    %2331 = vmatprep.subr.mxu0 0.0
    %2332 = vmatpush1.msra.mxu0 0.0
    %2333 = vmatprep.subr.mxu0 0.0
    %2334 = vmatpush1.msra.mxu0 0.0
    %2335 = vmatprep.subr.mxu0 0.0
    %2336 = vmatpush1.msra.mxu0 0.0
    %2337 = vmatprep.subr.mxu0 0.0
    %2338 = vmatpush1.msra.mxu0 0.0
    %2339 = vmatprep.subr.mxu0 0.0
    %2340 = vmatpush1.msra.mxu0 0.0
    %2341 = vmatprep.subr.mxu0 0.0
    %2342 = vmatpush1.msra.mxu0 0.0
    %2343 = vmatprep.subr.mxu0 0.0
    %2344 = vmatpush1.msra.mxu0 0.0
    %2345 = vmatprep.subr.mxu0 0.0
    %2346 = vmatpush1.msra.mxu0 0.0
    %2347 = vmatprep.subr.mxu0 0.0
    %2348 = vmatpush1.msra.mxu0 0.0
    %2349 = vmatprep.subr.mxu0 0.0
    %2350 = vmatpush1.msra.mxu0 0.0
    %2351 = vmatprep.subr.mxu0 0.0
    %2352 = vmatpush1.msra.mxu0 0.0
    %2353 = vmatprep.subr.mxu0 0.0
    %2354 = vmatpush1.msra.mxu0 0.0
    %2355 = vmatprep.subr.mxu0 0.0
    %2356 = vmatpush1.msra.mxu0 0.0
    %2357 = vmatprep.subr.mxu0 0.0
    %2358 = vmatpush1.msra.mxu0 0.0
    %2359 = vmatprep.subr.mxu0 0.0
    %2360 = vmatpush1.msra.mxu0 0.0
    %2361 = vmatprep.subr.mxu0 0.0
    %2362 = vmatpush1.msra.mxu0 0.0
    %2363 = vmatprep.subr.mxu0 0.0
    %2364 = vmatpush1.msra.mxu0 0.0
    %2365 = vmatprep.subr.mxu0 0.0
    %2366 = vmatpush1.msra.mxu0 0.0
    %2367 = vmatprep.subr.mxu0 0.0
    %2368 = vmatpush1.msra.mxu0 0.0
    %2369 = vmatprep.subr.mxu0 0.0
    %2370 = vmatpush1.msra.mxu0 0.0
    %2371 = vmatprep.subr.mxu0 0.0
    %2372 = vmatpush1.msra.mxu0 0.0
    %2373 = vmatprep.subr.mxu0 0.0
    %2374 = vmatpush1.msra.mxu0 0.0
    %2375 = vmatprep.subr.mxu0 0.0
    %2376 = vmatpush1.msra.mxu0 0.0
    %2377 = vmatprep.subr.mxu0 0.0
    %2378 = vmatpush1.msra.mxu0 0.0
    %2379 = vmatprep.subr.mxu0 0.0
    %2380 = vmatpush1.msra.mxu0 0.0
    %2381 = vmatprep.mubr.f32.mxu0 0.0
    %2382 = vmatmul.mubr.f32.gmra.mrb[0].mxu0 %v2175
    %v2383 = vpop.f32.mrb[0].mxu0
    %v2384 = vadd.f32 %v625, %v2383
    %v2385 = vpop.f32.mrb[0].mxu0
    %2386 = vdwg.mxu0
    %s2387 = scalar_lea.vmem [#allocation2], 56
    %v2388 = vld [vmem:[%s2387] sm:$0xff]
    %v2389 = vadd.f32 %v2388, %v2244
    %v2390 = vxor.u32 %v2389, 2147483648
    %v2391 = vmul.f32 %v2390, 1.442695
    %v2392 = vpow.pop %v2391
    %v2393 = vadd.f32 %v2392, 1.0
    %v2394 = vrcp.pop %v2393
    %v2395 = vmul.f32 1.0, %v2394
    %s2396 = scalar_lea.vmem [#allocation3], 56
    %v2397 = vld [vmem:[%s2396] sm:$0xff]
    %v2398 = vadd.f32 %v2397, %v2314
    %v2399 = vxor.u32 %v2398, 2147483648
    %v2400 = vmul.f32 %v2399, 1.442695
    %v2401 = vpow.pop %v2400
    %v2402 = vadd.f32 %v2401, 1.0
    %v2403 = vrcp.pop %v2402
    %v2404 = vmul.f32 1.0, %v2403
    %s2405 = scalar_lea.vmem [#allocation4], 56
    %v2406 = vld [vmem:[%s2405] sm:$0xff]
    %v2407 = vmul.f32 %v2395, %v2384
    %v2408 = vadd.f32 %v2406, %v2407
    %v2409 = vtanh.pop %v2408
    %v2410 = vsub.f32 1.0, %v2404
    %v2411 = vmul.f32 %v2410, %v2409
    %v2412 = vmul.f32 %v2404, %v2171
    %v2413 = vadd.f32 %v2411, %v2412
    %s2414 = scalar_lea.vmem [#allocation8], 56
    %2415 = vst.msk [vmem:[%s2414] sm:$0xff] %vm207, %v2413
    %2416 = vst.msk [vmem:[#allocation9] sm:$0xff] %vm207, %v2413
    // Predicated region
    $region54: #{tpu_custom_call.1} parent=1 // pred_check
      _
    $region55: #{tpu_custom_call.1} parent=1 // pred_check_branch
      %2418 = sbr.rel (0) target = $region57
    $region56: #{tpu_custom_call.1} parent=1 // pred_region
      %s2420 = ssub.s32 1024, 1024
      %2421 = vsyncadd [#allocation7], %s2420
      %s2422 = sshll.u32 [#allocation8], 4
      %s2423 = int_to_ptr.vmem [resolvable:$true] %s2422
      %2428 = dma.vmem_to_hbm [thread:$0]  %s2423, 1024, %s12, [#allocation7], 128, 128, 8
    $region57: #{tpu_custom_call.1} parent=1 // pred_fallthru
      _
    // Predicated region
    $region58: #{tpu_custom_call.1} parent=1 // pred_check
      _
    $region59: #{tpu_custom_call.1} parent=1 // pred_check_branch
      %2430 = sbr.rel (0) target = $region61
    $region60: #{tpu_custom_call.1} parent=1 // pred_region
      %s2432 = ssub.s32 128, 128
      %2433 = vsyncadd [#allocation10], %s2432
      %s2435 = sshll.u32 [#allocation9], 4
      %s2436 = int_to_ptr.vmem [resolvable:$true] %s2435
      %2438 = dma.vmem_to_hbm [thread:$0]  %s2436, 128, %s13, [#allocation10]
    $region61: #{tpu_custom_call.1} parent=1 // pred_fallthru
      _
    // Predicated region
    $region62: #{tpu_custom_call.1} parent=1 // pred_check
      _
    $region63: #{tpu_custom_call.1} parent=1 // pred_check_branch
      %2440 = sbr.rel (0) target = $region65
    $region64: #{tpu_custom_call.1} parent=1 // pred_region
      %2441 = dma.done [#allocation7], 1024
    $region65: #{tpu_custom_call.1} parent=1 // pred_fallthru
      _
    // Predicated region
    $region66: #{tpu_custom_call.1} parent=1 // pred_check
      _
    $region67: #{tpu_custom_call.1} parent=1 // pred_check_branch
      %2443 = sbr.rel (0) target = $region69
    $region68: #{tpu_custom_call.1} parent=1 // pred_region
      %2444 = dma.done [#allocation10], 128
    $region69: #{tpu_custom_call.1} parent=1 // pred_fallthru
      _
    %2445 = vsyncpa [#allocation6], 1
    %2446 = vsyncpa [#allocation7], 1
    %2447 = vsyncpa [#allocation10], 1

</llo_original>
